<compile_context>
chip_gen: v5e
topology: v5e:2x2
jax: 0.10.0
libtpu: 0.0.40
codegen_flags: <defaults>
</compile_context>

<pallas_src>
import functools
import math

import jax
import jax.numpy as jnp
from jax.experimental import pallas as pl
from jax.experimental.pallas import tpu as pltpu

# bf16 is the MXU-native input dtype on v5e/v6e/v7x; accumulation stays f32 via
# preferred_element_type, and all GRU gate elementwise math stays f32.
MATMUL_DTYPE = jnp.bfloat16


def _default_vmem_limit():
    """Per-generation VMEM limit with headroom (≈78% of physical VMEM)."""
    try:
        cap = pltpu.get_tpu_info().vmem_capacity_bytes
        return max(int(cap * 0.78), 32 * 1024 * 1024)
    except Exception:
        return 48 * 1024 * 1024


_VMEM_LIMIT = _default_vmem_limit()


def _chunk_size(n, target):
    """Largest divisor of n that is <= target (>=1)."""
    t = max(1, min(n, target))
    while n % t:
        t -= 1
    return t


# ------------------------------ Dense (Linear) -------------------------------
# out = sum_k relu?(x_k) @ w_k + b, tiled over (M, N) with a cdiv grid.

def _dense_kernel(*refs, n_in, relu_in):
    x_refs = refs[:n_in]
    w_refs = refs[n_in:2 * n_in]
    b_ref = refs[2 * n_in]
    o_ref = refs[2 * n_in + 1]

    acc = None
    for xr, wr in zip(x_refs, w_refs):
        x = xr[...]
        if relu_in:
            x = jnp.maximum(x, 0.0)
        d = jnp.dot(x.astype(MATMUL_DTYPE), wr[...].astype(MATMUL_DTYPE),
                    preferred_element_type=jnp.float32)
        acc = d if acc is None else acc + d
    o_ref[...] = (acc + b_ref[...]).astype(o_ref.dtype)


def dense(xs, ws, b, *, out_dtype=jnp.float32, relu_in=False, tm=1024, tn=512):
    """xs: list of (M, K_i); ws: list of (K_i, N); b: (N,). Returns (M, N).

    Larger default M tile (tm=1024) so the (K, bn) weight strips are
    re-streamed from HBM fewer times; bf16 blocks keep 2x(x+w+out) well under
    the v7x VMEM budget.
    """
    xs = list(xs)
    ws = list(ws)
    assert len(xs) == len(ws) and xs
    M = xs[0].shape[0]
    N = ws[0].shape[1]
    bm = M if M <= tm else tm          # tm multiple of 8
    bn = N if N <= tn else tn          # tn multiple of 128
    n_in = len(xs)

    in_specs = []
    for x in xs:
        in_specs.append(pl.BlockSpec((bm, x.shape[1]), lambda i, j: (i, 0)))
    for w in ws:
        in_specs.append(pl.BlockSpec((w.shape[0], bn), lambda i, j: (0, j)))
    in_specs.append(pl.BlockSpec((1, bn), lambda i, j: (0, j)))

    return pl.pallas_call(
        functools.partial(_dense_kernel, n_in=n_in, relu_in=relu_in),
        out_shape=jax.ShapeDtypeStruct((M, N), out_dtype),
        grid=(pl.cdiv(M, bm), pl.cdiv(N, bn)),
        in_specs=in_specs,
        out_specs=pl.BlockSpec((bm, bn), lambda i, j: (i, j)),
        compiler_params=pltpu.CompilerParams(
            dimension_semantics=("parallel", "parallel"),
            vmem_limit_bytes=_VMEM_LIMIT),
    )(*xs, *ws, b.reshape(1, N))


# ---------------------- Bidirectional GRU recurrence scan ---------------------

def _bigru_scan_kernel(gxf_ref, gxb_ref, whh_hbm, bhh_hbm, of_ref, ob_ref,
                       w_ref, b_ref, copy_sem, h_ref,
                       *, hidden, chunk, split_in_kernel):
    H = hidden
    i = pl.program_id(0)

    @pl.when(i == 0)
    def _():
        # Single-buffered recurrent weights: one HBM->VMEM copy for the whole
        # scan (no double-buffered BlockSpec pipeline buffer for constants).
        cw = pltpu.make_async_copy(whh_hbm, w_ref, copy_sem.at[0])
        cb = pltpu.make_async_copy(bhh_hbm, b_ref, copy_sem.at[1])
        cw.start()
        cb.start()
        cw.wait()
        cb.wait()
        h_ref[...] = jnp.zeros_like(h_ref)

    w_f = w_ref[0]          # (H, 3H) bf16, gates (r, z, n) fused along lanes
    w_b = w_ref[1]
    b_f = b_ref[0]          # (1, 3H) f32
    b_b = b_ref[1]

    def cell(gx, h, w_t, b):
        # gx = W_ih x_t + b_ih (precomputed). gh = W_hh h + b_hh, one fused dot.
        gh = jnp.dot(h.astype(MATMUL_DTYPE), w_t,
                     preferred_element_type=jnp.float32) + b       # (B, 3H) f32
        r = jax.nn.sigmoid(gx[:, 0:H] + gh[:, 0:H])
        z = jax.nn.sigmoid(gx[:, H:2 * H] + gh[:, H:2 * H])
        n = jnp.tanh(gx[:, 2 * H:3 * H] + r * gh[:, 2 * H:3 * H])  # b_hn inside r*(.)
        return (1.0 - z) * n + z * h

    # Unrolled chunk of timesteps: fwd walks the chunk forward, bwd backward.
    for j in range(chunk):
        jb = chunk - 1 - j
        gx_f = gxf_ref[j].astype(jnp.float32)
        gx_b = gxb_ref[jb].astype(jnp.float32)
        if split_in_kernel:              # small-H path: slice the 6H block in VMEM
            gx_f = gx_f[:, 0:3 * H]
            gx_b = gx_b[:, 3 * H:6 * H]
        h_f = cell(gx_f, h_ref[0], w_f, b_f)
        h_b = cell(gx_b, h_ref[1], w_b, b_b)
        h_ref[0] = h_f
        h_ref[1] = h_b
        of_ref[j] = h_f.astype(of_ref.dtype)
        ob_ref[jb] = h_b.astype(ob_ref.dtype)


def bigru_scan(gx, whh_t, bhh, *, tt_target=16):
    """Both GRU directions in ONE sequential, time-chunked scan.

    gx:    (T, B, 6H) bf16 input-gate projections (fwd gates [:3H], bwd [3H:])
    whh_t: (2, H, 3H) bf16 per-direction W_hh^T, 3 gates fused along N
    bhh:   (2, 1, 3H) f32
    Returns (out_fwd, out_bwd), each (T, B, H) bf16; out_bwd[t] is the backward
    hidden state after consuming inputs t..T-1 (torch bidirectional layout).
    """
    T, B, G = gx.shape
    H = whh_t.shape[1]
    assert G == 6 * H
    TT = _chunk_size(T, tt_target)
    nchunks = T // TT

    split_in_kernel = (3 * H) % 128 != 0
    if split_in_kernel:
        # Lane dim equals the full array dim (6H) -> legal block at any H.
        gx_block = (TT, B, 6 * H)
        fwd_idx = lambda i: (i, 0, 0)
        bwd_idx = lambda i: (nchunks - 1 - i, 0, 0)
    else:
        # Production sizes (H multiple of 128): each direction DMAs only its 3H half.
        gx_block = (TT, B, 3 * H)
        fwd_idx = lambda i: (i, 0, 0)
        bwd_idx = lambda i: (nchunks - 1 - i, 0, 1)

    kernel = functools.partial(_bigru_scan_kernel, hidden=H, chunk=TT,
                               split_in_kernel=split_in_kernel)
    return pl.pallas_call(
        kernel,
        out_shape=(jax.ShapeDtypeStruct((T, B, H), MATMUL_DTYPE),
                   jax.ShapeDtypeStruct((T, B, H), MATMUL_DTYPE)),
        grid=(nchunks,),
        in_specs=[pl.BlockSpec(gx_block, fwd_idx),
                  pl.BlockSpec(gx_block, bwd_idx),
                  pl.BlockSpec(memory_space=pl.ANY),     # whh_t (copied once)
                  pl.BlockSpec(memory_space=pl.ANY)],    # bhh   (copied once)
        out_specs=(pl.BlockSpec((TT, B, H), lambda i: (i, 0, 0)),
                   pl.BlockSpec((TT, B, H), lambda i: (nchunks - 1 - i, 0, 0))),
        scratch_shapes=[pltpu.VMEM((2, H, 3 * H), MATMUL_DTYPE),   # resident W_hh
                        pltpu.VMEM((2, 1, 3 * H), jnp.float32),    # resident b_hh
                        pltpu.SemaphoreType.DMA((2,)),
                        pltpu.VMEM((2, B, H), jnp.float32)],       # carried h (f32)
        compiler_params=pltpu.CompilerParams(
            dimension_semantics=("arbitrary",),
            vmem_limit_bytes=_VMEM_LIMIT),
    )(gx, gx, whh_t, bhh)


# ------------------------------ TemporalRNN forward ---------------------------

def temporal_rnn_apply(x_bct, p):
    """TemporalRNN forward: x (B, C, T) -> (B, out, T)."""
    B, C, T = x_bct.shape
    inp = jnp.transpose(x_bct, (2, 0, 1))                    # (T, B, C), time-major
    xs = [inp.reshape(T * B, C)]
    for lp in p['layers']:
        H = lp['w_hh_t'].shape[1]
        # Fused gate projection for BOTH directions as a split-K matmul over the
        # (out_f, out_b) pair -> no (T, B, 2H) concatenate is ever materialized.
        gx = dense(xs, lp['w_ih_t'], lp['b_ih'], out_dtype=MATMUL_DTYPE)
        gx = gx.reshape(T, B, 6 * H)
        out_f, out_b = bigru_scan(gx, lp['w_hh_t'], lp['b_hh'])
        xs = [out_f.reshape(T * B, H), out_b.reshape(T * B, H)]
    out_dim = p['b_lin'].shape[0]
    # ReLU fused into the output Linear kernel (elementwise, so split-K exact).
    y = dense(xs, p['w_lin_t'], p['b_lin'], relu_in=True, out_dtype=jnp.float32)
    return jnp.transpose(y.reshape(T, B, out_dim), (1, 2, 0))  # (B, out, T)


# --------------------------- Pure-JAX reference (check) -----------------------
# Mirrors the kernel's quantization points (bf16 matmul inputs / stored
# activations, f32 accumulation, f32 gate math and hidden state).

def _ref_dense(xs, ws, b, relu_in=False):
    acc = None
    for x, w in zip(xs, ws):
        x = x.astype(jnp.float32)
        if relu_in:
            x = jnp.maximum(x, 0.0)
        d = jnp.dot(x.astype(MATMUL_DTYPE), w.astype(MATMUL_DTYPE),
                    preferred_element_type=jnp.float32)
        acc = d if acc is None else acc + d
    return acc + b


def temporal_rnn_reference(x_bct, p):
    B, C, T = x_bct.shape
    xs = [jnp.transpose(x_bct, (2, 0, 1)).reshape(T * B, C)]
    for lp in p['layers']:
        H = lp['w_hh_t'].shape[1]
        gx_all = _ref_dense(xs, lp['w_ih_t'], lp['b_ih'])
        gx_all = gx_all.astype(MATMUL_DTYPE).astype(jnp.float32)   # stored bf16
        gx_all = gx_all.reshape(T, B, 6 * H)
        outs = []
        for d, reverse in ((0, False), (1, True)):
            gx = gx_all[..., d * 3 * H:(d + 1) * 3 * H]
            w_t = lp['w_hh_t'][d].astype(MATMUL_DTYPE)
            bb = lp['b_hh'][d]

            def step(h, gx_t, w_t=w_t, bb=bb, H=H):
                gh = jnp.dot(h.astype(MATMUL_DTYPE), w_t,
                             preferred_element_type=jnp.float32) + bb
                r = jax.nn.sigmoid(gx_t[:, :H] + gh[:, :H])
                z = jax.nn.sigmoid(gx_t[:, H:2 * H] + gh[:, H:2 * H])
                n = jnp.tanh(gx_t[:, 2 * H:] + r * gh[:, 2 * H:])
                h_new = (1.0 - z) * n + z * h
                return h_new, h_new

            _, ys = jax.lax.scan(step, jnp.zeros((B, H), jnp.float32), gx,
                                 reverse=reverse)
            outs.append(ys.astype(MATMUL_DTYPE))                   # stored bf16
        xs = [outs[0].reshape(T * B, H), outs[1].reshape(T * B, H)]
    y = _ref_dense(xs, p['w_lin_t'], p['b_lin'], relu_in=True)
    out_dim = p['b_lin'].shape[0]
    return jnp.transpose(y.reshape(T, B, out_dim), (1, 2, 0))


# ---------------------------- Parameter construction ---------------------------

class KeyGen:
    def __init__(self, key):
        self._key = key

    def __call__(self):
        self._key, sub = jax.random.split(self._key)
        return sub


def _normal(kg, shape, scale, dtype=jnp.float32):
    return (scale * jax.random.normal(kg(), shape, dtype=jnp.float32)).astype(dtype)


def init_temporal_rnn(key, n_layers, in_dim, hidden, out_dim):
    kg = KeyGen(key)
    layers = []
    lin = in_dim
    for layer in range(n_layers):
        si = 1.0 / math.sqrt(lin)
        sh = 1.0 / math.sqrt(hidden)
        if layer == 0:
            # fwd gates (r, z, n) in cols [:3H], bwd gates in cols [3H:6H]
            w_ih = [_normal(kg, (in_dim, 6 * hidden), si, MATMUL_DTYPE)]
        else:
            # split along K: first half consumed by out_f, second half by out_b
            w_ih = [_normal(kg, (hidden, 6 * hidden), si, MATMUL_DTYPE),
                    _normal(kg, (hidden, 6 * hidden), si, MATMUL_DTYPE)]
        layers.append({
            'w_ih_t': w_ih,
            'b_ih': _normal(kg, (6 * hidden,), si),                        # f32
            'w_hh_t': _normal(kg, (2, hidden, 3 * hidden), sh, MATMUL_DTYPE),
            'b_hh': _normal(kg, (2, 1, 3 * hidden), sh),                   # f32
        })
        lin = 2 * hidden
    s = 1.0 / math.sqrt(2 * hidden)
    return {'layers': layers,
            'w_lin_t': [_normal(kg, (hidden, out_dim), s, MATMUL_DTYPE),
                        _normal(kg, (hidden, out_dim), s, MATMUL_DTYPE)],
            'b_lin': _normal(kg, (out_dim,), s)}


if __name__ == "__main__":
    B, C, T = 2, 16, 8                  # input is (B, C, T) like the PyTorch module
    HIDDEN, OUT, N_LAYERS = 32, 12, 2   # module hardcodes larger sizes; small demo

    key = jax.random.PRNGKey(0)
    kx, kp = jax.random.split(key)
    x = jax.random.normal(kx, (B, C, T), dtype=jnp.float32)
    params = init_temporal_rnn(kp, N_LAYERS, C, HIDDEN, OUT)

    fwd = jax.jit(temporal_rnn_apply)
    y = jax.block_until_ready(fwd(x, params))
    assert y.shape == (B, OUT, T)

    y_ref = temporal_rnn_reference(x, params)
    err = float(jnp.max(jnp.abs(y.astype(jnp.float32) - y_ref.astype(jnp.float32))))
    assert err < 2e-2, f"max abs error vs reference: {err}"
    print("KERNEL_OK")
</pallas_src>

<mosaic_0001>
module attributes {stable_mosaic.version = 11 : i64} {
  func.func @_dense_kernel(%arg0: i32, %arg1: i32, %arg2: memref<16x16xf32, #tpu.memory_space<vmem>>, %arg3: memref<16x192xbf16, #tpu.memory_space<vmem>>, %arg4: memref<1x192xf32, #tpu.memory_space<vmem>>, %arg5: memref<16x192xbf16, #tpu.memory_space<vmem>>) attributes {dimension_semantics = [#tpu.dimension_semantics<parallel>, #tpu.dimension_semantics<parallel>], iteration_bounds = array<i64: 1, 1>, scalar_prefetch = 0 : i64, scratch_operands = 0 : i64, tpu.core_type = #tpu.core_type<tc>, window_params = [{transform_indices = @transform_0, window_bounds = array<i64: 16, 16>}, {transform_indices = @transform_1, window_bounds = array<i64: 16, 192>}, {transform_indices = @transform_2, window_bounds = array<i64: 1, 192>}, {transform_indices = @transform_3, window_bounds = array<i64: 16, 192>}]} {
    %c0 = arith.constant 0 : index
    %c0_0 = arith.constant 0 : index
    %0 = vector.load %arg2[%c0, %c0_0] : memref<16x16xf32, #tpu.memory_space<vmem>>, vector<16x16xf32>
    %1 = arith.truncf %0 : vector<16x16xf32> to vector<16x16xbf16>
    %c0_1 = arith.constant 0 : index
    %c0_2 = arith.constant 0 : index
    %2 = vector.load %arg3[%c0_1, %c0_2] : memref<16x192xbf16, #tpu.memory_space<vmem>>, vector<16x192xbf16>
    %cst = arith.constant dense<0.000000e+00> : vector<16x192xf32>
    %3 = tpu.matmul %1, %2, %cst {dimension_numbers = #tpu.dot_dimension_numbers<[1], [0], [0], [1], [0, 0, 1, 1], [], []>} : vector<16x16xbf16>, vector<16x192xbf16>, vector<16x192xf32> -> vector<16x192xf32>
    %c0_3 = arith.constant 0 : index
    %c0_4 = arith.constant 0 : index
    %4 = vector.load %arg4[%c0_3, %c0_4] : memref<1x192xf32, #tpu.memory_space<vmem>>, vector<1x192xf32>
    %5 = vector.broadcast %4 : vector<1x192xf32> to vector<16x192xf32>
    %6 = arith.addf %3, %5 : vector<16x192xf32>
    %7 = arith.truncf %6 : vector<16x192xf32> to vector<16x192xbf16>
    %c0_5 = arith.constant 0 : index
    %c0_6 = arith.constant 0 : index
    %8 = vector.load %arg5[%c0_5, %c0_6] : memref<16x192xbf16, #tpu.memory_space<vmem>>, vector<16x192xbf16>
    tpu.vector_store %arg5[%c0_5, %c0_6], %7 {strides = array<i32>} : memref<16x192xbf16, #tpu.memory_space<vmem>>, vector<16x192xbf16>,
    return
  }
  func.func @transform_0(%arg0: i32, %arg1: i32) -> (i32, i32) {
    %c0_i32 = arith.constant 0 : i32
    %c0_i32_0 = arith.constant 0 : i32
    return %arg0, %c0_i32 : i32, i32
  }
  func.func @transform_1(%arg0: i32, %arg1: i32) -> (i32, i32) {
    %c0_i32 = arith.constant 0 : i32
    %c0_i32_0 = arith.constant 0 : i32
    return %c0_i32, %arg1 : i32, i32
  }
  func.func @transform_2(%arg0: i32, %arg1: i32) -> (i32, i32) {
    %c0_i32 = arith.constant 0 : i32
    %c0_i32_0 = arith.constant 0 : i32
    return %c0_i32, %arg1 : i32, i32
  }
  func.func @transform_3(%arg0: i32, %arg1: i32) -> (i32, i32) {
    %c0_i32 = arith.constant 0 : i32
    return %arg0, %arg1 : i32, i32
  }
}

module attributes {stable_mosaic.version = 11 : i64} {
  func.func @_bigru_scan_kernel(%arg0: i32, %arg1: memref<8x2x192xbf16, #tpu.memory_space<vmem>>, %arg2: memref<8x2x192xbf16, #tpu.memory_space<vmem>>, %arg3: memref<2x32x96xbf16, #tpu.memory_space<any>>, %arg4: memref<2x1x96xf32, #tpu.memory_space<any>>, %arg5: memref<8x2x32xbf16, #tpu.memory_space<vmem>>, %arg6: memref<8x2x32xbf16, #tpu.memory_space<vmem>>, %arg7: memref<2x32x96xbf16, #tpu.memory_space<vmem>>, %arg8: memref<2x1x96xf32, #tpu.memory_space<vmem>>, %arg9: memref<2x!tpu.dma_semaphore, #tpu.memory_space<semaphore_mem>>, %arg10: memref<2x2x32xf32, #tpu.memory_space<vmem>>) attributes {dimension_semantics = [#tpu.dimension_semantics<arbitrary>], iteration_bounds = array<i64: 1>, scalar_prefetch = 0 : i64, scratch_operands = 4 : i64, tpu.core_type = #tpu.core_type<tc>, window_params = [{transform_indices = @transform_0, window_bounds = array<i64: 8, 2, 192>}, {transform_indices = @transform_1, window_bounds = array<i64: 8, 2, 192>}, {}, {}, {transform_indices = @transform_4, window_bounds = array<i64: 8, 2, 32>}, {transform_indices = @transform_5, window_bounds = array<i64: 8, 2, 32>}]} {
    %c0_i32 = arith.constant 0 : i32
    %0 = arith.cmpi eq, %arg0, %c0_i32 : i32
    %1 = arith.extui %0 : i1 to i32
    %c0_i32_0 = arith.constant 0 : i32
    %2 = arith.cmpi ne, %1, %c0_i32_0 : i32
    scf.if %2 {
      %c0_i32_260 = arith.constant 0 : i32
      %699 = tpu.memref_slice %arg9[%c0_i32_260] : memref<2x!tpu.dma_semaphore, #tpu.memory_space<semaphore_mem>> -> memref<1x!tpu.dma_semaphore, #tpu.memory_space<semaphore_mem>>
      %700 = tpu.memref_squeeze %699 : memref<1x!tpu.dma_semaphore, #tpu.memory_space<semaphore_mem>> -> memref<!tpu.dma_semaphore, #tpu.memory_space<semaphore_mem>>
      tpu.enqueue_dma source(%arg3 : memref<2x32x96xbf16, #tpu.memory_space<any>>) target(%arg7 : memref<2x32x96xbf16, #tpu.memory_space<vmem>>) target_semaphore(%700 : memref<!tpu.dma_semaphore, #tpu.memory_space<semaphore_mem>>)
      %c1_i32 = arith.constant 1 : i32
      %701 = tpu.memref_slice %arg9[%c1_i32] : memref<2x!tpu.dma_semaphore, #tpu.memory_space<semaphore_mem>> -> memref<1x!tpu.dma_semaphore, #tpu.memory_space<semaphore_mem>>
      %702 = tpu.memref_squeeze %701 : memref<1x!tpu.dma_semaphore, #tpu.memory_space<semaphore_mem>> -> memref<!tpu.dma_semaphore, #tpu.memory_space<semaphore_mem>>
      tpu.enqueue_dma source(%arg4 : memref<2x1x96xf32, #tpu.memory_space<any>>) target(%arg8 : memref<2x1x96xf32, #tpu.memory_space<vmem>>) target_semaphore(%702 : memref<!tpu.dma_semaphore, #tpu.memory_space<semaphore_mem>>)
      %c0_i32_261 = arith.constant 0 : i32
      %703 = tpu.memref_slice %arg9[%c0_i32_261] : memref<2x!tpu.dma_semaphore, #tpu.memory_space<semaphore_mem>> -> memref<1x!tpu.dma_semaphore, #tpu.memory_space<semaphore_mem>>
      %704 = tpu.memref_squeeze %703 : memref<1x!tpu.dma_semaphore, #tpu.memory_space<semaphore_mem>> -> memref<!tpu.dma_semaphore, #tpu.memory_space<semaphore_mem>>
      tpu.wait_dma2 semaphore(%704 : memref<!tpu.dma_semaphore, #tpu.memory_space<semaphore_mem>>) src(%arg3 : memref<2x32x96xbf16, #tpu.memory_space<any>>) dst(%arg7 : memref<2x32x96xbf16, #tpu.memory_space<vmem>>)
      %c1_i32_262 = arith.constant 1 : i32
      %705 = tpu.memref_slice %arg9[%c1_i32_262] : memref<2x!tpu.dma_semaphore, #tpu.memory_space<semaphore_mem>> -> memref<1x!tpu.dma_semaphore, #tpu.memory_space<semaphore_mem>>
      %706 = tpu.memref_squeeze %705 : memref<1x!tpu.dma_semaphore, #tpu.memory_space<semaphore_mem>> -> memref<!tpu.dma_semaphore, #tpu.memory_space<semaphore_mem>>
      tpu.wait_dma2 semaphore(%706 : memref<!tpu.dma_semaphore, #tpu.memory_space<semaphore_mem>>) src(%arg4 : memref<2x1x96xf32, #tpu.memory_space<any>>) dst(%arg8 : memref<2x1x96xf32, #tpu.memory_space<vmem>>)
      %cst_263 = arith.constant 0.000000e+00 : f32
      %707 = vector.broadcast %cst_263 : f32 to vector<2x2x32xf32>
      %c0_264 = arith.constant 0 : index
      %c0_265 = arith.constant 0 : index
      %c0_266 = arith.constant 0 : index
      %708 = vector.load %arg10[%c0_264, %c0_265, %c0_266] : memref<2x2x32xf32, #tpu.memory_space<vmem>>, vector<2x2x32xf32>
      tpu.vector_store %arg10[%c0_264, %c0_265, %c0_266], %707 {strides = array<i32>} : memref<2x2x32xf32, #tpu.memory_space<vmem>>, vector<2x2x32xf32>,
    } else {
    }
    %c0 = arith.constant 0 : index
    %c0_1 = arith.constant 0 : index
    %c0_2 = arith.constant 0 : index
    %3 = vector.load %arg7[%c0, %c0_1, %c0_2] : memref<2x32x96xbf16, #tpu.memory_space<vmem>>, vector<1x32x96xbf16>
    %4 = vector.shape_cast %3 : vector<1x32x96xbf16> to vector<32x96xbf16>
    %c1 = arith.constant 1 : index
    %c0_3 = arith.constant 0 : index
    %c0_4 = arith.constant 0 : index
    %5 = vector.load %arg7[%c1, %c0_3, %c0_4] : memref<2x32x96xbf16, #tpu.memory_space<vmem>>, vector<1x32x96xbf16>
    %6 = vector.shape_cast %5 : vector<1x32x96xbf16> to vector<32x96xbf16>
    %c0_5 = arith.constant 0 : index
    %c0_6 = arith.constant 0 : index
    %c0_7 = arith.constant 0 : index
    %7 = vector.load %arg8[%c0_5, %c0_6, %c0_7] : memref<2x1x96xf32, #tpu.memory_space<vmem>>, vector<1x1x96xf32>
    %8 = vector.shape_cast %7 : vector<1x1x96xf32> to vector<1x96xf32>
    %c1_8 = arith.constant 1 : index
    %c0_9 = arith.constant 0 : index
    %c0_10 = arith.constant 0 : index
    %9 = vector.load %arg8[%c1_8, %c0_9, %c0_10] : memref<2x1x96xf32, #tpu.memory_space<vmem>>, vector<1x1x96xf32>
    %10 = vector.shape_cast %9 : vector<1x1x96xf32> to vector<1x96xf32>
    %c0_11 = arith.constant 0 : index
    %c0_12 = arith.constant 0 : index
    %c0_13 = arith.constant 0 : index
    %11 = vector.load %arg1[%c0_11, %c0_12, %c0_13] : memref<8x2x192xbf16, #tpu.memory_space<vmem>>, vector<1x2x192xbf16>
    %12 = vector.shape_cast %11 : vector<1x2x192xbf16> to vector<2x192xbf16>
    %13 = arith.extf %12 : vector<2x192xbf16> to vector<2x192xf32>
    %c7 = arith.constant 7 : index
    %c0_14 = arith.constant 0 : index
    %c0_15 = arith.constant 0 : index
    %14 = vector.load %arg2[%c7, %c0_14, %c0_15] : memref<8x2x192xbf16, #tpu.memory_space<vmem>>, vector<1x2x192xbf16>
    %15 = vector.shape_cast %14 : vector<1x2x192xbf16> to vector<2x192xbf16>
    %16 = arith.extf %15 : vector<2x192xbf16> to vector<2x192xf32>
    %17 = vector.extract_strided_slice %13 {offsets = [0, 0], sizes = [2, 96], strides = [1, 1]} : vector<2x192xf32> to vector<2x96xf32>
    %18 = vector.extract_strided_slice %16 {offsets = [0, 96], sizes = [2, 96], strides = [1, 1]} : vector<2x192xf32> to vector<2x96xf32>
    %c0_16 = arith.constant 0 : index
    %c0_17 = arith.constant 0 : index
    %c0_18 = arith.constant 0 : index
    %19 = vector.load %arg10[%c0_16, %c0_17, %c0_18] : memref<2x2x32xf32, #tpu.memory_space<vmem>>, vector<1x2x32xf32>
    %20 = vector.shape_cast %19 : vector<1x2x32xf32> to vector<2x32xf32>
    %21 = arith.truncf %20 : vector<2x32xf32> to vector<2x32xbf16>
    %cst = arith.constant dense<0.000000e+00> : vector<2x96xf32>
    %22 = tpu.matmul %21, %4, %cst {dimension_numbers = #tpu.dot_dimension_numbers<[1], [0], [0], [1], [0, 0, 1, 1], [], []>} : vector<2x32xbf16>, vector<32x96xbf16>, vector<2x96xf32> -> vector<2x96xf32>
    %23 = vector.broadcast %8 : vector<1x96xf32> to vector<2x96xf32>
    %24 = arith.addf %22, %23 : vector<2x96xf32>
    %25 = vector.extract_strided_slice %17 {offsets = [0, 0], sizes = [2, 32], strides = [1, 1]} : vector<2x96xf32> to vector<2x32xf32>
    %26 = vector.extract_strided_slice %24 {offsets = [0, 0], sizes = [2, 32], strides = [1, 1]} : vector<2x96xf32> to vector<2x32xf32>
    %27 = arith.addf %25, %26 : vector<2x32xf32>
    %28 = arith.negf %27 : vector<2x32xf32>
    %29 = math.exp %28 : vector<2x32xf32>
    %cst_19 = arith.constant 1.000000e+00 : f32
    %30 = vector.broadcast %cst_19 : f32 to vector<2x32xf32>
    %31 = arith.addf %30, %29 : vector<2x32xf32>
    %32 = arith.divf %30, %31 : vector<2x32xf32>
    %33 = vector.extract_strided_slice %17 {offsets = [0, 32], sizes = [2, 32], strides = [1, 1]} : vector<2x96xf32> to vector<2x32xf32>
    %34 = vector.extract_strided_slice %24 {offsets = [0, 32], sizes = [2, 32], strides = [1, 1]} : vector<2x96xf32> to vector<2x32xf32>
    %35 = arith.addf %33, %34 : vector<2x32xf32>
    %36 = arith.negf %35 : vector<2x32xf32>
    %37 = math.exp %36 : vector<2x32xf32>
    %cst_20 = arith.constant 1.000000e+00 : f32
    %38 = vector.broadcast %cst_20 : f32 to vector<2x32xf32>
    %39 = arith.addf %38, %37 : vector<2x32xf32>
    %40 = arith.divf %38, %39 : vector<2x32xf32>
    %41 = vector.extract_strided_slice %17 {offsets = [0, 64], sizes = [2, 32], strides = [1, 1]} : vector<2x96xf32> to vector<2x32xf32>
    %42 = vector.extract_strided_slice %24 {offsets = [0, 64], sizes = [2, 32], strides = [1, 1]} : vector<2x96xf32> to vector<2x32xf32>
    %43 = arith.mulf %32, %42 : vector<2x32xf32>
    %44 = arith.addf %41, %43 : vector<2x32xf32>
    %45 = math.tanh %44 : vector<2x32xf32>
    %cst_21 = arith.constant 1.000000e+00 : f32
    %46 = vector.broadcast %cst_21 : f32 to vector<2x32xf32>
    %47 = arith.subf %46, %40 : vector<2x32xf32>
    %48 = arith.mulf %47, %45 : vector<2x32xf32>
    %49 = arith.mulf %40, %20 : vector<2x32xf32>
    %50 = arith.addf %48, %49 : vector<2x32xf32>
    %c1_22 = arith.constant 1 : index
    %c0_23 = arith.constant 0 : index
    %c0_24 = arith.constant 0 : index
    %51 = vector.load %arg10[%c1_22, %c0_23, %c0_24] : memref<2x2x32xf32, #tpu.memory_space<vmem>>, vector<1x2x32xf32>
    %52 = vector.shape_cast %51 : vector<1x2x32xf32> to vector<2x32xf32>
    %53 = arith.truncf %52 : vector<2x32xf32> to vector<2x32xbf16>
    %cst_25 = arith.constant dense<0.000000e+00> : vector<2x96xf32>
    %54 = tpu.matmul %53, %6, %cst_25 {dimension_numbers = #tpu.dot_dimension_numbers<[1], [0], [0], [1], [0, 0, 1, 1], [], []>} : vector<2x32xbf16>, vector<32x96xbf16>, vector<2x96xf32> -> vector<2x96xf32>
    %55 = vector.broadcast %10 : vector<1x96xf32> to vector<2x96xf32>
    %56 = arith.addf %54, %55 : vector<2x96xf32>
    %57 = vector.extract_strided_slice %18 {offsets = [0, 0], sizes = [2, 32], strides = [1, 1]} : vector<2x96xf32> to vector<2x32xf32>
    %58 = vector.extract_strided_slice %56 {offsets = [0, 0], sizes = [2, 32], strides = [1, 1]} : vector<2x96xf32> to vector<2x32xf32>
    %59 = arith.addf %57, %58 : vector<2x32xf32>
    %60 = arith.negf %59 : vector<2x32xf32>
    %61 = math.exp %60 : vector<2x32xf32>
    %cst_26 = arith.constant 1.000000e+00 : f32
    %62 = vector.broadcast %cst_26 : f32 to vector<2x32xf32>
    %63 = arith.addf %62, %61 : vector<2x32xf32>
    %64 = arith.divf %62, %63 : vector<2x32xf32>
    %65 = vector.extract_strided_slice %18 {offsets = [0, 32], sizes = [2, 32], strides = [1, 1]} : vector<2x96xf32> to vector<2x32xf32>
    %66 = vector.extract_strided_slice %56 {offsets = [0, 32], sizes = [2, 32], strides = [1, 1]} : vector<2x96xf32> to vector<2x32xf32>
    %67 = arith.addf %65, %66 : vector<2x32xf32>
    %68 = arith.negf %67 : vector<2x32xf32>
    %69 = math.exp %68 : vector<2x32xf32>
    %cst_27 = arith.constant 1.000000e+00 : f32
    %70 = vector.broadcast %cst_27 : f32 to vector<2x32xf32>
    %71 = arith.addf %70, %69 : vector<2x32xf32>
    %72 = arith.divf %70, %71 : vector<2x32xf32>
    %73 = vector.extract_strided_slice %18 {offsets = [0, 64], sizes = [2, 32], strides = [1, 1]} : vector<2x96xf32> to vector<2x32xf32>
    %74 = vector.extract_strided_slice %56 {offsets = [0, 64], sizes = [2, 32], strides = [1, 1]} : vector<2x96xf32> to vector<2x32xf32>
    %75 = arith.mulf %64, %74 : vector<2x32xf32>
    %76 = arith.addf %73, %75 : vector<2x32xf32>
    %77 = math.tanh %76 : vector<2x32xf32>
    %cst_28 = arith.constant 1.000000e+00 : f32
    %78 = vector.broadcast %cst_28 : f32 to vector<2x32xf32>
    %79 = arith.subf %78, %72 : vector<2x32xf32>
    %80 = arith.mulf %79, %77 : vector<2x32xf32>
    %81 = arith.mulf %72, %52 : vector<2x32xf32>
    %82 = arith.addf %80, %81 : vector<2x32xf32>
    %c0_29 = arith.constant 0 : index
    %c0_30 = arith.constant 0 : index
    %c0_31 = arith.constant 0 : index
    %83 = vector.load %arg10[%c0_29, %c0_30, %c0_31] : memref<2x2x32xf32, #tpu.memory_space<vmem>>, vector<1x2x32xf32>
    %84 = vector.shape_cast %83 : vector<1x2x32xf32> to vector<2x32xf32>
    %85 = vector.shape_cast %50 : vector<2x32xf32> to vector<1x2x32xf32>
    tpu.vector_store %arg10[%c0_29, %c0_30, %c0_31], %85 {strides = array<i32>} : memref<2x2x32xf32, #tpu.memory_space<vmem>>, vector<1x2x32xf32>,
    %c1_32 = arith.constant 1 : index
    %c0_33 = arith.constant 0 : index
    %c0_34 = arith.constant 0 : index
    %86 = vector.load %arg10[%c1_32, %c0_33, %c0_34] : memref<2x2x32xf32, #tpu.memory_space<vmem>>, vector<1x2x32xf32>
    %87 = vector.shape_cast %86 : vector<1x2x32xf32> to vector<2x32xf32>
    %88 = vector.shape_cast %82 : vector<2x32xf32> to vector<1x2x32xf32>
    tpu.vector_store %arg10[%c1_32, %c0_33, %c0_34], %88 {strides = array<i32>} : memref<2x2x32xf32, #tpu.memory_space<vmem>>, vector<1x2x32xf32>,
    %89 = arith.truncf %50 : vector<2x32xf32> to vector<2x32xbf16>
    %c0_35 = arith.constant 0 : index
    %c0_36 = arith.constant 0 : index
    %c0_37 = arith.constant 0 : index
    %90 = vector.load %arg5[%c0_35, %c0_36, %c0_37] : memref<8x2x32xbf16, #tpu.memory_space<vmem>>, vector<1x2x32xbf16>
    %91 = vector.shape_cast %90 : vector<1x2x32xbf16> to vector<2x32xbf16>
    %92 = vector.shape_cast %89 : vector<2x32xbf16> to vector<1x2x32xbf16>
    tpu.vector_store %arg5[%c0_35, %c0_36, %c0_37], %92 {strides = array<i32>} : memref<8x2x32xbf16, #tpu.memory_space<vmem>>, vector<1x2x32xbf16>,
    %93 = arith.truncf %82 : vector<2x32xf32> to vector<2x32xbf16>
    %c7_38 = arith.constant 7 : index
    %c0_39 = arith.constant 0 : index
    %c0_40 = arith.constant 0 : index
    %94 = vector.load %arg6[%c7_38, %c0_39, %c0_40] : memref<8x2x32xbf16, #tpu.memory_space<vmem>>, vector<1x2x32xbf16>
    %95 = vector.shape_cast %94 : vector<1x2x32xbf16> to vector<2x32xbf16>
    %96 = vector.shape_cast %93 : vector<2x32xbf16> to vector<1x2x32xbf16>
    tpu.vector_store %arg6[%c7_38, %c0_39, %c0_40], %96 {strides = array<i32>} : memref<8x2x32xbf16, #tpu.memory_space<vmem>>, vector<1x2x32xbf16>,
    %c1_41 = arith.constant 1 : index
    %c0_42 = arith.constant 0 : index
    %c0_43 = arith.constant 0 : index
    %97 = vector.load %arg1[%c1_41, %c0_42, %c0_43] : memref<8x2x192xbf16, #tpu.memory_space<vmem>>, vector<1x2x192xbf16>
    %98 = vector.shape_cast %97 : vector<1x2x192xbf16> to vector<2x192xbf16>
    %99 = arith.extf %98 : vector<2x192xbf16> to vector<2x192xf32>
    %c6 = arith.constant 6 : index
    %c0_44 = arith.constant 0 : index
    %c0_45 = arith.constant 0 : index
    %100 = vector.load %arg2[%c6, %c0_44, %c0_45] : memref<8x2x192xbf16, #tpu.memory_space<vmem>>, vector<1x2x192xbf16>
    %101 = vector.shape_cast %100 : vector<1x2x192xbf16> to vector<2x192xbf16>
    %102 = arith.extf %101 : vector<2x192xbf16> to vector<2x192xf32>
    %103 = vector.extract_strided_slice %99 {offsets = [0, 0], sizes = [2, 96], strides = [1, 1]} : vector<2x192xf32> to vector<2x96xf32>
    %104 = vector.extract_strided_slice %102 {offsets = [0, 96], sizes = [2, 96], strides = [1, 1]} : vector<2x192xf32> to vector<2x96xf32>
    %c0_46 = arith.constant 0 : index
    %c0_47 = arith.constant 0 : index
    %c0_48 = arith.constant 0 : index
    %105 = vector.load %arg10[%c0_46, %c0_47, %c0_48] : memref<2x2x32xf32, #tpu.memory_space<vmem>>, vector<1x2x32xf32>
    %106 = vector.shape_cast %105 : vector<1x2x32xf32> to vector<2x32xf32>
    %107 = arith.truncf %106 : vector<2x32xf32> to vector<2x32xbf16>
    %cst_49 = arith.constant dense<0.000000e+00> : vector<2x96xf32>
    %108 = tpu.matmul %107, %4, %cst_49 {dimension_numbers = #tpu.dot_dimension_numbers<[1], [0], [0], [1], [0, 0, 1, 1], [], []>} : vector<2x32xbf16>, vector<32x96xbf16>, vector<2x96xf32> -> vector<2x96xf32>
    %109 = vector.broadcast %8 : vector<1x96xf32> to vector<2x96xf32>
    %110 = arith.addf %108, %109 : vector<2x96xf32>
    %111 = vector.extract_strided_slice %103 {offsets = [0, 0], sizes = [2, 32], strides = [1, 1]} : vector<2x96xf32> to vector<2x32xf32>
    %112 = vector.extract_strided_slice %110 {offsets = [0, 0], sizes = [2, 32], strides = [1, 1]} : vector<2x96xf32> to vector<2x32xf32>
    %113 = arith.addf %111, %112 : vector<2x32xf32>
    %114 = arith.negf %113 : vector<2x32xf32>
    %115 = math.exp %114 : vector<2x32xf32>
    %cst_50 = arith.constant 1.000000e+00 : f32
    %116 = vector.broadcast %cst_50 : f32 to vector<2x32xf32>
    %117 = arith.addf %116, %115 : vector<2x32xf32>
    %118 = arith.divf %116, %117 : vector<2x32xf32>
    %119 = vector.extract_strided_slice %103 {offsets = [0, 32], sizes = [2, 32], strides = [1, 1]} : vector<2x96xf32> to vector<2x32xf32>
    %120 = vector.extract_strided_slice %110 {offsets = [0, 32], sizes = [2, 32], strides = [1, 1]} : vector<2x96xf32> to vector<2x32xf32>
    %121 = arith.addf %119, %120 : vector<2x32xf32>
    %122 = arith.negf %121 : vector<2x32xf32>
    %123 = math.exp %122 : vector<2x32xf32>
    %cst_51 = arith.constant 1.000000e+00 : f32
    %124 = vector.broadcast %cst_51 : f32 to vector<2x32xf32>
    %125 = arith.addf %124, %123 : vector<2x32xf32>
    %126 = arith.divf %124, %125 : vector<2x32xf32>
    %127 = vector.extract_strided_slice %103 {offsets = [0, 64], sizes = [2, 32], strides = [1, 1]} : vector<2x96xf32> to vector<2x32xf32>
    %128 = vector.extract_strided_slice %110 {offsets = [0, 64], sizes = [2, 32], strides = [1, 1]} : vector<2x96xf32> to vector<2x32xf32>
    %129 = arith.mulf %118, %128 : vector<2x32xf32>
    %130 = arith.addf %127, %129 : vector<2x32xf32>
    %131 = math.tanh %130 : vector<2x32xf32>
    %cst_52 = arith.constant 1.000000e+00 : f32
    %132 = vector.broadcast %cst_52 : f32 to vector<2x32xf32>
    %133 = arith.subf %132, %126 : vector<2x32xf32>
    %134 = arith.mulf %133, %131 : vector<2x32xf32>
    %135 = arith.mulf %126, %106 : vector<2x32xf32>
    %136 = arith.addf %134, %135 : vector<2x32xf32>
    %c1_53 = arith.constant 1 : index
    %c0_54 = arith.constant 0 : index
    %c0_55 = arith.constant 0 : index
    %137 = vector.load %arg10[%c1_53, %c0_54, %c0_55] : memref<2x2x32xf32, #tpu.memory_space<vmem>>, vector<1x2x32xf32>
    %138 = vector.shape_cast %137 : vector<1x2x32xf32> to vector<2x32xf32>
    %139 = arith.truncf %138 : vector<2x32xf32> to vector<2x32xbf16>
    %cst_56 = arith.constant dense<0.000000e+00> : vector<2x96xf32>
    %140 = tpu.matmul %139, %6, %cst_56 {dimension_numbers = #tpu.dot_dimension_numbers<[1], [0], [0], [1], [0, 0, 1, 1], [], []>} : vector<2x32xbf16>, vector<32x96xbf16>, vector<2x96xf32> -> vector<2x96xf32>
    %141 = vector.broadcast %10 : vector<1x96xf32> to vector<2x96xf32>
    %142 = arith.addf %140, %141 : vector<2x96xf32>
    %143 = vector.extract_strided_slice %104 {offsets = [0, 0], sizes = [2, 32], strides = [1, 1]} : vector<2x96xf32> to vector<2x32xf32>
    %144 = vector.extract_strided_slice %142 {offsets = [0, 0], sizes = [2, 32], strides = [1, 1]} : vector<2x96xf32> to vector<2x32xf32>
    %145 = arith.addf %143, %144 : vector<2x32xf32>
    %146 = arith.negf %145 : vector<2x32xf32>
    %147 = math.exp %146 : vector<2x32xf32>
    %cst_57 = arith.constant 1.000000e+00 : f32
    %148 = vector.broadcast %cst_57 : f32 to vector<2x32xf32>
    %149 = arith.addf %148, %147 : vector<2x32xf32>
    %150 = arith.divf %148, %149 : vector<2x32xf32>
    %151 = vector.extract_strided_slice %104 {offsets = [0, 32], sizes = [2, 32], strides = [1, 1]} : vector<2x96xf32> to vector<2x32xf32>
    %152 = vector.extract_strided_slice %142 {offsets = [0, 32], sizes = [2, 32], strides = [1, 1]} : vector<2x96xf32> to vector<2x32xf32>
    %153 = arith.addf %151, %152 : vector<2x32xf32>
    %154 = arith.negf %153 : vector<2x32xf32>
    %155 = math.exp %154 : vector<2x32xf32>
    %cst_58 = arith.constant 1.000000e+00 : f32
    %156 = vector.broadcast %cst_58 : f32 to vector<2x32xf32>
    %157 = arith.addf %156, %155 : vector<2x32xf32>
    %158 = arith.divf %156, %157 : vector<2x32xf32>
    %159 = vector.extract_strided_slice %104 {offsets = [0, 64], sizes = [2, 32], strides = [1, 1]} : vector<2x96xf32> to vector<2x32xf32>
    %160 = vector.extract_strided_slice %142 {offsets = [0, 64], sizes = [2, 32], strides = [1, 1]} : vector<2x96xf32> to vector<2x32xf32>
    %161 = arith.mulf %150, %160 : vector<2x32xf32>
    %162 = arith.addf %159, %161 : vector<2x32xf32>
    %163 = math.tanh %162 : vector<2x32xf32>
    %cst_59 = arith.constant 1.000000e+00 : f32
    %164 = vector.broadcast %cst_59 : f32 to vector<2x32xf32>
    %165 = arith.subf %164, %158 : vector<2x32xf32>
    %166 = arith.mulf %165, %163 : vector<2x32xf32>
    %167 = arith.mulf %158, %138 : vector<2x32xf32>
    %168 = arith.addf %166, %167 : vector<2x32xf32>
    %c0_60 = arith.constant 0 : index
    %c0_61 = arith.constant 0 : index
    %c0_62 = arith.constant 0 : index
    %169 = vector.load %arg10[%c0_60, %c0_61, %c0_62] : memref<2x2x32xf32, #tpu.memory_space<vmem>>, vector<1x2x32xf32>
    %170 = vector.shape_cast %169 : vector<1x2x32xf32> to vector<2x32xf32>
    %171 = vector.shape_cast %136 : vector<2x32xf32> to vector<1x2x32xf32>
    tpu.vector_store %arg10[%c0_60, %c0_61, %c0_62], %171 {strides = array<i32>} : memref<2x2x32xf32, #tpu.memory_space<vmem>>, vector<1x2x32xf32>,
    %c1_63 = arith.constant 1 : index
    %c0_64 = arith.constant 0 : index
    %c0_65 = arith.constant 0 : index
    %172 = vector.load %arg10[%c1_63, %c0_64, %c0_65] : memref<2x2x32xf32, #tpu.memory_space<vmem>>, vector<1x2x32xf32>
    %173 = vector.shape_cast %172 : vector<1x2x32xf32> to vector<2x32xf32>
    %174 = vector.shape_cast %168 : vector<2x32xf32> to vector<1x2x32xf32>
    tpu.vector_store %arg10[%c1_63, %c0_64, %c0_65], %174 {strides = array<i32>} : memref<2x2x32xf32, #tpu.memory_space<vmem>>, vector<1x2x32xf32>,
    %175 = arith.truncf %136 : vector<2x32xf32> to vector<2x32xbf16>
    %c1_66 = arith.constant 1 : index
    %c0_67 = arith.constant 0 : index
    %c0_68 = arith.constant 0 : index
    %176 = vector.load %arg5[%c1_66, %c0_67, %c0_68] : memref<8x2x32xbf16, #tpu.memory_space<vmem>>, vector<1x2x32xbf16>
    %177 = vector.shape_cast %176 : vector<1x2x32xbf16> to vector<2x32xbf16>
    %178 = vector.shape_cast %175 : vector<2x32xbf16> to vector<1x2x32xbf16>
    tpu.vector_store %arg5[%c1_66, %c0_67, %c0_68], %178 {strides = array<i32>} : memref<8x2x32xbf16, #tpu.memory_space<vmem>>, vector<1x2x32xbf16>,
    %179 = arith.truncf %168 : vector<2x32xf32> to vector<2x32xbf16>
    %c6_69 = arith.constant 6 : index
    %c0_70 = arith.constant 0 : index
    %c0_71 = arith.constant 0 : index
    %180 = vector.load %arg6[%c6_69, %c0_70, %c0_71] : memref<8x2x32xbf16, #tpu.memory_space<vmem>>, vector<1x2x32xbf16>
    %181 = vector.shape_cast %180 : vector<1x2x32xbf16> to vector<2x32xbf16>
    %182 = vector.shape_cast %179 : vector<2x32xbf16> to vector<1x2x32xbf16>
    tpu.vector_store %arg6[%c6_69, %c0_70, %c0_71], %182 {strides = array<i32>} : memref<8x2x32xbf16, #tpu.memory_space<vmem>>, vector<1x2x32xbf16>,
    %c2 = arith.constant 2 : index
    %c0_72 = arith.constant 0 : index
    %c0_73 = arith.constant 0 : index
    %183 = vector.load %arg1[%c2, %c0_72, %c0_73] : memref<8x2x192xbf16, #tpu.memory_space<vmem>>, vector<1x2x192xbf16>
    %184 = vector.shape_cast %183 : vector<1x2x192xbf16> to vector<2x192xbf16>
    %185 = arith.extf %184 : vector<2x192xbf16> to vector<2x192xf32>
    %c5 = arith.constant 5 : index
    %c0_74 = arith.constant 0 : index
    %c0_75 = arith.constant 0 : index
    %186 = vector.load %arg2[%c5, %c0_74, %c0_75] : memref<8x2x192xbf16, #tpu.memory_space<vmem>>, vector<1x2x192xbf16>
    %187 = vector.shape_cast %186 : vector<1x2x192xbf16> to vector<2x192xbf16>
    %188 = arith.extf %187 : vector<2x192xbf16> to vector<2x192xf32>
    %189 = vector.extract_strided_slice %185 {offsets = [0, 0], sizes = [2, 96], strides = [1, 1]} : vector<2x192xf32> to vector<2x96xf32>
    %190 = vector.extract_strided_slice %188 {offsets = [0, 96], sizes = [2, 96], strides = [1, 1]} : vector<2x192xf32> to vector<2x96xf32>
    %c0_76 = arith.constant 0 : index
    %c0_77 = arith.constant 0 : index
    %c0_78 = arith.constant 0 : index
    %191 = vector.load %arg10[%c0_76, %c0_77, %c0_78] : memref<2x2x32xf32, #tpu.memory_space<vmem>>, vector<1x2x32xf32>
    %192 = vector.shape_cast %191 : vector<1x2x32xf32> to vector<2x32xf32>
    %193 = arith.truncf %192 : vector<2x32xf32> to vector<2x32xbf16>
    %cst_79 = arith.constant dense<0.000000e+00> : vector<2x96xf32>
    %194 = tpu.matmul %193, %4, %cst_79 {dimension_numbers = #tpu.dot_dimension_numbers<[1], [0], [0], [1], [0, 0, 1, 1], [], []>} : vector<2x32xbf16>, vector<32x96xbf16>, vector<2x96xf32> -> vector<2x96xf32>
    %195 = vector.broadcast %8 : vector<1x96xf32> to vector<2x96xf32>
    %196 = arith.addf %194, %195 : vector<2x96xf32>
    %197 = vector.extract_strided_slice %189 {offsets = [0, 0], sizes = [2, 32], strides = [1, 1]} : vector<2x96xf32> to vector<2x32xf32>
    %198 = vector.extract_strided_slice %196 {offsets = [0, 0], sizes = [2, 32], strides = [1, 1]} : vector<2x96xf32> to vector<2x32xf32>
    %199 = arith.addf %197, %198 : vector<2x32xf32>
    %200 = arith.negf %199 : vector<2x32xf32>
    %201 = math.exp %200 : vector<2x32xf32>
    %cst_80 = arith.constant 1.000000e+00 : f32
    %202 = vector.broadcast %cst_80 : f32 to vector<2x32xf32>
    %203 = arith.addf %202, %201 : vector<2x32xf32>
    %204 = arith.divf %202, %203 : vector<2x32xf32>
    %205 = vector.extract_strided_slice %189 {offsets = [0, 32], sizes = [2, 32], strides = [1, 1]} : vector<2x96xf32> to vector<2x32xf32>
    %206 = vector.extract_strided_slice %196 {offsets = [0, 32], sizes = [2, 32], strides = [1, 1]} : vector<2x96xf32> to vector<2x32xf32>
    %207 = arith.addf %205, %206 : vector<2x32xf32>
    %208 = arith.negf %207 : vector<2x32xf32>
    %209 = math.exp %208 : vector<2x32xf32>
    %cst_81 = arith.constant 1.000000e+00 : f32
    %210 = vector.broadcast %cst_81 : f32 to vector<2x32xf32>
    %211 = arith.addf %210, %209 : vector<2x32xf32>
    %212 = arith.divf %210, %211 : vector<2x32xf32>
    %213 = vector.extract_strided_slice %189 {offsets = [0, 64], sizes = [2, 32], strides = [1, 1]} : vector<2x96xf32> to vector<2x32xf32>
    %214 = vector.extract_strided_slice %196 {offsets = [0, 64], sizes = [2, 32], strides = [1, 1]} : vector<2x96xf32> to vector<2x32xf32>
    %215 = arith.mulf %204, %214 : vector<2x32xf32>
    %216 = arith.addf %213, %215 : vector<2x32xf32>
    %217 = math.tanh %216 : vector<2x32xf32>
    %cst_82 = arith.constant 1.000000e+00 : f32
    %218 = vector.broadcast %cst_82 : f32 to vector<2x32xf32>
    %219 = arith.subf %218, %212 : vector<2x32xf32>
    %220 = arith.mulf %219, %217 : vector<2x32xf32>
    %221 = arith.mulf %212, %192 : vector<2x32xf32>
    %222 = arith.addf %220, %221 : vector<2x32xf32>
    %c1_83 = arith.constant 1 : index
    %c0_84 = arith.constant 0 : index
    %c0_85 = arith.constant 0 : index
    %223 = vector.load %arg10[%c1_83, %c0_84, %c0_85] : memref<2x2x32xf32, #tpu.memory_space<vmem>>, vector<1x2x32xf32>
    %224 = vector.shape_cast %223 : vector<1x2x32xf32> to vector<2x32xf32>
    %225 = arith.truncf %224 : vector<2x32xf32> to vector<2x32xbf16>
    %cst_86 = arith.constant dense<0.000000e+00> : vector<2x96xf32>
    %226 = tpu.matmul %225, %6, %cst_86 {dimension_numbers = #tpu.dot_dimension_numbers<[1], [0], [0], [1], [0, 0, 1, 1], [], []>} : vector<2x32xbf16>, vector<32x96xbf16>, vector<2x96xf32> -> vector<2x96xf32>
    %227 = vector.broadcast %10 : vector<1x96xf32> to vector<2x96xf32>
    %228 = arith.addf %226, %227 : vector<2x96xf32>
    %229 = vector.extract_strided_slice %190 {offsets = [0, 0], sizes = [2, 32], strides = [1, 1]} : vector<2x96xf32> to vector<2x32xf32>
    %230 = vector.extract_strided_slice %228 {offsets = [0, 0], sizes = [2, 32], strides = [1, 1]} : vector<2x96xf32> to vector<2x32xf32>
    %231 = arith.addf %229, %230 : vector<2x32xf32>
    %232 = arith.negf %231 : vector<2x32xf32>
    %233 = math.exp %232 : vector<2x32xf32>
    %cst_87 = arith.constant 1.000000e+00 : f32
    %234 = vector.broadcast %cst_87 : f32 to vector<2x32xf32>
    %235 = arith.addf %234, %233 : vector<2x32xf32>
    %236 = arith.divf %234, %235 : vector<2x32xf32>
    %237 = vector.extract_strided_slice %190 {offsets = [0, 32], sizes = [2, 32], strides = [1, 1]} : vector<2x96xf32> to vector<2x32xf32>
    %238 = vector.extract_strided_slice %228 {offsets = [0, 32], sizes = [2, 32], strides = [1, 1]} : vector<2x96xf32> to vector<2x32xf32>
    %239 = arith.addf %237, %238 : vector<2x32xf32>
    %240 = arith.negf %239 : vector<2x32xf32>
    %241 = math.exp %240 : vector<2x32xf32>
    %cst_88 = arith.constant 1.000000e+00 : f32
    %242 = vector.broadcast %cst_88 : f32 to vector<2x32xf32>
    %243 = arith.addf %242, %241 : vector<2x32xf32>
    %244 = arith.divf %242, %243 : vector<2x32xf32>
    %245 = vector.extract_strided_slice %190 {offsets = [0, 64], sizes = [2, 32], strides = [1, 1]} : vector<2x96xf32> to vector<2x32xf32>
    %246 = vector.extract_strided_slice %228 {offsets = [0, 64], sizes = [2, 32], strides = [1, 1]} : vector<2x96xf32> to vector<2x32xf32>
    %247 = arith.mulf %236, %246 : vector<2x32xf32>
    %248 = arith.addf %245, %247 : vector<2x32xf32>
    %249 = math.tanh %248 : vector<2x32xf32>
    %cst_89 = arith.constant 1.000000e+00 : f32
    %250 = vector.broadcast %cst_89 : f32 to vector<2x32xf32>
    %251 = arith.subf %250, %244 : vector<2x32xf32>
    %252 = arith.mulf %251, %249 : vector<2x32xf32>
    %253 = arith.mulf %244, %224 : vector<2x32xf32>
    %254 = arith.addf %252, %253 : vector<2x32xf32>
    %c0_90 = arith.constant 0 : index
    %c0_91 = arith.constant 0 : index
    %c0_92 = arith.constant 0 : index
    %255 = vector.load %arg10[%c0_90, %c0_91, %c0_92] : memref<2x2x32xf32, #tpu.memory_space<vmem>>, vector<1x2x32xf32>
    %256 = vector.shape_cast %255 : vector<1x2x32xf32> to vector<2x32xf32>
    %257 = vector.shape_cast %222 : vector<2x32xf32> to vector<1x2x32xf32>
    tpu.vector_store %arg10[%c0_90, %c0_91, %c0_92], %257 {strides = array<i32>} : memref<2x2x32xf32, #tpu.memory_space<vmem>>, vector<1x2x32xf32>,
    %c1_93 = arith.constant 1 : index
    %c0_94 = arith.constant 0 : index
    %c0_95 = arith.constant 0 : index
    %258 = vector.load %arg10[%c1_93, %c0_94, %c0_95] : memref<2x2x32xf32, #tpu.memory_space<vmem>>, vector<1x2x32xf32>
    %259 = vector.shape_cast %258 : vector<1x2x32xf32> to vector<2x32xf32>
    %260 = vector.shape_cast %254 : vector<2x32xf32> to vector<1x2x32xf32>
    tpu.vector_store %arg10[%c1_93, %c0_94, %c0_95], %260 {strides = array<i32>} : memref<2x2x32xf32, #tpu.memory_space<vmem>>, vector<1x2x32xf32>,
    %261 = arith.truncf %222 : vector<2x32xf32> to vector<2x32xbf16>
    %c2_96 = arith.constant 2 : index
    %c0_97 = arith.constant 0 : index
    %c0_98 = arith.constant 0 : index
    %262 = vector.load %arg5[%c2_96, %c0_97, %c0_98] : memref<8x2x32xbf16, #tpu.memory_space<vmem>>, vector<1x2x32xbf16>
    %263 = vector.shape_cast %262 : vector<1x2x32xbf16> to vector<2x32xbf16>
    %264 = vector.shape_cast %261 : vector<2x32xbf16> to vector<1x2x32xbf16>
    tpu.vector_store %arg5[%c2_96, %c0_97, %c0_98], %264 {strides = array<i32>} : memref<8x2x32xbf16, #tpu.memory_space<vmem>>, vector<1x2x32xbf16>,
    %265 = arith.truncf %254 : vector<2x32xf32> to vector<2x32xbf16>
    %c5_99 = arith.constant 5 : index
    %c0_100 = arith.constant 0 : index
    %c0_101 = arith.constant 0 : index
    %266 = vector.load %arg6[%c5_99, %c0_100, %c0_101] : memref<8x2x32xbf16, #tpu.memory_space<vmem>>, vector<1x2x32xbf16>
    %267 = vector.shape_cast %266 : vector<1x2x32xbf16> to vector<2x32xbf16>
    %268 = vector.shape_cast %265 : vector<2x32xbf16> to vector<1x2x32xbf16>
    tpu.vector_store %arg6[%c5_99, %c0_100, %c0_101], %268 {strides = array<i32>} : memref<8x2x32xbf16, #tpu.memory_space<vmem>>, vector<1x2x32xbf16>,
    %c3 = arith.constant 3 : index
    %c0_102 = arith.constant 0 : index
    %c0_103 = arith.constant 0 : index
    %269 = vector.load %arg1[%c3, %c0_102, %c0_103] : memref<8x2x192xbf16, #tpu.memory_space<vmem>>, vector<1x2x192xbf16>
    %270 = vector.shape_cast %269 : vector<1x2x192xbf16> to vector<2x192xbf16>
    %271 = arith.extf %270 : vector<2x192xbf16> to vector<2x192xf32>
    %c4 = arith.constant 4 : index
    %c0_104 = arith.constant 0 : index
    %c0_105 = arith.constant 0 : index
    %272 = vector.load %arg2[%c4, %c0_104, %c0_105] : memref<8x2x192xbf16, #tpu.memory_space<vmem>>, vector<1x2x192xbf16>
    %273 = vector.shape_cast %272 : vector<1x2x192xbf16> to vector<2x192xbf16>
    %274 = arith.extf %273 : vector<2x192xbf16> to vector<2x192xf32>
    %275 = vector.extract_strided_slice %271 {offsets = [0, 0], sizes = [2, 96], strides = [1, 1]} : vector<2x192xf32> to vector<2x96xf32>
    %276 = vector.extract_strided_slice %274 {offsets = [0, 96], sizes = [2, 96], strides = [1, 1]} : vector<2x192xf32> to vector<2x96xf32>
    %c0_106 = arith.constant 0 : index
    %c0_107 = arith.constant 0 : index
    %c0_108 = arith.constant 0 : index
    %277 = vector.load %arg10[%c0_106, %c0_107, %c0_108] : memref<2x2x32xf32, #tpu.memory_space<vmem>>, vector<1x2x32xf32>
    %278 = vector.shape_cast %277 : vector<1x2x32xf32> to vector<2x32xf32>
    %279 = arith.truncf %278 : vector<2x32xf32> to vector<2x32xbf16>
    %cst_109 = arith.constant dense<0.000000e+00> : vector<2x96xf32>
    %280 = tpu.matmul %279, %4, %cst_109 {dimension_numbers = #tpu.dot_dimension_numbers<[1], [0], [0], [1], [0, 0, 1, 1], [], []>} : vector<2x32xbf16>, vector<32x96xbf16>, vector<2x96xf32> -> vector<2x96xf32>
    %281 = vector.broadcast %8 : vector<1x96xf32> to vector<2x96xf32>
    %282 = arith.addf %280, %281 : vector<2x96xf32>
    %283 = vector.extract_strided_slice %275 {offsets = [0, 0], sizes = [2, 32], strides = [1, 1]} : vector<2x96xf32> to vector<2x32xf32>
    %284 = vector.extract_strided_slice %282 {offsets = [0, 0], sizes = [2, 32], strides = [1, 1]} : vector<2x96xf32> to vector<2x32xf32>
    %285 = arith.addf %283, %284 : vector<2x32xf32>
    %286 = arith.negf %285 : vector<2x32xf32>
    %287 = math.exp %286 : vector<2x32xf32>
    %cst_110 = arith.constant 1.000000e+00 : f32
    %288 = vector.broadcast %cst_110 : f32 to vector<2x32xf32>
    %289 = arith.addf %288, %287 : vector<2x32xf32>
    %290 = arith.divf %288, %289 : vector<2x32xf32>
    %291 = vector.extract_strided_slice %275 {offsets = [0, 32], sizes = [2, 32], strides = [1, 1]} : vector<2x96xf32> to vector<2x32xf32>
    %292 = vector.extract_strided_slice %282 {offsets = [0, 32], sizes = [2, 32], strides = [1, 1]} : vector<2x96xf32> to vector<2x32xf32>
    %293 = arith.addf %291, %292 : vector<2x32xf32>
    %294 = arith.negf %293 : vector<2x32xf32>
    %295 = math.exp %294 : vector<2x32xf32>
    %cst_111 = arith.constant 1.000000e+00 : f32
    %296 = vector.broadcast %cst_111 : f32 to vector<2x32xf32>
    %297 = arith.addf %296, %295 : vector<2x32xf32>
    %298 = arith.divf %296, %297 : vector<2x32xf32>
    %299 = vector.extract_strided_slice %275 {offsets = [0, 64], sizes = [2, 32], strides = [1, 1]} : vector<2x96xf32> to vector<2x32xf32>
    %300 = vector.extract_strided_slice %282 {offsets = [0, 64], sizes = [2, 32], strides = [1, 1]} : vector<2x96xf32> to vector<2x32xf32>
    %301 = arith.mulf %290, %300 : vector<2x32xf32>
    %302 = arith.addf %299, %301 : vector<2x32xf32>
    %303 = math.tanh %302 : vector<2x32xf32>
    %cst_112 = arith.constant 1.000000e+00 : f32
    %304 = vector.broadcast %cst_112 : f32 to vector<2x32xf32>
    %305 = arith.subf %304, %298 : vector<2x32xf32>
    %306 = arith.mulf %305, %303 : vector<2x32xf32>
    %307 = arith.mulf %298, %278 : vector<2x32xf32>
    %308 = arith.addf %306, %307 : vector<2x32xf32>
    %c1_113 = arith.constant 1 : index
    %c0_114 = arith.constant 0 : index
    %c0_115 = arith.constant 0 : index
    %309 = vector.load %arg10[%c1_113, %c0_114, %c0_115] : memref<2x2x32xf32, #tpu.memory_space<vmem>>, vector<1x2x32xf32>
    %310 = vector.shape_cast %309 : vector<1x2x32xf32> to vector<2x32xf32>
    %311 = arith.truncf %310 : vector<2x32xf32> to vector<2x32xbf16>
    %cst_116 = arith.constant dense<0.000000e+00> : vector<2x96xf32>
    %312 = tpu.matmul %311, %6, %cst_116 {dimension_numbers = #tpu.dot_dimension_numbers<[1], [0], [0], [1], [0, 0, 1, 1], [], []>} : vector<2x32xbf16>, vector<32x96xbf16>, vector<2x96xf32> -> vector<2x96xf32>
    %313 = vector.broadcast %10 : vector<1x96xf32> to vector<2x96xf32>
    %314 = arith.addf %312, %313 : vector<2x96xf32>
    %315 = vector.extract_strided_slice %276 {offsets = [0, 0], sizes = [2, 32], strides = [1, 1]} : vector<2x96xf32> to vector<2x32xf32>
    %316 = vector.extract_strided_slice %314 {offsets = [0, 0], sizes = [2, 32], strides = [1, 1]} : vector<2x96xf32> to vector<2x32xf32>
    %317 = arith.addf %315, %316 : vector<2x32xf32>
    %318 = arith.negf %317 : vector<2x32xf32>
    %319 = math.exp %318 : vector<2x32xf32>
    %cst_117 = arith.constant 1.000000e+00 : f32
    %320 = vector.broadcast %cst_117 : f32 to vector<2x32xf32>
    %321 = arith.addf %320, %319 : vector<2x32xf32>
    %322 = arith.divf %320, %321 : vector<2x32xf32>
    %323 = vector.extract_strided_slice %276 {offsets = [0, 32], sizes = [2, 32], strides = [1, 1]} : vector<2x96xf32> to vector<2x32xf32>
    %324 = vector.extract_strided_slice %314 {offsets = [0, 32], sizes = [2, 32], strides = [1, 1]} : vector<2x96xf32> to vector<2x32xf32>
    %325 = arith.addf %323, %324 : vector<2x32xf32>
    %326 = arith.negf %325 : vector<2x32xf32>
    %327 = math.exp %326 : vector<2x32xf32>
    %cst_118 = arith.constant 1.000000e+00 : f32
    %328 = vector.broadcast %cst_118 : f32 to vector<2x32xf32>
    %329 = arith.addf %328, %327 : vector<2x32xf32>
    %330 = arith.divf %328, %329 : vector<2x32xf32>
    %331 = vector.extract_strided_slice %276 {offsets = [0, 64], sizes = [2, 32], strides = [1, 1]} : vector<2x96xf32> to vector<2x32xf32>
    %332 = vector.extract_strided_slice %314 {offsets = [0, 64], sizes = [2, 32], strides = [1, 1]} : vector<2x96xf32> to vector<2x32xf32>
    %333 = arith.mulf %322, %332 : vector<2x32xf32>
    %334 = arith.addf %331, %333 : vector<2x32xf32>
    %335 = math.tanh %334 : vector<2x32xf32>
    %cst_119 = arith.constant 1.000000e+00 : f32
    %336 = vector.broadcast %cst_119 : f32 to vector<2x32xf32>
    %337 = arith.subf %336, %330 : vector<2x32xf32>
    %338 = arith.mulf %337, %335 : vector<2x32xf32>
    %339 = arith.mulf %330, %310 : vector<2x32xf32>
    %340 = arith.addf %338, %339 : vector<2x32xf32>
    %c0_120 = arith.constant 0 : index
    %c0_121 = arith.constant 0 : index
    %c0_122 = arith.constant 0 : index
    %341 = vector.load %arg10[%c0_120, %c0_121, %c0_122] : memref<2x2x32xf32, #tpu.memory_space<vmem>>, vector<1x2x32xf32>
    %342 = vector.shape_cast %341 : vector<1x2x32xf32> to vector<2x32xf32>
    %343 = vector.shape_cast %308 : vector<2x32xf32> to vector<1x2x32xf32>
    tpu.vector_store %arg10[%c0_120, %c0_121, %c0_122], %343 {strides = array<i32>} : memref<2x2x32xf32, #tpu.memory_space<vmem>>, vector<1x2x32xf32>,
    %c1_123 = arith.constant 1 : index
    %c0_124 = arith.constant 0 : index
    %c0_125 = arith.constant 0 : index
    %344 = vector.load %arg10[%c1_123, %c0_124, %c0_125] : memref<2x2x32xf32, #tpu.memory_space<vmem>>, vector<1x2x32xf32>
    %345 = vector.shape_cast %344 : vector<1x2x32xf32> to vector<2x32xf32>
    %346 = vector.shape_cast %340 : vector<2x32xf32> to vector<1x2x32xf32>
    tpu.vector_store %arg10[%c1_123, %c0_124, %c0_125], %346 {strides = array<i32>} : memref<2x2x32xf32, #tpu.memory_space<vmem>>, vector<1x2x32xf32>,
    %347 = arith.truncf %308 : vector<2x32xf32> to vector<2x32xbf16>
    %c3_126 = arith.constant 3 : index
    %c0_127 = arith.constant 0 : index
    %c0_128 = arith.constant 0 : index
    %348 = vector.load %arg5[%c3_126, %c0_127, %c0_128] : memref<8x2x32xbf16, #tpu.memory_space<vmem>>, vector<1x2x32xbf16>
    %349 = vector.shape_cast %348 : vector<1x2x32xbf16> to vector<2x32xbf16>
    %350 = vector.shape_cast %347 : vector<2x32xbf16> to vector<1x2x32xbf16>
    tpu.vector_store %arg5[%c3_126, %c0_127, %c0_128], %350 {strides = array<i32>} : memref<8x2x32xbf16, #tpu.memory_space<vmem>>, vector<1x2x32xbf16>,
    %351 = arith.truncf %340 : vector<2x32xf32> to vector<2x32xbf16>
    %c4_129 = arith.constant 4 : index
    %c0_130 = arith.constant 0 : index
    %c0_131 = arith.constant 0 : index
    %352 = vector.load %arg6[%c4_129, %c0_130, %c0_131] : memref<8x2x32xbf16, #tpu.memory_space<vmem>>, vector<1x2x32xbf16>
    %353 = vector.shape_cast %352 : vector<1x2x32xbf16> to vector<2x32xbf16>
    %354 = vector.shape_cast %351 : vector<2x32xbf16> to vector<1x2x32xbf16>
    tpu.vector_store %arg6[%c4_129, %c0_130, %c0_131], %354 {strides = array<i32>} : memref<8x2x32xbf16, #tpu.memory_space<vmem>>, vector<1x2x32xbf16>,
    %c4_132 = arith.constant 4 : index
    %c0_133 = arith.constant 0 : index
    %c0_134 = arith.constant 0 : index
    %355 = vector.load %arg1[%c4_132, %c0_133, %c0_134] : memref<8x2x192xbf16, #tpu.memory_space<vmem>>, vector<1x2x192xbf16>
    %356 = vector.shape_cast %355 : vector<1x2x192xbf16> to vector<2x192xbf16>
    %357 = arith.extf %356 : vector<2x192xbf16> to vector<2x192xf32>
    %c3_135 = arith.constant 3 : index
    %c0_136 = arith.constant 0 : index
    %c0_137 = arith.constant 0 : index
    %358 = vector.load %arg2[%c3_135, %c0_136, %c0_137] : memref<8x2x192xbf16, #tpu.memory_space<vmem>>, vector<1x2x192xbf16>
    %359 = vector.shape_cast %358 : vector<1x2x192xbf16> to vector<2x192xbf16>
    %360 = arith.extf %359 : vector<2x192xbf16> to vector<2x192xf32>
    %361 = vector.extract_strided_slice %357 {offsets = [0, 0], sizes = [2, 96], strides = [1, 1]} : vector<2x192xf32> to vector<2x96xf32>
    %362 = vector.extract_strided_slice %360 {offsets = [0, 96], sizes = [2, 96], strides = [1, 1]} : vector<2x192xf32> to vector<2x96xf32>
    %c0_138 = arith.constant 0 : index
    %c0_139 = arith.constant 0 : index
    %c0_140 = arith.constant 0 : index
    %363 = vector.load %arg10[%c0_138, %c0_139, %c0_140] : memref<2x2x32xf32, #tpu.memory_space<vmem>>, vector<1x2x32xf32>
    %364 = vector.shape_cast %363 : vector<1x2x32xf32> to vector<2x32xf32>
    %365 = arith.truncf %364 : vector<2x32xf32> to vector<2x32xbf16>
    %cst_141 = arith.constant dense<0.000000e+00> : vector<2x96xf32>
    %366 = tpu.matmul %365, %4, %cst_141 {dimension_numbers = #tpu.dot_dimension_numbers<[1], [0], [0], [1], [0, 0, 1, 1], [], []>} : vector<2x32xbf16>, vector<32x96xbf16>, vector<2x96xf32> -> vector<2x96xf32>
    %367 = vector.broadcast %8 : vector<1x96xf32> to vector<2x96xf32>
    %368 = arith.addf %366, %367 : vector<2x96xf32>
    %369 = vector.extract_strided_slice %361 {offsets = [0, 0], sizes = [2, 32], strides = [1, 1]} : vector<2x96xf32> to vector<2x32xf32>
    %370 = vector.extract_strided_slice %368 {offsets = [0, 0], sizes = [2, 32], strides = [1, 1]} : vector<2x96xf32> to vector<2x32xf32>
    %371 = arith.addf %369, %370 : vector<2x32xf32>
    %372 = arith.negf %371 : vector<2x32xf32>
    %373 = math.exp %372 : vector<2x32xf32>
    %cst_142 = arith.constant 1.000000e+00 : f32
    %374 = vector.broadcast %cst_142 : f32 to vector<2x32xf32>
    %375 = arith.addf %374, %373 : vector<2x32xf32>
    %376 = arith.divf %374, %375 : vector<2x32xf32>
    %377 = vector.extract_strided_slice %361 {offsets = [0, 32], sizes = [2, 32], strides = [1, 1]} : vector<2x96xf32> to vector<2x32xf32>
    %378 = vector.extract_strided_slice %368 {offsets = [0, 32], sizes = [2, 32], strides = [1, 1]} : vector<2x96xf32> to vector<2x32xf32>
    %379 = arith.addf %377, %378 : vector<2x32xf32>
    %380 = arith.negf %379 : vector<2x32xf32>
    %381 = math.exp %380 : vector<2x32xf32>
    %cst_143 = arith.constant 1.000000e+00 : f32
    %382 = vector.broadcast %cst_143 : f32 to vector<2x32xf32>
    %383 = arith.addf %382, %381 : vector<2x32xf32>
    %384 = arith.divf %382, %383 : vector<2x32xf32>
    %385 = vector.extract_strided_slice %361 {offsets = [0, 64], sizes = [2, 32], strides = [1, 1]} : vector<2x96xf32> to vector<2x32xf32>
    %386 = vector.extract_strided_slice %368 {offsets = [0, 64], sizes = [2, 32], strides = [1, 1]} : vector<2x96xf32> to vector<2x32xf32>
    %387 = arith.mulf %376, %386 : vector<2x32xf32>
    %388 = arith.addf %385, %387 : vector<2x32xf32>
    %389 = math.tanh %388 : vector<2x32xf32>
    %cst_144 = arith.constant 1.000000e+00 : f32
    %390 = vector.broadcast %cst_144 : f32 to vector<2x32xf32>
    %391 = arith.subf %390, %384 : vector<2x32xf32>
    %392 = arith.mulf %391, %389 : vector<2x32xf32>
    %393 = arith.mulf %384, %364 : vector<2x32xf32>
    %394 = arith.addf %392, %393 : vector<2x32xf32>
    %c1_145 = arith.constant 1 : index
    %c0_146 = arith.constant 0 : index
    %c0_147 = arith.constant 0 : index
    %395 = vector.load %arg10[%c1_145, %c0_146, %c0_147] : memref<2x2x32xf32, #tpu.memory_space<vmem>>, vector<1x2x32xf32>
    %396 = vector.shape_cast %395 : vector<1x2x32xf32> to vector<2x32xf32>
    %397 = arith.truncf %396 : vector<2x32xf32> to vector<2x32xbf16>
    %cst_148 = arith.constant dense<0.000000e+00> : vector<2x96xf32>
    %398 = tpu.matmul %397, %6, %cst_148 {dimension_numbers = #tpu.dot_dimension_numbers<[1], [0], [0], [1], [0, 0, 1, 1], [], []>} : vector<2x32xbf16>, vector<32x96xbf16>, vector<2x96xf32> -> vector<2x96xf32>
    %399 = vector.broadcast %10 : vector<1x96xf32> to vector<2x96xf32>
    %400 = arith.addf %398, %399 : vector<2x96xf32>
    %401 = vector.extract_strided_slice %362 {offsets = [0, 0], sizes = [2, 32], strides = [1, 1]} : vector<2x96xf32> to vector<2x32xf32>
    %402 = vector.extract_strided_slice %400 {offsets = [0, 0], sizes = [2, 32], strides = [1, 1]} : vector<2x96xf32> to vector<2x32xf32>
    %403 = arith.addf %401, %402 : vector<2x32xf32>
    %404 = arith.negf %403 : vector<2x32xf32>
    %405 = math.exp %404 : vector<2x32xf32>
    %cst_149 = arith.constant 1.000000e+00 : f32
    %406 = vector.broadcast %cst_149 : f32 to vector<2x32xf32>
    %407 = arith.addf %406, %405 : vector<2x32xf32>
    %408 = arith.divf %406, %407 : vector<2x32xf32>
    %409 = vector.extract_strided_slice %362 {offsets = [0, 32], sizes = [2, 32], strides = [1, 1]} : vector<2x96xf32> to vector<2x32xf32>
    %410 = vector.extract_strided_slice %400 {offsets = [0, 32], sizes = [2, 32], strides = [1, 1]} : vector<2x96xf32> to vector<2x32xf32>
    %411 = arith.addf %409, %410 : vector<2x32xf32>
    %412 = arith.negf %411 : vector<2x32xf32>
    %413 = math.exp %412 : vector<2x32xf32>
    %cst_150 = arith.constant 1.000000e+00 : f32
    %414 = vector.broadcast %cst_150 : f32 to vector<2x32xf32>
    %415 = arith.addf %414, %413 : vector<2x32xf32>
    %416 = arith.divf %414, %415 : vector<2x32xf32>
    %417 = vector.extract_strided_slice %362 {offsets = [0, 64], sizes = [2, 32], strides = [1, 1]} : vector<2x96xf32> to vector<2x32xf32>
    %418 = vector.extract_strided_slice %400 {offsets = [0, 64], sizes = [2, 32], strides = [1, 1]} : vector<2x96xf32> to vector<2x32xf32>
    %419 = arith.mulf %408, %418 : vector<2x32xf32>
    %420 = arith.addf %417, %419 : vector<2x32xf32>
    %421 = math.tanh %420 : vector<2x32xf32>
    %cst_151 = arith.constant 1.000000e+00 : f32
    %422 = vector.broadcast %cst_151 : f32 to vector<2x32xf32>
    %423 = arith.subf %422, %416 : vector<2x32xf32>
    %424 = arith.mulf %423, %421 : vector<2x32xf32>
    %425 = arith.mulf %416, %396 : vector<2x32xf32>
    %426 = arith.addf %424, %425 : vector<2x32xf32>
    %c0_152 = arith.constant 0 : index
    %c0_153 = arith.constant 0 : index
    %c0_154 = arith.constant 0 : index
    %427 = vector.load %arg10[%c0_152, %c0_153, %c0_154] : memref<2x2x32xf32, #tpu.memory_space<vmem>>, vector<1x2x32xf32>
    %428 = vector.shape_cast %427 : vector<1x2x32xf32> to vector<2x32xf32>
    %429 = vector.shape_cast %394 : vector<2x32xf32> to vector<1x2x32xf32>
    tpu.vector_store %arg10[%c0_152, %c0_153, %c0_154], %429 {strides = array<i32>} : memref<2x2x32xf32, #tpu.memory_space<vmem>>, vector<1x2x32xf32>,
    %c1_155 = arith.constant 1 : index
    %c0_156 = arith.constant 0 : index
    %c0_157 = arith.constant 0 : index
    %430 = vector.load %arg10[%c1_155, %c0_156, %c0_157] : memref<2x2x32xf32, #tpu.memory_space<vmem>>, vector<1x2x32xf32>
    %431 = vector.shape_cast %430 : vector<1x2x32xf32> to vector<2x32xf32>
    %432 = vector.shape_cast %426 : vector<2x32xf32> to vector<1x2x32xf32>
    tpu.vector_store %arg10[%c1_155, %c0_156, %c0_157], %432 {strides = array<i32>} : memref<2x2x32xf32, #tpu.memory_space<vmem>>, vector<1x2x32xf32>,
    %433 = arith.truncf %394 : vector<2x32xf32> to vector<2x32xbf16>
    %c4_158 = arith.constant 4 : index
    %c0_159 = arith.constant 0 : index
    %c0_160 = arith.constant 0 : index
    %434 = vector.load %arg5[%c4_158, %c0_159, %c0_160] : memref<8x2x32xbf16, #tpu.memory_space<vmem>>, vector<1x2x32xbf16>
    %435 = vector.shape_cast %434 : vector<1x2x32xbf16> to vector<2x32xbf16>
    %436 = vector.shape_cast %433 : vector<2x32xbf16> to vector<1x2x32xbf16>
    tpu.vector_store %arg5[%c4_158, %c0_159, %c0_160], %436 {strides = array<i32>} : memref<8x2x32xbf16, #tpu.memory_space<vmem>>, vector<1x2x32xbf16>,
    %437 = arith.truncf %426 : vector<2x32xf32> to vector<2x32xbf16>
    %c3_161 = arith.constant 3 : index
    %c0_162 = arith.constant 0 : index
    %c0_163 = arith.constant 0 : index
    %438 = vector.load %arg6[%c3_161, %c0_162, %c0_163] : memref<8x2x32xbf16, #tpu.memory_space<vmem>>, vector<1x2x32xbf16>
    %439 = vector.shape_cast %438 : vector<1x2x32xbf16> to vector<2x32xbf16>
    %440 = vector.shape_cast %437 : vector<2x32xbf16> to vector<1x2x32xbf16>
    tpu.vector_store %arg6[%c3_161, %c0_162, %c0_163], %440 {strides = array<i32>} : memref<8x2x32xbf16, #tpu.memory_space<vmem>>, vector<1x2x32xbf16>,
    %c5_164 = arith.constant 5 : index
    %c0_165 = arith.constant 0 : index
    %c0_166 = arith.constant 0 : index
    %441 = vector.load %arg1[%c5_164, %c0_165, %c0_166] : memref<8x2x192xbf16, #tpu.memory_space<vmem>>, vector<1x2x192xbf16>
    %442 = vector.shape_cast %441 : vector<1x2x192xbf16> to vector<2x192xbf16>
    %443 = arith.extf %442 : vector<2x192xbf16> to vector<2x192xf32>
    %c2_167 = arith.constant 2 : index
    %c0_168 = arith.constant 0 : index
    %c0_169 = arith.constant 0 : index
    %444 = vector.load %arg2[%c2_167, %c0_168, %c0_169] : memref<8x2x192xbf16, #tpu.memory_space<vmem>>, vector<1x2x192xbf16>
    %445 = vector.shape_cast %444 : vector<1x2x192xbf16> to vector<2x192xbf16>
    %446 = arith.extf %445 : vector<2x192xbf16> to vector<2x192xf32>
    %447 = vector.extract_strided_slice %443 {offsets = [0, 0], sizes = [2, 96], strides = [1, 1]} : vector<2x192xf32> to vector<2x96xf32>
    %448 = vector.extract_strided_slice %446 {offsets = [0, 96], sizes = [2, 96], strides = [1, 1]} : vector<2x192xf32> to vector<2x96xf32>
    %c0_170 = arith.constant 0 : index
    %c0_171 = arith.constant 0 : index
    %c0_172 = arith.constant 0 : index
    %449 = vector.load %arg10[%c0_170, %c0_171, %c0_172] : memref<2x2x32xf32, #tpu.memory_space<vmem>>, vector<1x2x32xf32>
    %450 = vector.shape_cast %449 : vector<1x2x32xf32> to vector<2x32xf32>
    %451 = arith.truncf %450 : vector<2x32xf32> to vector<2x32xbf16>
    %cst_173 = arith.constant dense<0.000000e+00> : vector<2x96xf32>
    %452 = tpu.matmul %451, %4, %cst_173 {dimension_numbers = #tpu.dot_dimension_numbers<[1], [0], [0], [1], [0, 0, 1, 1], [], []>} : vector<2x32xbf16>, vector<32x96xbf16>, vector<2x96xf32> -> vector<2x96xf32>
    %453 = vector.broadcast %8 : vector<1x96xf32> to vector<2x96xf32>
    %454 = arith.addf %452, %453 : vector<2x96xf32>
    %455 = vector.extract_strided_slice %447 {offsets = [0, 0], sizes = [2, 32], strides = [1, 1]} : vector<2x96xf32> to vector<2x32xf32>
    %456 = vector.extract_strided_slice %454 {offsets = [0, 0], sizes = [2, 32], strides = [1, 1]} : vector<2x96xf32> to vector<2x32xf32>
    %457 = arith.addf %455, %456 : vector<2x32xf32>
    %458 = arith.negf %457 : vector<2x32xf32>
    %459 = math.exp %458 : vector<2x32xf32>
    %cst_174 = arith.constant 1.000000e+00 : f32
    %460 = vector.broadcast %cst_174 : f32 to vector<2x32xf32>
    %461 = arith.addf %460, %459 : vector<2x32xf32>
    %462 = arith.divf %460, %461 : vector<2x32xf32>
    %463 = vector.extract_strided_slice %447 {offsets = [0, 32], sizes = [2, 32], strides = [1, 1]} : vector<2x96xf32> to vector<2x32xf32>
    %464 = vector.extract_strided_slice %454 {offsets = [0, 32], sizes = [2, 32], strides = [1, 1]} : vector<2x96xf32> to vector<2x32xf32>
    %465 = arith.addf %463, %464 : vector<2x32xf32>
    %466 = arith.negf %465 : vector<2x32xf32>
    %467 = math.exp %466 : vector<2x32xf32>
    %cst_175 = arith.constant 1.000000e+00 : f32
    %468 = vector.broadcast %cst_175 : f32 to vector<2x32xf32>
    %469 = arith.addf %468, %467 : vector<2x32xf32>
    %470 = arith.divf %468, %469 : vector<2x32xf32>
    %471 = vector.extract_strided_slice %447 {offsets = [0, 64], sizes = [2, 32], strides = [1, 1]} : vector<2x96xf32> to vector<2x32xf32>
    %472 = vector.extract_strided_slice %454 {offsets = [0, 64], sizes = [2, 32], strides = [1, 1]} : vector<2x96xf32> to vector<2x32xf32>
    %473 = arith.mulf %462, %472 : vector<2x32xf32>
    %474 = arith.addf %471, %473 : vector<2x32xf32>
    %475 = math.tanh %474 : vector<2x32xf32>
    %cst_176 = arith.constant 1.000000e+00 : f32
    %476 = vector.broadcast %cst_176 : f32 to vector<2x32xf32>
    %477 = arith.subf %476, %470 : vector<2x32xf32>
    %478 = arith.mulf %477, %475 : vector<2x32xf32>
    %479 = arith.mulf %470, %450 : vector<2x32xf32>
    %480 = arith.addf %478, %479 : vector<2x32xf32>
    %c1_177 = arith.constant 1 : index
    %c0_178 = arith.constant 0 : index
    %c0_179 = arith.constant 0 : index
    %481 = vector.load %arg10[%c1_177, %c0_178, %c0_179] : memref<2x2x32xf32, #tpu.memory_space<vmem>>, vector<1x2x32xf32>
    %482 = vector.shape_cast %481 : vector<1x2x32xf32> to vector<2x32xf32>
    %483 = arith.truncf %482 : vector<2x32xf32> to vector<2x32xbf16>
    %cst_180 = arith.constant dense<0.000000e+00> : vector<2x96xf32>
    %484 = tpu.matmul %483, %6, %cst_180 {dimension_numbers = #tpu.dot_dimension_numbers<[1], [0], [0], [1], [0, 0, 1, 1], [], []>} : vector<2x32xbf16>, vector<32x96xbf16>, vector<2x96xf32> -> vector<2x96xf32>
    %485 = vector.broadcast %10 : vector<1x96xf32> to vector<2x96xf32>
    %486 = arith.addf %484, %485 : vector<2x96xf32>
    %487 = vector.extract_strided_slice %448 {offsets = [0, 0], sizes = [2, 32], strides = [1, 1]} : vector<2x96xf32> to vector<2x32xf32>
    %488 = vector.extract_strided_slice %486 {offsets = [0, 0], sizes = [2, 32], strides = [1, 1]} : vector<2x96xf32> to vector<2x32xf32>
    %489 = arith.addf %487, %488 : vector<2x32xf32>
    %490 = arith.negf %489 : vector<2x32xf32>
    %491 = math.exp %490 : vector<2x32xf32>
    %cst_181 = arith.constant 1.000000e+00 : f32
    %492 = vector.broadcast %cst_181 : f32 to vector<2x32xf32>
    %493 = arith.addf %492, %491 : vector<2x32xf32>
    %494 = arith.divf %492, %493 : vector<2x32xf32>
    %495 = vector.extract_strided_slice %448 {offsets = [0, 32], sizes = [2, 32], strides = [1, 1]} : vector<2x96xf32> to vector<2x32xf32>
    %496 = vector.extract_strided_slice %486 {offsets = [0, 32], sizes = [2, 32], strides = [1, 1]} : vector<2x96xf32> to vector<2x32xf32>
    %497 = arith.addf %495, %496 : vector<2x32xf32>
    %498 = arith.negf %497 : vector<2x32xf32>
    %499 = math.exp %498 : vector<2x32xf32>
    %cst_182 = arith.constant 1.000000e+00 : f32
    %500 = vector.broadcast %cst_182 : f32 to vector<2x32xf32>
    %501 = arith.addf %500, %499 : vector<2x32xf32>
    %502 = arith.divf %500, %501 : vector<2x32xf32>
    %503 = vector.extract_strided_slice %448 {offsets = [0, 64], sizes = [2, 32], strides = [1, 1]} : vector<2x96xf32> to vector<2x32xf32>
    %504 = vector.extract_strided_slice %486 {offsets = [0, 64], sizes = [2, 32], strides = [1, 1]} : vector<2x96xf32> to vector<2x32xf32>
    %505 = arith.mulf %494, %504 : vector<2x32xf32>
    %506 = arith.addf %503, %505 : vector<2x32xf32>
    %507 = math.tanh %506 : vector<2x32xf32>
    %cst_183 = arith.constant 1.000000e+00 : f32
    %508 = vector.broadcast %cst_183 : f32 to vector<2x32xf32>
    %509 = arith.subf %508, %502 : vector<2x32xf32>
    %510 = arith.mulf %509, %507 : vector<2x32xf32>
    %511 = arith.mulf %502, %482 : vector<2x32xf32>
    %512 = arith.addf %510, %511 : vector<2x32xf32>
    %c0_184 = arith.constant 0 : index
    %c0_185 = arith.constant 0 : index
    %c0_186 = arith.constant 0 : index
    %513 = vector.load %arg10[%c0_184, %c0_185, %c0_186] : memref<2x2x32xf32, #tpu.memory_space<vmem>>, vector<1x2x32xf32>
    %514 = vector.shape_cast %513 : vector<1x2x32xf32> to vector<2x32xf32>
    %515 = vector.shape_cast %480 : vector<2x32xf32> to vector<1x2x32xf32>
    tpu.vector_store %arg10[%c0_184, %c0_185, %c0_186], %515 {strides = array<i32>} : memref<2x2x32xf32, #tpu.memory_space<vmem>>, vector<1x2x32xf32>,
    %c1_187 = arith.constant 1 : index
    %c0_188 = arith.constant 0 : index
    %c0_189 = arith.constant 0 : index
    %516 = vector.load %arg10[%c1_187, %c0_188, %c0_189] : memref<2x2x32xf32, #tpu.memory_space<vmem>>, vector<1x2x32xf32>
    %517 = vector.shape_cast %516 : vector<1x2x32xf32> to vector<2x32xf32>
    %518 = vector.shape_cast %512 : vector<2x32xf32> to vector<1x2x32xf32>
    tpu.vector_store %arg10[%c1_187, %c0_188, %c0_189], %518 {strides = array<i32>} : memref<2x2x32xf32, #tpu.memory_space<vmem>>, vector<1x2x32xf32>,
    %519 = arith.truncf %480 : vector<2x32xf32> to vector<2x32xbf16>
    %c5_190 = arith.constant 5 : index
    %c0_191 = arith.constant 0 : index
    %c0_192 = arith.constant 0 : index
    %520 = vector.load %arg5[%c5_190, %c0_191, %c0_192] : memref<8x2x32xbf16, #tpu.memory_space<vmem>>, vector<1x2x32xbf16>
    %521 = vector.shape_cast %520 : vector<1x2x32xbf16> to vector<2x32xbf16>
    %522 = vector.shape_cast %519 : vector<2x32xbf16> to vector<1x2x32xbf16>
    tpu.vector_store %arg5[%c5_190, %c0_191, %c0_192], %522 {strides = array<i32>} : memref<8x2x32xbf16, #tpu.memory_space<vmem>>, vector<1x2x32xbf16>,
    %523 = arith.truncf %512 : vector<2x32xf32> to vector<2x32xbf16>
    %c2_193 = arith.constant 2 : index
    %c0_194 = arith.constant 0 : index
    %c0_195 = arith.constant 0 : index
    %524 = vector.load %arg6[%c2_193, %c0_194, %c0_195] : memref<8x2x32xbf16, #tpu.memory_space<vmem>>, vector<1x2x32xbf16>
    %525 = vector.shape_cast %524 : vector<1x2x32xbf16> to vector<2x32xbf16>
    %526 = vector.shape_cast %523 : vector<2x32xbf16> to vector<1x2x32xbf16>
    tpu.vector_store %arg6[%c2_193, %c0_194, %c0_195], %526 {strides = array<i32>} : memref<8x2x32xbf16, #tpu.memory_space<vmem>>, vector<1x2x32xbf16>,
    %c6_196 = arith.constant 6 : index
    %c0_197 = arith.constant 0 : index
    %c0_198 = arith.constant 0 : index
    %527 = vector.load %arg1[%c6_196, %c0_197, %c0_198] : memref<8x2x192xbf16, #tpu.memory_space<vmem>>, vector<1x2x192xbf16>
    %528 = vector.shape_cast %527 : vector<1x2x192xbf16> to vector<2x192xbf16>
    %529 = arith.extf %528 : vector<2x192xbf16> to vector<2x192xf32>
    %c1_199 = arith.constant 1 : index
    %c0_200 = arith.constant 0 : index
    %c0_201 = arith.constant 0 : index
    %530 = vector.load %arg2[%c1_199, %c0_200, %c0_201] : memref<8x2x192xbf16, #tpu.memory_space<vmem>>, vector<1x2x192xbf16>
    %531 = vector.shape_cast %530 : vector<1x2x192xbf16> to vector<2x192xbf16>
    %532 = arith.extf %531 : vector<2x192xbf16> to vector<2x192xf32>
    %533 = vector.extract_strided_slice %529 {offsets = [0, 0], sizes = [2, 96], strides = [1, 1]} : vector<2x192xf32> to vector<2x96xf32>
    %534 = vector.extract_strided_slice %532 {offsets = [0, 96], sizes = [2, 96], strides = [1, 1]} : vector<2x192xf32> to vector<2x96xf32>
    %c0_202 = arith.constant 0 : index
    %c0_203 = arith.constant 0 : index
    %c0_204 = arith.constant 0 : index
    %535 = vector.load %arg10[%c0_202, %c0_203, %c0_204] : memref<2x2x32xf32, #tpu.memory_space<vmem>>, vector<1x2x32xf32>
    %536 = vector.shape_cast %535 : vector<1x2x32xf32> to vector<2x32xf32>
    %537 = arith.truncf %536 : vector<2x32xf32> to vector<2x32xbf16>
    %cst_205 = arith.constant dense<0.000000e+00> : vector<2x96xf32>
    %538 = tpu.matmul %537, %4, %cst_205 {dimension_numbers = #tpu.dot_dimension_numbers<[1], [0], [0], [1], [0, 0, 1, 1], [], []>} : vector<2x32xbf16>, vector<32x96xbf16>, vector<2x96xf32> -> vector<2x96xf32>
    %539 = vector.broadcast %8 : vector<1x96xf32> to vector<2x96xf32>
    %540 = arith.addf %538, %539 : vector<2x96xf32>
    %541 = vector.extract_strided_slice %533 {offsets = [0, 0], sizes = [2, 32], strides = [1, 1]} : vector<2x96xf32> to vector<2x32xf32>
    %542 = vector.extract_strided_slice %540 {offsets = [0, 0], sizes = [2, 32], strides = [1, 1]} : vector<2x96xf32> to vector<2x32xf32>
    %543 = arith.addf %541, %542 : vector<2x32xf32>
    %544 = arith.negf %543 : vector<2x32xf32>
    %545 = math.exp %544 : vector<2x32xf32>
    %cst_206 = arith.constant 1.000000e+00 : f32
    %546 = vector.broadcast %cst_206 : f32 to vector<2x32xf32>
    %547 = arith.addf %546, %545 : vector<2x32xf32>
    %548 = arith.divf %546, %547 : vector<2x32xf32>
    %549 = vector.extract_strided_slice %533 {offsets = [0, 32], sizes = [2, 32], strides = [1, 1]} : vector<2x96xf32> to vector<2x32xf32>
    %550 = vector.extract_strided_slice %540 {offsets = [0, 32], sizes = [2, 32], strides = [1, 1]} : vector<2x96xf32> to vector<2x32xf32>
    %551 = arith.addf %549, %550 : vector<2x32xf32>
    %552 = arith.negf %551 : vector<2x32xf32>
    %553 = math.exp %552 : vector<2x32xf32>
    %cst_207 = arith.constant 1.000000e+00 : f32
    %554 = vector.broadcast %cst_207 : f32 to vector<2x32xf32>
    %555 = arith.addf %554, %553 : vector<2x32xf32>
    %556 = arith.divf %554, %555 : vector<2x32xf32>
    %557 = vector.extract_strided_slice %533 {offsets = [0, 64], sizes = [2, 32], strides = [1, 1]} : vector<2x96xf32> to vector<2x32xf32>
    %558 = vector.extract_strided_slice %540 {offsets = [0, 64], sizes = [2, 32], strides = [1, 1]} : vector<2x96xf32> to vector<2x32xf32>
    %559 = arith.mulf %548, %558 : vector<2x32xf32>
    %560 = arith.addf %557, %559 : vector<2x32xf32>
    %561 = math.tanh %560 : vector<2x32xf32>
    %cst_208 = arith.constant 1.000000e+00 : f32
    %562 = vector.broadcast %cst_208 : f32 to vector<2x32xf32>
    %563 = arith.subf %562, %556 : vector<2x32xf32>
    %564 = arith.mulf %563, %561 : vector<2x32xf32>
    %565 = arith.mulf %556, %536 : vector<2x32xf32>
    %566 = arith.addf %564, %565 : vector<2x32xf32>
    %c1_209 = arith.constant 1 : index
    %c0_210 = arith.constant 0 : index
    %c0_211 = arith.constant 0 : index
    %567 = vector.load %arg10[%c1_209, %c0_210, %c0_211] : memref<2x2x32xf32, #tpu.memory_space<vmem>>, vector<1x2x32xf32>
    %568 = vector.shape_cast %567 : vector<1x2x32xf32> to vector<2x32xf32>
    %569 = arith.truncf %568 : vector<2x32xf32> to vector<2x32xbf16>
    %cst_212 = arith.constant dense<0.000000e+00> : vector<2x96xf32>
    %570 = tpu.matmul %569, %6, %cst_212 {dimension_numbers = #tpu.dot_dimension_numbers<[1], [0], [0], [1], [0, 0, 1, 1], [], []>} : vector<2x32xbf16>, vector<32x96xbf16>, vector<2x96xf32> -> vector<2x96xf32>
    %571 = vector.broadcast %10 : vector<1x96xf32> to vector<2x96xf32>
    %572 = arith.addf %570, %571 : vector<2x96xf32>
    %573 = vector.extract_strided_slice %534 {offsets = [0, 0], sizes = [2, 32], strides = [1, 1]} : vector<2x96xf32> to vector<2x32xf32>
    %574 = vector.extract_strided_slice %572 {offsets = [0, 0], sizes = [2, 32], strides = [1, 1]} : vector<2x96xf32> to vector<2x32xf32>
    %575 = arith.addf %573, %574 : vector<2x32xf32>
    %576 = arith.negf %575 : vector<2x32xf32>
    %577 = math.exp %576 : vector<2x32xf32>
    %cst_213 = arith.constant 1.000000e+00 : f32
    %578 = vector.broadcast %cst_213 : f32 to vector<2x32xf32>
    %579 = arith.addf %578, %577 : vector<2x32xf32>
    %580 = arith.divf %578, %579 : vector<2x32xf32>
    %581 = vector.extract_strided_slice %534 {offsets = [0, 32], sizes = [2, 32], strides = [1, 1]} : vector<2x96xf32> to vector<2x32xf32>
    %582 = vector.extract_strided_slice %572 {offsets = [0, 32], sizes = [2, 32], strides = [1, 1]} : vector<2x96xf32> to vector<2x32xf32>
    %583 = arith.addf %581, %582 : vector<2x32xf32>
    %584 = arith.negf %583 : vector<2x32xf32>
    %585 = math.exp %584 : vector<2x32xf32>
    %cst_214 = arith.constant 1.000000e+00 : f32
    %586 = vector.broadcast %cst_214 : f32 to vector<2x32xf32>
    %587 = arith.addf %586, %585 : vector<2x32xf32>
    %588 = arith.divf %586, %587 : vector<2x32xf32>
    %589 = vector.extract_strided_slice %534 {offsets = [0, 64], sizes = [2, 32], strides = [1, 1]} : vector<2x96xf32> to vector<2x32xf32>
    %590 = vector.extract_strided_slice %572 {offsets = [0, 64], sizes = [2, 32], strides = [1, 1]} : vector<2x96xf32> to vector<2x32xf32>
    %591 = arith.mulf %580, %590 : vector<2x32xf32>
    %592 = arith.addf %589, %591 : vector<2x32xf32>
    %593 = math.tanh %592 : vector<2x32xf32>
    %cst_215 = arith.constant 1.000000e+00 : f32
    %594 = vector.broadcast %cst_215 : f32 to vector<2x32xf32>
    %595 = arith.subf %594, %588 : vector<2x32xf32>
    %596 = arith.mulf %595, %593 : vector<2x32xf32>
    %597 = arith.mulf %588, %568 : vector<2x32xf32>
    %598 = arith.addf %596, %597 : vector<2x32xf32>
    %c0_216 = arith.constant 0 : index
    %c0_217 = arith.constant 0 : index
    %c0_218 = arith.constant 0 : index
    %599 = vector.load %arg10[%c0_216, %c0_217, %c0_218] : memref<2x2x32xf32, #tpu.memory_space<vmem>>, vector<1x2x32xf32>
    %600 = vector.shape_cast %599 : vector<1x2x32xf32> to vector<2x32xf32>
    %601 = vector.shape_cast %566 : vector<2x32xf32> to vector<1x2x32xf32>
    tpu.vector_store %arg10[%c0_216, %c0_217, %c0_218], %601 {strides = array<i32>} : memref<2x2x32xf32, #tpu.memory_space<vmem>>, vector<1x2x32xf32>,
    %c1_219 = arith.constant 1 : index
    %c0_220 = arith.constant 0 : index
    %c0_221 = arith.constant 0 : index
    %602 = vector.load %arg10[%c1_219, %c0_220, %c0_221] : memref<2x2x32xf32, #tpu.memory_space<vmem>>, vector<1x2x32xf32>
    %603 = vector.shape_cast %602 : vector<1x2x32xf32> to vector<2x32xf32>
    %604 = vector.shape_cast %598 : vector<2x32xf32> to vector<1x2x32xf32>
    tpu.vector_store %arg10[%c1_219, %c0_220, %c0_221], %604 {strides = array<i32>} : memref<2x2x32xf32, #tpu.memory_space<vmem>>, vector<1x2x32xf32>,
    %605 = arith.truncf %566 : vector<2x32xf32> to vector<2x32xbf16>
    %c6_222 = arith.constant 6 : index
    %c0_223 = arith.constant 0 : index
    %c0_224 = arith.constant 0 : index
    %606 = vector.load %arg5[%c6_222, %c0_223, %c0_224] : memref<8x2x32xbf16, #tpu.memory_space<vmem>>, vector<1x2x32xbf16>
    %607 = vector.shape_cast %606 : vector<1x2x32xbf16> to vector<2x32xbf16>
    %608 = vector.shape_cast %605 : vector<2x32xbf16> to vector<1x2x32xbf16>
    tpu.vector_store %arg5[%c6_222, %c0_223, %c0_224], %608 {strides = array<i32>} : memref<8x2x32xbf16, #tpu.memory_space<vmem>>, vector<1x2x32xbf16>,
    %609 = arith.truncf %598 : vector<2x32xf32> to vector<2x32xbf16>
    %c1_225 = arith.constant 1 : index
    %c0_226 = arith.constant 0 : index
    %c0_227 = arith.constant 0 : index
    %610 = vector.load %arg6[%c1_225, %c0_226, %c0_227] : memref<8x2x32xbf16, #tpu.memory_space<vmem>>, vector<1x2x32xbf16>
    %611 = vector.shape_cast %610 : vector<1x2x32xbf16> to vector<2x32xbf16>
    %612 = vector.shape_cast %609 : vector<2x32xbf16> to vector<1x2x32xbf16>
    tpu.vector_store %arg6[%c1_225, %c0_226, %c0_227], %612 {strides = array<i32>} : memref<8x2x32xbf16, #tpu.memory_space<vmem>>, vector<1x2x32xbf16>,
    %c7_228 = arith.constant 7 : index
    %c0_229 = arith.constant 0 : index
    %c0_230 = arith.constant 0 : index
    %613 = vector.load %arg1[%c7_228, %c0_229, %c0_230] : memref<8x2x192xbf16, #tpu.memory_space<vmem>>, vector<1x2x192xbf16>
    %614 = vector.shape_cast %613 : vector<1x2x192xbf16> to vector<2x192xbf16>
    %615 = arith.extf %614 : vector<2x192xbf16> to vector<2x192xf32>
    %c0_231 = arith.constant 0 : index
    %c0_232 = arith.constant 0 : index
    %c0_233 = arith.constant 0 : index
    %616 = vector.load %arg2[%c0_231, %c0_232, %c0_233] : memref<8x2x192xbf16, #tpu.memory_space<vmem>>, vector<1x2x192xbf16>
    %617 = vector.shape_cast %616 : vector<1x2x192xbf16> to vector<2x192xbf16>
    %618 = arith.extf %617 : vector<2x192xbf16> to vector<2x192xf32>
    %619 = vector.extract_strided_slice %615 {offsets = [0, 0], sizes = [2, 96], strides = [1, 1]} : vector<2x192xf32> to vector<2x96xf32>
    %620 = vector.extract_strided_slice %618 {offsets = [0, 96], sizes = [2, 96], strides = [1, 1]} : vector<2x192xf32> to vector<2x96xf32>
    %c0_234 = arith.constant 0 : index
    %c0_235 = arith.constant 0 : index
    %c0_236 = arith.constant 0 : index
    %621 = vector.load %arg10[%c0_234, %c0_235, %c0_236] : memref<2x2x32xf32, #tpu.memory_space<vmem>>, vector<1x2x32xf32>
    %622 = vector.shape_cast %621 : vector<1x2x32xf32> to vector<2x32xf32>
    %623 = arith.truncf %622 : vector<2x32xf32> to vector<2x32xbf16>
    %cst_237 = arith.constant dense<0.000000e+00> : vector<2x96xf32>
    %624 = tpu.matmul %623, %4, %cst_237 {dimension_numbers = #tpu.dot_dimension_numbers<[1], [0], [0], [1], [0, 0, 1, 1], [], []>} : vector<2x32xbf16>, vector<32x96xbf16>, vector<2x96xf32> -> vector<2x96xf32>
    %625 = vector.broadcast %8 : vector<1x96xf32> to vector<2x96xf32>
    %626 = arith.addf %624, %625 : vector<2x96xf32>
    %627 = vector.extract_strided_slice %619 {offsets = [0, 0], sizes = [2, 32], strides = [1, 1]} : vector<2x96xf32> to vector<2x32xf32>
    %628 = vector.extract_strided_slice %626 {offsets = [0, 0], sizes = [2, 32], strides = [1, 1]} : vector<2x96xf32> to vector<2x32xf32>
    %629 = arith.addf %627, %628 : vector<2x32xf32>
    %630 = arith.negf %629 : vector<2x32xf32>
    %631 = math.exp %630 : vector<2x32xf32>
    %cst_238 = arith.constant 1.000000e+00 : f32
    %632 = vector.broadcast %cst_238 : f32 to vector<2x32xf32>
    %633 = arith.addf %632, %631 : vector<2x32xf32>
    %634 = arith.divf %632, %633 : vector<2x32xf32>
    %635 = vector.extract_strided_slice %619 {offsets = [0, 32], sizes = [2, 32], strides = [1, 1]} : vector<2x96xf32> to vector<2x32xf32>
    %636 = vector.extract_strided_slice %626 {offsets = [0, 32], sizes = [2, 32], strides = [1, 1]} : vector<2x96xf32> to vector<2x32xf32>
    %637 = arith.addf %635, %636 : vector<2x32xf32>
    %638 = arith.negf %637 : vector<2x32xf32>
    %639 = math.exp %638 : vector<2x32xf32>
    %cst_239 = arith.constant 1.000000e+00 : f32
    %640 = vector.broadcast %cst_239 : f32 to vector<2x32xf32>
    %641 = arith.addf %640, %639 : vector<2x32xf32>
    %642 = arith.divf %640, %641 : vector<2x32xf32>
    %643 = vector.extract_strided_slice %619 {offsets = [0, 64], sizes = [2, 32], strides = [1, 1]} : vector<2x96xf32> to vector<2x32xf32>
    %644 = vector.extract_strided_slice %626 {offsets = [0, 64], sizes = [2, 32], strides = [1, 1]} : vector<2x96xf32> to vector<2x32xf32>
    %645 = arith.mulf %634, %644 : vector<2x32xf32>
    %646 = arith.addf %643, %645 : vector<2x32xf32>
    %647 = math.tanh %646 : vector<2x32xf32>
    %cst_240 = arith.constant 1.000000e+00 : f32
    %648 = vector.broadcast %cst_240 : f32 to vector<2x32xf32>
    %649 = arith.subf %648, %642 : vector<2x32xf32>
    %650 = arith.mulf %649, %647 : vector<2x32xf32>
    %651 = arith.mulf %642, %622 : vector<2x32xf32>
    %652 = arith.addf %650, %651 : vector<2x32xf32>
    %c1_241 = arith.constant 1 : index
    %c0_242 = arith.constant 0 : index
    %c0_243 = arith.constant 0 : index
    %653 = vector.load %arg10[%c1_241, %c0_242, %c0_243] : memref<2x2x32xf32, #tpu.memory_space<vmem>>, vector<1x2x32xf32>
    %654 = vector.shape_cast %653 : vector<1x2x32xf32> to vector<2x32xf32>
    %655 = arith.truncf %654 : vector<2x32xf32> to vector<2x32xbf16>
    %cst_244 = arith.constant dense<0.000000e+00> : vector<2x96xf32>
    %656 = tpu.matmul %655, %6, %cst_244 {dimension_numbers = #tpu.dot_dimension_numbers<[1], [0], [0], [1], [0, 0, 1, 1], [], []>} : vector<2x32xbf16>, vector<32x96xbf16>, vector<2x96xf32> -> vector<2x96xf32>
    %657 = vector.broadcast %10 : vector<1x96xf32> to vector<2x96xf32>
    %658 = arith.addf %656, %657 : vector<2x96xf32>
    %659 = vector.extract_strided_slice %620 {offsets = [0, 0], sizes = [2, 32], strides = [1, 1]} : vector<2x96xf32> to vector<2x32xf32>
    %660 = vector.extract_strided_slice %658 {offsets = [0, 0], sizes = [2, 32], strides = [1, 1]} : vector<2x96xf32> to vector<2x32xf32>
    %661 = arith.addf %659, %660 : vector<2x32xf32>
    %662 = arith.negf %661 : vector<2x32xf32>
    %663 = math.exp %662 : vector<2x32xf32>
    %cst_245 = arith.constant 1.000000e+00 : f32
    %664 = vector.broadcast %cst_245 : f32 to vector<2x32xf32>
    %665 = arith.addf %664, %663 : vector<2x32xf32>
    %666 = arith.divf %664, %665 : vector<2x32xf32>
    %667 = vector.extract_strided_slice %620 {offsets = [0, 32], sizes = [2, 32], strides = [1, 1]} : vector<2x96xf32> to vector<2x32xf32>
    %668 = vector.extract_strided_slice %658 {offsets = [0, 32], sizes = [2, 32], strides = [1, 1]} : vector<2x96xf32> to vector<2x32xf32>
    %669 = arith.addf %667, %668 : vector<2x32xf32>
    %670 = arith.negf %669 : vector<2x32xf32>
    %671 = math.exp %670 : vector<2x32xf32>
    %cst_246 = arith.constant 1.000000e+00 : f32
    %672 = vector.broadcast %cst_246 : f32 to vector<2x32xf32>
    %673 = arith.addf %672, %671 : vector<2x32xf32>
    %674 = arith.divf %672, %673 : vector<2x32xf32>
    %675 = vector.extract_strided_slice %620 {offsets = [0, 64], sizes = [2, 32], strides = [1, 1]} : vector<2x96xf32> to vector<2x32xf32>
    %676 = vector.extract_strided_slice %658 {offsets = [0, 64], sizes = [2, 32], strides = [1, 1]} : vector<2x96xf32> to vector<2x32xf32>
    %677 = arith.mulf %666, %676 : vector<2x32xf32>
    %678 = arith.addf %675, %677 : vector<2x32xf32>
    %679 = math.tanh %678 : vector<2x32xf32>
    %cst_247 = arith.constant 1.000000e+00 : f32
    %680 = vector.broadcast %cst_247 : f32 to vector<2x32xf32>
    %681 = arith.subf %680, %674 : vector<2x32xf32>
    %682 = arith.mulf %681, %679 : vector<2x32xf32>
    %683 = arith.mulf %674, %654 : vector<2x32xf32>
    %684 = arith.addf %682, %683 : vector<2x32xf32>
    %c0_248 = arith.constant 0 : index
    %c0_249 = arith.constant 0 : index
    %c0_250 = arith.constant 0 : index
    %685 = vector.load %arg10[%c0_248, %c0_249, %c0_250] : memref<2x2x32xf32, #tpu.memory_space<vmem>>, vector<1x2x32xf32>
    %686 = vector.shape_cast %685 : vector<1x2x32xf32> to vector<2x32xf32>
    %687 = vector.shape_cast %652 : vector<2x32xf32> to vector<1x2x32xf32>
    tpu.vector_store %arg10[%c0_248, %c0_249, %c0_250], %687 {strides = array<i32>} : memref<2x2x32xf32, #tpu.memory_space<vmem>>, vector<1x2x32xf32>,
    %c1_251 = arith.constant 1 : index
    %c0_252 = arith.constant 0 : index
    %c0_253 = arith.constant 0 : index
    %688 = vector.load %arg10[%c1_251, %c0_252, %c0_253] : memref<2x2x32xf32, #tpu.memory_space<vmem>>, vector<1x2x32xf32>
    %689 = vector.shape_cast %688 : vector<1x2x32xf32> to vector<2x32xf32>
    %690 = vector.shape_cast %684 : vector<2x32xf32> to vector<1x2x32xf32>
    tpu.vector_store %arg10[%c1_251, %c0_252, %c0_253], %690 {strides = array<i32>} : memref<2x2x32xf32, #tpu.memory_space<vmem>>, vector<1x2x32xf32>,
    %691 = arith.truncf %652 : vector<2x32xf32> to vector<2x32xbf16>
    %c7_254 = arith.constant 7 : index
    %c0_255 = arith.constant 0 : index
    %c0_256 = arith.constant 0 : index
    %692 = vector.load %arg5[%c7_254, %c0_255, %c0_256] : memref<8x2x32xbf16, #tpu.memory_space<vmem>>, vector<1x2x32xbf16>
    %693 = vector.shape_cast %692 : vector<1x2x32xbf16> to vector<2x32xbf16>
    %694 = vector.shape_cast %691 : vector<2x32xbf16> to vector<1x2x32xbf16>
    tpu.vector_store %arg5[%c7_254, %c0_255, %c0_256], %694 {strides = array<i32>} : memref<8x2x32xbf16, #tpu.memory_space<vmem>>, vector<1x2x32xbf16>,
    %695 = arith.truncf %684 : vector<2x32xf32> to vector<2x32xbf16>
    %c0_257 = arith.constant 0 : index
    %c0_258 = arith.constant 0 : index
    %c0_259 = arith.constant 0 : index
    %696 = vector.load %arg6[%c0_257, %c0_258, %c0_259] : memref<8x2x32xbf16, #tpu.memory_space<vmem>>, vector<1x2x32xbf16>
    %697 = vector.shape_cast %696 : vector<1x2x32xbf16> to vector<2x32xbf16>
    %698 = vector.shape_cast %695 : vector<2x32xbf16> to vector<1x2x32xbf16>
    tpu.vector_store %arg6[%c0_257, %c0_258, %c0_259], %698 {strides = array<i32>} : memref<8x2x32xbf16, #tpu.memory_space<vmem>>, vector<1x2x32xbf16>,
    return
  }
  func.func @transform_0(%arg0: i32) -> (i32, i32, i32) {
    %c0_i32 = arith.constant 0 : i32
    %c0_i32_0 = arith.constant 0 : i32
    %c0_i32_1 = arith.constant 0 : i32
    return %arg0, %c0_i32, %c0_i32_0 : i32, i32, i32
  }
  func.func @transform_1(%arg0: i32) -> (i32, i32, i32) {
    %c0_i32 = arith.constant 0 : i32
    %0 = arith.subi %c0_i32, %arg0 : i32
    %c0_i32_0 = arith.constant 0 : i32
    %c0_i32_1 = arith.constant 0 : i32
    %c0_i32_2 = arith.constant 0 : i32
    return %0, %c0_i32_0, %c0_i32_1 : i32, i32, i32
  }
  func.func @transform_4(%arg0: i32) -> (i32, i32, i32) {
    %c0_i32 = arith.constant 0 : i32
    %c0_i32_0 = arith.constant 0 : i32
    %c0_i32_1 = arith.constant 0 : i32
    return %arg0, %c0_i32, %c0_i32_0 : i32, i32, i32
  }
  func.func @transform_5(%arg0: i32) -> (i32, i32, i32) {
    %c0_i32 = arith.constant 0 : i32
    %0 = arith.subi %c0_i32, %arg0 : i32
    %c0_i32_0 = arith.constant 0 : i32
    %c0_i32_1 = arith.constant 0 : i32
    %c0_i32_2 = arith.constant 0 : i32
    return %0, %c0_i32_0, %c0_i32_1 : i32, i32, i32
  }
}

module attributes {stable_mosaic.version = 11 : i64} {
  func.func @_dense_kernel(%arg0: i32, %arg1: i32, %arg2: memref<16x32xbf16, #tpu.memory_space<vmem>>, %arg3: memref<16x32xbf16, #tpu.memory_space<vmem>>, %arg4: memref<32x192xbf16, #tpu.memory_space<vmem>>, %arg5: memref<32x192xbf16, #tpu.memory_space<vmem>>, %arg6: memref<1x192xf32, #tpu.memory_space<vmem>>, %arg7: memref<16x192xbf16, #tpu.memory_space<vmem>>) attributes {dimension_semantics = [#tpu.dimension_semantics<parallel>, #tpu.dimension_semantics<parallel>], iteration_bounds = array<i64: 1, 1>, scalar_prefetch = 0 : i64, scratch_operands = 0 : i64, tpu.core_type = #tpu.core_type<tc>, window_params = [{transform_indices = @transform_0, window_bounds = array<i64: 16, 32>}, {transform_indices = @transform_1, window_bounds = array<i64: 16, 32>}, {transform_indices = @transform_2, window_bounds = array<i64: 32, 192>}, {transform_indices = @transform_3, window_bounds = array<i64: 32, 192>}, {transform_indices = @transform_4, window_bounds = array<i64: 1, 192>}, {transform_indices = @transform_5, window_bounds = array<i64: 16, 192>}]} {
    %c0 = arith.constant 0 : index
    %c0_0 = arith.constant 0 : index
    %0 = vector.load %arg2[%c0, %c0_0] : memref<16x32xbf16, #tpu.memory_space<vmem>>, vector<16x32xbf16>
    %c0_1 = arith.constant 0 : index
    %c0_2 = arith.constant 0 : index
    %1 = vector.load %arg4[%c0_1, %c0_2] : memref<32x192xbf16, #tpu.memory_space<vmem>>, vector<32x192xbf16>
    %cst = arith.constant dense<0.000000e+00> : vector<16x192xf32>
    %2 = tpu.matmul %0, %1, %cst {dimension_numbers = #tpu.dot_dimension_numbers<[1], [0], [0], [1], [0, 0, 1, 1], [], []>} : vector<16x32xbf16>, vector<32x192xbf16>, vector<16x192xf32> -> vector<16x192xf32>
    %c0_3 = arith.constant 0 : index
    %c0_4 = arith.constant 0 : index
    %3 = vector.load %arg3[%c0_3, %c0_4] : memref<16x32xbf16, #tpu.memory_space<vmem>>, vector<16x32xbf16>
    %c0_5 = arith.constant 0 : index
    %c0_6 = arith.constant 0 : index
    %4 = vector.load %arg5[%c0_5, %c0_6] : memref<32x192xbf16, #tpu.memory_space<vmem>>, vector<32x192xbf16>
    %cst_7 = arith.constant dense<0.000000e+00> : vector<16x192xf32>
    %5 = tpu.matmul %3, %4, %cst_7 {dimension_numbers = #tpu.dot_dimension_numbers<[1], [0], [0], [1], [0, 0, 1, 1], [], []>} : vector<16x32xbf16>, vector<32x192xbf16>, vector<16x192xf32> -> vector<16x192xf32>
    %6 = arith.addf %2, %5 : vector<16x192xf32>
    %c0_8 = arith.constant 0 : index
    %c0_9 = arith.constant 0 : index
    %7 = vector.load %arg6[%c0_8, %c0_9] : memref<1x192xf32, #tpu.memory_space<vmem>>, vector<1x192xf32>
    %8 = vector.broadcast %7 : vector<1x192xf32> to vector<16x192xf32>
    %9 = arith.addf %6, %8 : vector<16x192xf32>
    %10 = arith.truncf %9 : vector<16x192xf32> to vector<16x192xbf16>
    %c0_10 = arith.constant 0 : index
    %c0_11 = arith.constant 0 : index
    %11 = vector.load %arg7[%c0_10, %c0_11] : memref<16x192xbf16, #tpu.memory_space<vmem>>, vector<16x192xbf16>
    tpu.vector_store %arg7[%c0_10, %c0_11], %10 {strides = array<i32>} : memref<16x192xbf16, #tpu.memory_space<vmem>>, vector<16x192xbf16>,
    return
  }
  func.func @transform_0(%arg0: i32, %arg1: i32) -> (i32, i32) {
    %c0_i32 = arith.constant 0 : i32
    %c0_i32_0 = arith.constant 0 : i32
    return %arg0, %c0_i32 : i32, i32
  }
  func.func @transform_1(%arg0: i32, %arg1: i32) -> (i32, i32) {
    %c0_i32 = arith.constant 0 : i32
    %c0_i32_0 = arith.constant 0 : i32
    return %arg0, %c0_i32 : i32, i32
  }
  func.func @transform_2(%arg0: i32, %arg1: i32) -> (i32, i32) {
    %c0_i32 = arith.constant 0 : i32
    %c0_i32_0 = arith.constant 0 : i32
    return %c0_i32, %arg1 : i32, i32
  }
  func.func @transform_3(%arg0: i32, %arg1: i32) -> (i32, i32) {
    %c0_i32 = arith.constant 0 : i32
    %c0_i32_0 = arith.constant 0 : i32
    return %c0_i32, %arg1 : i32, i32
  }
  func.func @transform_4(%arg0: i32, %arg1: i32) -> (i32, i32) {
    %c0_i32 = arith.constant 0 : i32
    %c0_i32_0 = arith.constant 0 : i32
    return %c0_i32, %arg1 : i32, i32
  }
  func.func @transform_5(%arg0: i32, %arg1: i32) -> (i32, i32) {
    %c0_i32 = arith.constant 0 : i32
    return %arg0, %arg1 : i32, i32
  }
}

module attributes {stable_mosaic.version = 11 : i64} {
  func.func @_dense_kernel(%arg0: i32, %arg1: i32, %arg2: memref<16x32xbf16, #tpu.memory_space<vmem>>, %arg3: memref<16x32xbf16, #tpu.memory_space<vmem>>, %arg4: memref<32x12xbf16, #tpu.memory_space<vmem>>, %arg5: memref<32x12xbf16, #tpu.memory_space<vmem>>, %arg6: memref<1x12xf32, #tpu.memory_space<vmem>>, %arg7: memref<16x12xf32, #tpu.memory_space<vmem>>) attributes {dimension_semantics = [#tpu.dimension_semantics<parallel>, #tpu.dimension_semantics<parallel>], iteration_bounds = array<i64: 1, 1>, scalar_prefetch = 0 : i64, scratch_operands = 0 : i64, tpu.core_type = #tpu.core_type<tc>, window_params = [{transform_indices = @transform_0, window_bounds = array<i64: 16, 32>}, {transform_indices = @transform_1, window_bounds = array<i64: 16, 32>}, {transform_indices = @transform_2, window_bounds = array<i64: 32, 12>}, {transform_indices = @transform_3, window_bounds = array<i64: 32, 12>}, {transform_indices = @transform_4, window_bounds = array<i64: 1, 12>}, {transform_indices = @transform_5, window_bounds = array<i64: 16, 12>}]} {
    %c0 = arith.constant 0 : index
    %c0_0 = arith.constant 0 : index
    %0 = vector.load %arg2[%c0, %c0_0] : memref<16x32xbf16, #tpu.memory_space<vmem>>, vector<16x32xbf16>
    %cst = arith.constant 0.000000e+00 : bf16
    %1 = vector.broadcast %cst : bf16 to vector<16x32xbf16>
    %2 = arith.maximumf %0, %1 : vector<16x32xbf16>
    %c0_1 = arith.constant 0 : index
    %c0_2 = arith.constant 0 : index
    %3 = vector.load %arg4[%c0_1, %c0_2] : memref<32x12xbf16, #tpu.memory_space<vmem>>, vector<32x12xbf16>
    %cst_3 = arith.constant dense<0.000000e+00> : vector<16x12xf32>
    %4 = tpu.matmul %2, %3, %cst_3 {dimension_numbers = #tpu.dot_dimension_numbers<[1], [0], [0], [1], [0, 0, 1, 1], [], []>} : vector<16x32xbf16>, vector<32x12xbf16>, vector<16x12xf32> -> vector<16x12xf32>
    %c0_4 = arith.constant 0 : index
    %c0_5 = arith.constant 0 : index
    %5 = vector.load %arg3[%c0_4, %c0_5] : memref<16x32xbf16, #tpu.memory_space<vmem>>, vector<16x32xbf16>
    %cst_6 = arith.constant 0.000000e+00 : bf16
    %6 = vector.broadcast %cst_6 : bf16 to vector<16x32xbf16>
    %7 = arith.maximumf %5, %6 : vector<16x32xbf16>
    %c0_7 = arith.constant 0 : index
    %c0_8 = arith.constant 0 : index
    %8 = vector.load %arg5[%c0_7, %c0_8] : memref<32x12xbf16, #tpu.memory_space<vmem>>, vector<32x12xbf16>
    %cst_9 = arith.constant dense<0.000000e+00> : vector<16x12xf32>
    %9 = tpu.matmul %7, %8, %cst_9 {dimension_numbers = #tpu.dot_dimension_numbers<[1], [0], [0], [1], [0, 0, 1, 1], [], []>} : vector<16x32xbf16>, vector<32x12xbf16>, vector<16x12xf32> -> vector<16x12xf32>
    %10 = arith.addf %4, %9 : vector<16x12xf32>
    %c0_10 = arith.constant 0 : index
    %c0_11 = arith.constant 0 : index
    %11 = vector.load %arg6[%c0_10, %c0_11] : memref<1x12xf32, #tpu.memory_space<vmem>>, vector<1x12xf32>
    %12 = vector.broadcast %11 : vector<1x12xf32> to vector<16x12xf32>
    %13 = arith.addf %10, %12 : vector<16x12xf32>
    %c0_12 = arith.constant 0 : index
    %c0_13 = arith.constant 0 : index
    %14 = vector.load %arg7[%c0_12, %c0_13] : memref<16x12xf32, #tpu.memory_space<vmem>>, vector<16x12xf32>
    tpu.vector_store %arg7[%c0_12, %c0_13], %13 {strides = array<i32>} : memref<16x12xf32, #tpu.memory_space<vmem>>, vector<16x12xf32>,
    return
  }
  func.func @transform_0(%arg0: i32, %arg1: i32) -> (i32, i32) {
    %c0_i32 = arith.constant 0 : i32
    %c0_i32_0 = arith.constant 0 : i32
    return %arg0, %c0_i32 : i32, i32
  }
  func.func @transform_1(%arg0: i32, %arg1: i32) -> (i32, i32) {
    %c0_i32 = arith.constant 0 : i32
    %c0_i32_0 = arith.constant 0 : i32
    return %arg0, %c0_i32 : i32, i32
  }
  func.func @transform_2(%arg0: i32, %arg1: i32) -> (i32, i32) {
    %c0_i32 = arith.constant 0 : i32
    %c0_i32_0 = arith.constant 0 : i32
    return %c0_i32, %arg1 : i32, i32
  }
  func.func @transform_3(%arg0: i32, %arg1: i32) -> (i32, i32) {
    %c0_i32 = arith.constant 0 : i32
    %c0_i32_0 = arith.constant 0 : i32
    return %c0_i32, %arg1 : i32, i32
  }
  func.func @transform_4(%arg0: i32, %arg1: i32) -> (i32, i32) {
    %c0_i32 = arith.constant 0 : i32
    %c0_i32_0 = arith.constant 0 : i32
    return %c0_i32, %arg1 : i32, i32
  }
  func.func @transform_5(%arg0: i32, %arg1: i32) -> (i32, i32) {
    %c0_i32 = arith.constant 0 : i32
    return %arg0, %arg1 : i32, i32
  }
}

</mosaic_0001>

<llo_original>
// kernel: temporal_rnn_apply.5
$region0: #{temporal_rnn_apply.5}
  #allocation0 [shape = 'u32[]', space=smem, size = 0x4, offset = 0x4, fixed_abs, tag = 'smem constant byte address 0x4 - core index']
  #allocation1 [shape = 'u32[72,128]{1,0:T(1,128)}', space=vmem, size = 0x9000, scoped, tag = 'internal scratch']
  %s0 = inlined_call_operand.vmem [shape: f32[16,16], index: 0, kind: input, shape index: {}]
  %s1 = inlined_call_operand.hbm [shape: bf16[16,192], index: 1, kind: input, shape index: {}]
  %s2 = inlined_call_operand.vmem [shape: f32[1,192], index: 2, kind: input, shape index: {}]
  %s3 = inlined_call_operand.vmem [shape: bf16[16,192], index: 3, kind: output, shape index: {}]
  %s4 = sld [smem:[#allocation0]]
  $region26: #{temporal_rnn_apply.5} parent=0
    _
  %s6 = ssub.s32 1, %s4
  %s7 = scalar_select 0, %s6, %s4
  $region1: #{temporal_rnn_apply.5} parent=0
    #allocation2 [shape = 'u8[8192]{0}', space=vmem, size = 0x2000, scoped, tag = 'input window, operand 1, single buffered']
    #allocation3 [shape = 's32[1]{0}', space=sflag, size = 0x4, scoped, tag = 'scoped memory for temporal_rnn_apply.5']
    %8 = vsyncpa [#allocation3], 0
    // Predicated region
    $region2: #{temporal_rnn_apply.5} parent=1 // pred_check
      _
    $region3: #{temporal_rnn_apply.5} parent=1 // pred_check_branch
      %10 = sbr.rel (0) target = $region5
    $region4: #{temporal_rnn_apply.5} parent=1 // pred_region
      _
    $region5: #{temporal_rnn_apply.5} parent=1 // pred_fallthru
      _
    // Predicated region
    $region6: #{temporal_rnn_apply.5} parent=1 // pred_check
      _
    $region7: #{temporal_rnn_apply.5} parent=1 // pred_check_branch
      %12 = sbr.rel (0) target = $region9
    $region8: #{temporal_rnn_apply.5} parent=1 // pred_region
      %14 = vsyncadd [#allocation3], 0
      %s15 = sshll.u32 %s1, 4
      %s16 = int_to_ptr.hbm [resolvable:$true] %s15
      %s17 = sshll.u32 [#allocation2], 4
      %s18 = int_to_ptr.vmem [resolvable:$true] %s17
      %23 = dma.hbm_to_vmem [thread:$0]  %s16, 256, %s18, [#allocation3], 128, 128, 8
    $region9: #{temporal_rnn_apply.5} parent=1 // pred_fallthru
      _
    // Predicated region
    $region10: #{temporal_rnn_apply.5} parent=1 // pred_check
      _
    $region11: #{temporal_rnn_apply.5} parent=1 // pred_check_branch
      %25 = sbr.rel (0) target = $region13
    $region12: #{temporal_rnn_apply.5} parent=1 // pred_region
      _
    $region13: #{temporal_rnn_apply.5} parent=1 // pred_fallthru
      _
    // Predicated region
    $region14: #{temporal_rnn_apply.5} parent=1 // pred_check
      _
    $region15: #{temporal_rnn_apply.5} parent=1 // pred_check_branch
      %27 = sbr.rel (0) target = $region17
    $region16: #{temporal_rnn_apply.5} parent=1 // pred_region
      %29 = dma.done [#allocation3], 256
    $region17: #{temporal_rnn_apply.5} parent=1 // pred_fallthru
      _
    %v31 = vld [vmem:[%s0] sm:$0xff]
    %v32 = vld [vmem:[%s0 + $0x8] sm:$0xff]
    %v33 = vpack.c.bf16 %v32, %v31
    %v34 = vld [vmem:[#allocation2] sm:$0xff]
    %v35 = vld [vmem:[#allocation2 + $0x8] sm:$0xff]
    %v36 = vld [vmem:[%s2] sm:$0x3]
    %v38 = vperm.slane %v36, 0
    %v39 = vperm.slane %v36, 1
    %v44 = vunpack.c.l.b16 %v34
    %v45 = vunpack.c.h.b16 %v34
    %v46 = vunpack.c.l.b16 %v35
    %v47 = vunpack.c.h.b16 %v35
    %v48 = vpack.c.b16 %v46, %v44
    %v49 = vpack.c.b16 %v47, %v45
    %vm52 = vcmask 130048
    %v54 = vsel %vm52, %v33, 0
    %56 = vmatpush.bf16.msra.mxu0 0
    %57 = vmatpush.bf16.msra.mxu0 0
    %58 = vmatpush.bf16.msra.mxu0 0
    %59 = vmatpush.bf16.msra.mxu0 0
    %60 = vmatpush.bf16.msra.mxu0 0
    %61 = vmatpush.bf16.msra.mxu0 0
    %62 = vmatpush.bf16.msra.mxu0 0
    %63 = vmatpush.bf16.msra.mxu0 %v48
    %64 = vmatmul.bf16.gmra.mxu0 %v54
    %v65 = vpop.f32.mrf.mxu0
    %v66 = vadd.f32 %v38, %v65
    %v67 = vpop.f32.mrf.mxu0
    %v68 = vadd.f32 %v38, %v67
    %69 = vdwg.mxu0
    %70 = vmatpush.bf16.msra.mxu0 0
    %71 = vmatpush.bf16.msra.mxu0 0
    %72 = vmatpush.bf16.msra.mxu0 0
    %73 = vmatpush.bf16.msra.mxu0 0
    %74 = vmatpush.bf16.msra.mxu0 0
    %75 = vmatpush.bf16.msra.mxu0 0
    %76 = vmatpush.bf16.msra.mxu0 0
    %77 = vmatpush.bf16.msra.mxu0 %v49
    %78 = vmatmul.bf16.gmra.mxu0 %v54
    %v79 = vpop.f32.mrf.mxu0
    %v80 = vadd.f32 %v39, %v79
    %v81 = vpop.f32.mrf.mxu0
    %v82 = vadd.f32 %v39, %v81
    %83 = vdwg.mxu0
    %v84 = vpack.c.bf16 %v80, %v66
    %v85 = vpack.c.bf16 %v82, %v68
    %vm86 = vcmask 1043456
    %vm87 = vcmask 523268
    %vm88 = vmor %vm87, %vm86
    %89 = vst.msk [vmem:[%s3] sm:$0xff] %vm88, %v84
    %90 = vst.msk [vmem:[%s3 + $0x8] sm:$0xff] %vm88, %v85
    // Predicated region
    $region18: #{temporal_rnn_apply.5} parent=1 // pred_check
      _
    $region19: #{temporal_rnn_apply.5} parent=1 // pred_check_branch
      %92 = sbr.rel (0) target = $region21
    $region20: #{temporal_rnn_apply.5} parent=1 // pred_region
      _
    $region21: #{temporal_rnn_apply.5} parent=1 // pred_fallthru
      _
    // Predicated region
    $region22: #{temporal_rnn_apply.5} parent=1 // pred_check
      _
    $region23: #{temporal_rnn_apply.5} parent=1 // pred_check_branch
      %94 = sbr.rel (0) target = $region25
    $region24: #{temporal_rnn_apply.5} parent=1 // pred_region
      _
    $region25: #{temporal_rnn_apply.5} parent=1 // pred_fallthru
      _
    %95 = vsyncpa [#allocation3], 1

// kernel: temporal_rnn_apply.7
$region0: #{temporal_rnn_apply.7}
  #allocation0 [shape = 'u32[]', space=smem, size = 0x4, offset = 0x4, fixed_abs, tag = 'smem constant byte address 0x4 - core index']
  #allocation1 [shape = 'u32[72,128]{1,0:T(1,128)}', space=vmem, size = 0x9000, scoped, tag = 'internal scratch']
  %s0 = inlined_call_operand.vmem [shape: bf16[16,32], index: 0, kind: input, shape index: {}]
  %s1 = inlined_call_operand.vmem [shape: bf16[16,32], index: 1, kind: input, shape index: {}]
  %s2 = inlined_call_operand.vmem [shape: bf16[32,192], index: 2, kind: input, shape index: {}]
  %s3 = inlined_call_operand.hbm [shape: bf16[32,192], index: 3, kind: input, shape index: {}]
  %s4 = inlined_call_operand.vmem [shape: f32[1,192], index: 4, kind: input, shape index: {}]
  %s5 = inlined_call_operand.vmem [shape: bf16[16,192], index: 5, kind: output, shape index: {}]
  %s6 = sld [smem:[#allocation0]]
  $region34: #{temporal_rnn_apply.7} parent=0
    _
  %s8 = ssub.s32 1, %s6
  %s9 = scalar_select 0, %s8, %s6
  $region1: #{temporal_rnn_apply.7} parent=0
    #allocation2 [shape = 'u8[16384]{0}', space=vmem, size = 0x4000, scoped, tag = 'input window, operand 3, single buffered']
    #allocation3 [shape = 's32[1]{0}', space=sflag, size = 0x4, scoped, tag = 'scoped memory for temporal_rnn_apply.7']
    %10 = vsyncpa [#allocation3], 0
    // Predicated region
    $region2: #{temporal_rnn_apply.7} parent=1 // pred_check
      _
    $region3: #{temporal_rnn_apply.7} parent=1 // pred_check_branch
      %12 = sbr.rel (0) target = $region5
    $region4: #{temporal_rnn_apply.7} parent=1 // pred_region
      _
    $region5: #{temporal_rnn_apply.7} parent=1 // pred_fallthru
      _
    // Predicated region
    $region6: #{temporal_rnn_apply.7} parent=1 // pred_check
      _
    $region7: #{temporal_rnn_apply.7} parent=1 // pred_check_branch
      %14 = sbr.rel (0) target = $region9
    $region8: #{temporal_rnn_apply.7} parent=1 // pred_region
      _
    $region9: #{temporal_rnn_apply.7} parent=1 // pred_fallthru
      _
    // Predicated region
    $region10: #{temporal_rnn_apply.7} parent=1 // pred_check
      _
    $region11: #{temporal_rnn_apply.7} parent=1 // pred_check_branch
      %16 = sbr.rel (0) target = $region13
    $region12: #{temporal_rnn_apply.7} parent=1 // pred_region
      _
    $region13: #{temporal_rnn_apply.7} parent=1 // pred_fallthru
      _
    // Predicated region
    $region14: #{temporal_rnn_apply.7} parent=1 // pred_check
      _
    $region15: #{temporal_rnn_apply.7} parent=1 // pred_check_branch
      %18 = sbr.rel (0) target = $region17
    $region16: #{temporal_rnn_apply.7} parent=1 // pred_region
      %20 = vsyncadd [#allocation3], 0
      %s21 = sshll.u32 %s3, 4
      %s22 = int_to_ptr.hbm [resolvable:$true] %s21
      %s23 = sshll.u32 [#allocation2], 4
      %s24 = int_to_ptr.vmem [resolvable:$true] %s23
      %29 = dma.hbm_to_vmem [thread:$0]  %s22, 512, %s24, [#allocation3], 128, 128, 8
    $region17: #{temporal_rnn_apply.7} parent=1 // pred_fallthru
      _
    // Predicated region
    $region18: #{temporal_rnn_apply.7} parent=1 // pred_check
      _
    $region19: #{temporal_rnn_apply.7} parent=1 // pred_check_branch
      %31 = sbr.rel (0) target = $region21
    $region20: #{temporal_rnn_apply.7} parent=1 // pred_region
      _
    $region21: #{temporal_rnn_apply.7} parent=1 // pred_fallthru
      _
    // Predicated region
    $region22: #{temporal_rnn_apply.7} parent=1 // pred_check
      _
    $region23: #{temporal_rnn_apply.7} parent=1 // pred_check_branch
      %33 = sbr.rel (0) target = $region25
    $region24: #{temporal_rnn_apply.7} parent=1 // pred_region
      %35 = dma.done [#allocation3], 512
    $region25: #{temporal_rnn_apply.7} parent=1 // pred_fallthru
      _
    %v37 = vld [vmem:[%s0] sm:$0xf]
    %v38 = vld [vmem:[%s0 + $0x4] sm:$0xf]
    %v39 = vld [vmem:[%s2] sm:$0xff]
    %v40 = vld [vmem:[%s2 + $0x8] sm:$0xff]
    %v41 = vld [vmem:[%s2 + $0x10] sm:$0xff]
    %v42 = vld [vmem:[%s2 + $0x18] sm:$0xff]
    %v43 = vld [vmem:[%s1] sm:$0xf]
    %v44 = vld [vmem:[%s1 + $0x4] sm:$0xf]
    %v45 = vld [vmem:[#allocation2] sm:$0xff]
    %v46 = vld [vmem:[#allocation2 + $0x8] sm:$0xff]
    %v47 = vld [vmem:[#allocation2 + $0x10] sm:$0xff]
    %v48 = vld [vmem:[#allocation2 + $0x18] sm:$0xff]
    %v51 = vunpack.c.l.b16 %v43
    %v52 = vunpack.c.l.b16 %v44
    %v53 = vpack.c.b16 %v52, %v51
    %v58 = vunpack.c.l.b16 %v45
    %v59 = vunpack.c.h.b16 %v45
    %v60 = vunpack.c.l.b16 %v46
    %v61 = vunpack.c.h.b16 %v46
    %v62 = vunpack.c.l.b16 %v47
    %v63 = vunpack.c.h.b16 %v47
    %v64 = vunpack.c.l.b16 %v48
    %v65 = vunpack.c.h.b16 %v48
    %v66 = vpack.c.b16 %v60, %v58
    %v67 = vpack.c.b16 %v61, %v59
    %v68 = vpack.c.b16 %v64, %v62
    %v69 = vpack.c.b16 %v65, %v63
    %vm74 = vcmask 261120
    %v76 = vsel %vm74, %v53, 0
    %78 = vmatpush.bf16.msra.mxu0 0
    %79 = vmatpush.bf16.msra.mxu0 0
    %80 = vmatpush.bf16.msra.mxu0 0
    %81 = vmatpush.bf16.msra.mxu0 0
    %82 = vmatpush.bf16.msra.mxu0 0
    %83 = vmatpush.bf16.msra.mxu0 0
    %84 = vmatpush.bf16.msra.mxu0 %v68
    %85 = vmatpush.bf16.msra.mxu0 %v66
    %86 = vmatmul.bf16.gmra.mxu0 %v76
    %v87 = vpop.f32.mrf.mxu0
    %v88 = vadd.f32 0.0, %v87
    %v89 = vpop.f32.mrf.mxu0
    %v90 = vadd.f32 0.0, %v89
    %91 = vdwg.mxu0
    %92 = vmatpush.bf16.msra.mxu0 0
    %93 = vmatpush.bf16.msra.mxu0 0
    %94 = vmatpush.bf16.msra.mxu0 0
    %95 = vmatpush.bf16.msra.mxu0 0
    %96 = vmatpush.bf16.msra.mxu0 0
    %97 = vmatpush.bf16.msra.mxu0 0
    %98 = vmatpush.bf16.msra.mxu0 %v69
    %99 = vmatpush.bf16.msra.mxu0 %v67
    %100 = vmatmul.bf16.gmra.mxu0 %v76
    %v101 = vpop.f32.mrf.mxu0
    %v102 = vadd.f32 0.0, %v101
    %v103 = vpop.f32.mrf.mxu0
    %v104 = vadd.f32 0.0, %v103
    %105 = vdwg.mxu0
    %v108 = vunpack.c.l.b16 %v37
    %v109 = vunpack.c.l.b16 %v38
    %v110 = vpack.c.b16 %v109, %v108
    %v115 = vunpack.c.l.b16 %v39
    %v116 = vunpack.c.h.b16 %v39
    %v117 = vunpack.c.l.b16 %v40
    %v118 = vunpack.c.h.b16 %v40
    %v119 = vunpack.c.l.b16 %v41
    %v120 = vunpack.c.h.b16 %v41
    %v121 = vunpack.c.l.b16 %v42
    %v122 = vunpack.c.h.b16 %v42
    %v123 = vpack.c.b16 %v117, %v115
    %v124 = vpack.c.b16 %v118, %v116
    %v125 = vpack.c.b16 %v121, %v119
    %v126 = vpack.c.b16 %v122, %v120
    %v132 = vsel %vm74, %v110, 0
    %134 = vmatpush.bf16.msra.mxu0 0
    %135 = vmatpush.bf16.msra.mxu0 0
    %136 = vmatpush.bf16.msra.mxu0 0
    %137 = vmatpush.bf16.msra.mxu0 0
    %138 = vmatpush.bf16.msra.mxu0 0
    %139 = vmatpush.bf16.msra.mxu0 0
    %140 = vmatpush.bf16.msra.mxu0 %v125
    %141 = vmatpush.bf16.msra.mxu0 %v123
    %142 = vmatmul.bf16.gmra.mxu0 %v132
    %v143 = vpop.f32.mrf.mxu0
    %v144 = vadd.f32 %v88, %v143
    %v145 = vpop.f32.mrf.mxu0
    %v146 = vadd.f32 %v90, %v145
    %147 = vdwg.mxu0
    %148 = vmatpush.bf16.msra.mxu0 0
    %149 = vmatpush.bf16.msra.mxu0 0
    %150 = vmatpush.bf16.msra.mxu0 0
    %151 = vmatpush.bf16.msra.mxu0 0
    %152 = vmatpush.bf16.msra.mxu0 0
    %153 = vmatpush.bf16.msra.mxu0 0
    %154 = vmatpush.bf16.msra.mxu0 %v126
    %155 = vmatpush.bf16.msra.mxu0 %v124
    %156 = vmatmul.bf16.gmra.mxu0 %v132
    %v157 = vpop.f32.mrf.mxu0
    %v158 = vadd.f32 %v102, %v157
    %v159 = vpop.f32.mrf.mxu0
    %v160 = vadd.f32 %v104, %v159
    %161 = vdwg.mxu0
    %v162 = vld [vmem:[%s4] sm:$0x3]
    %v164 = vperm.slane %v162, 0
    %v165 = vperm.slane %v162, 1
    %v168 = vadd.f32 %v144, %v164
    %v169 = vadd.f32 %v158, %v165
    %v170 = vadd.f32 %v146, %v164
    %v171 = vadd.f32 %v160, %v165
    %v172 = vpack.c.bf16 %v169, %v168
    %v173 = vpack.c.bf16 %v171, %v170
    %vm174 = vcmask 1043456
    %vm175 = vcmask 523268
    %vm176 = vmor %vm175, %vm174
    %177 = vst.msk [vmem:[%s5] sm:$0xff] %vm176, %v172
    %178 = vst.msk [vmem:[%s5 + $0x8] sm:$0xff] %vm176, %v173
    // Predicated region
    $region26: #{temporal_rnn_apply.7} parent=1 // pred_check
      _
    $region27: #{temporal_rnn_apply.7} parent=1 // pred_check_branch
      %180 = sbr.rel (0) target = $region29
    $region28: #{temporal_rnn_apply.7} parent=1 // pred_region
      _
    $region29: #{temporal_rnn_apply.7} parent=1 // pred_fallthru
      _
    // Predicated region
    $region30: #{temporal_rnn_apply.7} parent=1 // pred_check
      _
    $region31: #{temporal_rnn_apply.7} parent=1 // pred_check_branch
      %182 = sbr.rel (0) target = $region33
    $region32: #{temporal_rnn_apply.7} parent=1 // pred_region
      _
    $region33: #{temporal_rnn_apply.7} parent=1 // pred_fallthru
      _
    %183 = vsyncpa [#allocation3], 1

// kernel: temporal_rnn_apply.9
$region0: #{temporal_rnn_apply.9}
  #allocation0 [shape = 'u32[]', space=smem, size = 0x4, offset = 0x4, fixed_abs, tag = 'smem constant byte address 0x4 - core index']
  #allocation1 [shape = 'u32[72,128]{1,0:T(1,128)}', space=vmem, size = 0x9000, scoped, tag = 'internal scratch']
  %s0 = inlined_call_operand.vmem [shape: bf16[16,32], index: 0, kind: input, shape index: {}]
  %s1 = inlined_call_operand.vmem [shape: bf16[16,32], index: 1, kind: input, shape index: {}]
  %s2 = inlined_call_operand.vmem [shape: bf16[32,12], index: 2, kind: input, shape index: {}]
  %s3 = inlined_call_operand.vmem [shape: bf16[32,12], index: 3, kind: input, shape index: {}]
  %s4 = inlined_call_operand.vmem [shape: f32[1,12], index: 4, kind: input, shape index: {}]
  %s5 = inlined_call_operand.vmem [shape: f32[16,12], index: 5, kind: output, shape index: {}]
  %s6 = sld [smem:[#allocation0]]
  $region30: #{temporal_rnn_apply.9} parent=0
    _
  %s8 = ssub.s32 1, %s6
  %s9 = scalar_select 0, %s8, %s6
  // Predicated region
  $region2: #{temporal_rnn_apply.9} parent=0 // pred_check
    _
  $region3: #{temporal_rnn_apply.9} parent=0 // pred_check_branch
    %11 = sbr.rel (0) target = $region5
  $region4: #{temporal_rnn_apply.9} parent=0 // pred_region
    _
  $region5: #{temporal_rnn_apply.9} parent=0 // pred_fallthru
    _
  // Predicated region
  $region6: #{temporal_rnn_apply.9} parent=0 // pred_check
    _
  $region7: #{temporal_rnn_apply.9} parent=0 // pred_check_branch
    %13 = sbr.rel (0) target = $region9
  $region8: #{temporal_rnn_apply.9} parent=0 // pred_region
    _
  $region9: #{temporal_rnn_apply.9} parent=0 // pred_fallthru
    _
  // Predicated region
  $region10: #{temporal_rnn_apply.9} parent=0 // pred_check
    _
  $region11: #{temporal_rnn_apply.9} parent=0 // pred_check_branch
    %15 = sbr.rel (0) target = $region13
  $region12: #{temporal_rnn_apply.9} parent=0 // pred_region
    _
  $region13: #{temporal_rnn_apply.9} parent=0 // pred_fallthru
    _
  // Predicated region
  $region14: #{temporal_rnn_apply.9} parent=0 // pred_check
    _
  $region15: #{temporal_rnn_apply.9} parent=0 // pred_check_branch
    %17 = sbr.rel (0) target = $region17
  $region16: #{temporal_rnn_apply.9} parent=0 // pred_region
    _
  $region17: #{temporal_rnn_apply.9} parent=0 // pred_fallthru
    _
  // Predicated region
  $region18: #{temporal_rnn_apply.9} parent=0 // pred_check
    _
  $region19: #{temporal_rnn_apply.9} parent=0 // pred_check_branch
    %19 = sbr.rel (0) target = $region21
  $region20: #{temporal_rnn_apply.9} parent=0 // pred_region
    _
  $region21: #{temporal_rnn_apply.9} parent=0 // pred_fallthru
    _
  %v21 = vld [vmem:[%s0] sm:$0xf]
  %v22 = vld [vmem:[%s0 + $0x4] sm:$0xf]
  %v23 = vunpack.c.l.bf16 %v21
  %v24 = vunpack.c.l.bf16 %v22
  %v25 = vmax.f32 %v23, 0.0
  %v26 = vmax.f32 %v24, 0.0
  %v27 = vpack.c.bf16 %v26, %v25
  %v28 = vld [vmem:[%s2] sm:$0xf]
  %v29 = vld [vmem:[%s2 + $0x4] sm:$0xf]
  %v30 = vld [vmem:[%s2 + $0x8] sm:$0xf]
  %v31 = vld [vmem:[%s2 + $0xc] sm:$0xf]
  %v32 = vld [vmem:[%s1] sm:$0xf]
  %v33 = vld [vmem:[%s1 + $0x4] sm:$0xf]
  %v34 = vunpack.c.l.bf16 %v32
  %v35 = vunpack.c.l.bf16 %v33
  %v36 = vmax.f32 %v34, 0.0
  %v37 = vmax.f32 %v35, 0.0
  %v38 = vpack.c.bf16 %v37, %v36
  %v39 = vld [vmem:[%s3] sm:$0xf]
  %v40 = vld [vmem:[%s3 + $0x4] sm:$0xf]
  %v41 = vld [vmem:[%s3 + $0x8] sm:$0xf]
  %v42 = vld [vmem:[%s3 + $0xc] sm:$0xf]
  %v47 = vunpack.c.l.b16 %v39
  %v48 = vunpack.c.l.b16 %v40
  %v49 = vunpack.c.l.b16 %v41
  %v50 = vunpack.c.l.b16 %v42
  %v51 = vpack.c.b16 %v48, %v47
  %v52 = vpack.c.b16 %v50, %v49
  %vm55 = vcmask 261120
  %v57 = vsel %vm55, %v38, 0
  %59 = vmatpush.bf16.msra.mxu0 0
  %60 = vmatpush.bf16.msra.mxu0 0
  %61 = vmatpush.bf16.msra.mxu0 0
  %62 = vmatpush.bf16.msra.mxu0 0
  %63 = vmatpush.bf16.msra.mxu0 0
  %64 = vmatpush.bf16.msra.mxu0 0
  %65 = vmatpush.bf16.msra.mxu0 %v52
  %66 = vmatpush.bf16.msra.mxu0 %v51
  %67 = vmatmul.bf16.gmra.mxu0 %v57
  %v68 = vpop.f32.mrf.mxu0
  %v69 = vadd.f32 0.0, %v68
  %v70 = vpop.f32.mrf.mxu0
  %v71 = vadd.f32 0.0, %v70
  %72 = vdwg.mxu0
  %v77 = vunpack.c.l.b16 %v28
  %v78 = vunpack.c.l.b16 %v29
  %v79 = vunpack.c.l.b16 %v30
  %v80 = vunpack.c.l.b16 %v31
  %v81 = vpack.c.b16 %v78, %v77
  %v82 = vpack.c.b16 %v80, %v79
  %v86 = vsel %vm55, %v27, 0
  %88 = vmatpush.bf16.msra.mxu0 0
  %89 = vmatpush.bf16.msra.mxu0 0
  %90 = vmatpush.bf16.msra.mxu0 0
  %91 = vmatpush.bf16.msra.mxu0 0
  %92 = vmatpush.bf16.msra.mxu0 0
  %93 = vmatpush.bf16.msra.mxu0 0
  %94 = vmatpush.bf16.msra.mxu0 %v82
  %95 = vmatpush.bf16.msra.mxu0 %v81
  %96 = vmatmul.bf16.gmra.mxu0 %v86
  %v97 = vpop.f32.mrf.mxu0
  %v98 = vadd.f32 %v69, %v97
  %v99 = vpop.f32.mrf.mxu0
  %v100 = vadd.f32 %v71, %v99
  %101 = vdwg.mxu0
  %v102 = vld [vmem:[%s4] sm:$0x1]
  %v104 = vperm.slane %v102, 0
  %v106 = vadd.f32 %v98, %v104
  %v107 = vadd.f32 %v100, %v104
  %vm108 = vcmask 97280
  %109 = vst.msk [vmem:[%s5] sm:$0xff] %vm108, %v106
  %110 = vst.msk [vmem:[%s5 + $0x8] sm:$0xff] %vm108, %v107
  // Predicated region
  $region22: #{temporal_rnn_apply.9} parent=0 // pred_check
    _
  $region23: #{temporal_rnn_apply.9} parent=0 // pred_check_branch
    %112 = sbr.rel (0) target = $region25
  $region24: #{temporal_rnn_apply.9} parent=0 // pred_region
    _
  $region25: #{temporal_rnn_apply.9} parent=0 // pred_fallthru
    _
  // Predicated region
  $region26: #{temporal_rnn_apply.9} parent=0 // pred_check
    _
  $region27: #{temporal_rnn_apply.9} parent=0 // pred_check_branch
    %114 = sbr.rel (0) target = $region29
  $region28: #{temporal_rnn_apply.9} parent=0 // pred_region
    _
  $region29: #{temporal_rnn_apply.9} parent=0 // pred_fallthru
    _

// kernel: temporal_rnn_apply.6
$region0: #{temporal_rnn_apply.6}
  #allocation0 [shape = 'u32[]', space=smem, size = 0x4, offset = 0x4, fixed_abs, tag = 'smem constant byte address 0x4 - core index']
  #allocation1 [shape = 'u32[72,128]{1,0:T(1,128)}', space=vmem, size = 0x9000, scoped, tag = 'internal scratch']
  #allocation2 [shape = 'bf16[2,32,96]{2,1,0:T(8,128)(2,1)}', space=vmem, size = 0x4000, scoped, tag = 'scratch operand']
  #allocation3 [shape = 'f32[2,1,96]{2,1,0:T(1,128)}', space=vmem, size = 0x400, scoped, tag = 'scratch operand']
  #allocation4 [shape = 's32[2]{0}', space=sflag, size = 0x8, scoped, tag = 'scratch operand']
  #allocation5 [shape = 'f32[2,2,32]{2,1,0:T(2,128)}', space=vmem, size = 0x800, scoped, tag = 'scratch operand']
  #allocation6 [shape = 's32[]', space=sflag, size = 0x4, offset = 0, fixed_abs, tag = 'sflag constant byte address 0x0 - dummy sync flag']
  #allocation7 [shape = 's32[]', space=sflag, size = 0x4, offset = 0, fixed_abs, tag = 'sflag constant byte address 0x0 - dummy sync flag']
  %s0 = inlined_call_operand.vmem [shape: bf16[8,2,192], index: 0, kind: input, shape index: {}, may-alias: {0,1}]
  %s1 = inlined_call_operand.vmem [shape: bf16[8,2,192], index: 1, kind: input, shape index: {}, may-alias: {0,1}]
  %s2 = inlined_call_operand.vmem [shape: bf16[2,32,96], index: 2, kind: input, shape index: {}]
  %s3 = inlined_call_operand.vmem [shape: f32[2,1,96], index: 3, kind: input, shape index: {}]
  %s4 = inlined_call_operand.vmem [shape: bf16[8,2,32], index: 4, kind: output, shape index: {0}]
  %s5 = inlined_call_operand.vmem [shape: bf16[8,2,32], index: 5, kind: output, shape index: {1}]
  %6 = xla_tuple %s4, %s5
  %s7 = sld [smem:[#allocation0]]
  $region79: #{temporal_rnn_apply.6} parent=0
    _
  %s9 = ssub.s32 1, %s7
  %s10 = scalar_select 0, %s9, %s7
  // Predicated region
  $region2: #{temporal_rnn_apply.6} parent=0 // pred_check
    _
  $region3: #{temporal_rnn_apply.6} parent=0 // pred_check_branch
    %12 = sbr.rel (0) target = $region5
  $region4: #{temporal_rnn_apply.6} parent=0 // pred_region
    _
  $region5: #{temporal_rnn_apply.6} parent=0 // pred_fallthru
    _
  // Predicated region
  $region6: #{temporal_rnn_apply.6} parent=0 // pred_check
    _
  $region7: #{temporal_rnn_apply.6} parent=0 // pred_check_branch
    %14 = sbr.rel (0) target = $region9
  $region8: #{temporal_rnn_apply.6} parent=0 // pred_region
    %s15 = ssub.s32 0, 0
    %s16 = smul.u32 8, %s15
    %p17 = scmp.lt.s32.totalorder %s16, 7
    %s18 = scalar_select %p17, %s16, 7
    %s19 = smul.addr %s18, 2
    %s20 = scalar_lea.vmem %s1, %s19
    %s21 = ssub.s32 0, 0
    %s22 = smul.u32 8, %s21
  $region9: #{temporal_rnn_apply.6} parent=0 // pred_fallthru
    _
  %s23 = ssub.s32 0, 0
  %s24 = smul.u32 8, %s23
  %p25 = scmp.lt.s32.totalorder %s24, 7
  %s26 = scalar_select %p25, %s24, 7
  %s27 = smul.addr %s26, 2
  %s28 = scalar_lea.vmem %s1, %s27
  %s29 = ssub.s32 0, 0
  %s30 = smul.u32 8, %s29
  %p31 = scmp.lt.s32.totalorder %s30, 7
  %s32 = scalar_select %p31, %s30, 7
  %s33 = scalar_lea.vmem %s5, %s32
  %s34 = ssub.s32 0, 0
  %s35 = smul.u32 8, %s34
  %p36 = scmp.lt.s32.totalorder %s35, 7
  %s37 = scalar_select %p36, %s35, 7
  %s38 = smul.addr %s37, 2
  %s39 = scalar_lea.vmem %s1, %s38
  %s40 = ssub.s32 0, 0
  %s41 = smul.u32 8, %s40
  %s42 = ssub.s32 0, 0
  %s43 = smul.u32 8, %s42
  %p44 = scmp.lt.s32.totalorder %s43, 7
  %s45 = scalar_select %p44, %s43, 7
  %s46 = scalar_lea.vmem %s5, %s45
  %s47 = ssub.s32 0, 0
  %s48 = smul.u32 8, %s47
  %p50 = scmp.eq.s32.totalorder 0, 0
  // Predicated region
  $region10: #{temporal_rnn_apply.6} parent=0 // pred_check
    %p51 = pneg %p50
  $region11: #{temporal_rnn_apply.6} parent=0 // pred_check_branch
    %53 = sbr.rel (%p51) target = $region13
  $region12: #{temporal_rnn_apply.6} parent=0 // pred_region
    // Predicated region
    $region14: #{temporal_rnn_apply.6} parent=12 // pred_check
      _
    $region15: #{temporal_rnn_apply.6} parent=12 // pred_check_branch
      %55 = sbr.rel (0) target = $region17
    $region16: #{temporal_rnn_apply.6} parent=12 // pred_region
      loop: start=0, step=1, limit=1
      $region18: #{temporal_rnn_apply.6} parent=16 // loop_pre_header
        _
      $region19: #{temporal_rnn_apply.6} parent=16 // loop_header
        %s57 = sphi 0, %s61
        %p58 = scmp.ge.s32.totalorder %s57, 1
        %s62 = sphi %s2, %s2
        %s63 = sphi [#allocation2], [#allocation2]
      $region20: #{temporal_rnn_apply.6} parent=16 // loop_header_branch
        %60 = sbr.rel (%p58) target = $region24
      $region21: #{temporal_rnn_apply.6} parent=16 // loop_body
        %v64 = vld [vmem:[%s62] sm:$0xff]
        %65 = vst [vmem:[%s63] sm:$0xff] %v64
        %v66 = vld [vmem:[%s62 + $0x8] sm:$0xff]
        %67 = vst [vmem:[%s63 + $0x8] sm:$0xff] %v66
        %v68 = vld [vmem:[%s62 + $0x10] sm:$0xff]
        %69 = vst [vmem:[%s63 + $0x10] sm:$0xff] %v68
        %v70 = vld [vmem:[%s62 + $0x18] sm:$0xff]
        %71 = vst [vmem:[%s63 + $0x18] sm:$0xff] %v70
      $region22: #{temporal_rnn_apply.6} parent=16 // loop_footer
        %s61 = sadd.s32 1, %s57
      $region23: #{temporal_rnn_apply.6} parent=16 // loop_footer_branch
        %56 = sbr.rel target = $region19
      $region24: #{temporal_rnn_apply.6} parent=16 // loop_exit
        _
    $region17: #{temporal_rnn_apply.6} parent=12 // pred_fallthru
      _
    // Predicated region
    $region25: #{temporal_rnn_apply.6} parent=12 // pred_check
      _
    $region26: #{temporal_rnn_apply.6} parent=12 // pred_check_branch
      %73 = sbr.rel target = $region28
    $region27: #{temporal_rnn_apply.6} parent=12 // pred_region
      _
    $region28: #{temporal_rnn_apply.6} parent=12 // pred_fallthru
      _
    // Predicated region
    $region29: #{temporal_rnn_apply.6} parent=12 // pred_check
      _
    $region30: #{temporal_rnn_apply.6} parent=12 // pred_check_branch
      %76 = sbr.rel (0) target = $region32
    $region31: #{temporal_rnn_apply.6} parent=12 // pred_region
      %77 = vsyncadd [#allocation4], 512
    $region32: #{temporal_rnn_apply.6} parent=12 // pred_fallthru
      _
    %s78 = scalar_lea.sflag [#allocation4], 1
    // Predicated region
    $region33: #{temporal_rnn_apply.6} parent=12 // pred_check
      _
    $region34: #{temporal_rnn_apply.6} parent=12 // pred_check_branch
      %80 = sbr.rel target = $region36
    $region35: #{temporal_rnn_apply.6} parent=12 // pred_region
      // Predicated region
      $region48: #{temporal_rnn_apply.6} parent=35 // pred_check
        _
      $region49: #{temporal_rnn_apply.6} parent=35 // pred_check_branch
        %96 = sbr.rel (0) target = $region51
      $region50: #{temporal_rnn_apply.6} parent=35 // pred_region
        %s98 = ssub.s32 4, 1
        loop: start=0, step=1, limit=1
        $region52: #{temporal_rnn_apply.6} parent=50 // loop_pre_header
          _
        $region53: #{temporal_rnn_apply.6} parent=50 // loop_header
          %s100 = sphi 0, %s104
          %p101 = scmp.ge.s32.totalorder %s100, 1
          %s105 = sphi %s3, %s3
          %s106 = sphi [#allocation3], [#allocation3]
        $region54: #{temporal_rnn_apply.6} parent=50 // loop_header_branch
          %103 = sbr.rel (%p101) target = $region58
        $region55: #{temporal_rnn_apply.6} parent=50 // loop_body
          %v107 = vld [vmem:[%s105] sm:%s98]
          %108 = vst [vmem:[%s106] sm:%s98] %v107
        $region56: #{temporal_rnn_apply.6} parent=50 // loop_footer
          %s104 = sadd.s32 1, %s100
        $region57: #{temporal_rnn_apply.6} parent=50 // loop_footer_branch
          %99 = sbr.rel target = $region53
        $region58: #{temporal_rnn_apply.6} parent=50 // loop_exit
          _
      $region51: #{temporal_rnn_apply.6} parent=35 // pred_fallthru
        _
    $region36: #{temporal_rnn_apply.6} parent=12 // pred_fallthru
      _
    // Predicated region
    $region37: #{temporal_rnn_apply.6} parent=12 // pred_check
      _
    $region38: #{temporal_rnn_apply.6} parent=12 // pred_check_branch
      %82 = sbr.rel (0) target = $region40
    $region39: #{temporal_rnn_apply.6} parent=12 // pred_region
      %s84 = ssub.s32 4, 1
      loop: start=0, step=1, limit=1
      $region41: #{temporal_rnn_apply.6} parent=39 // loop_pre_header
        _
      $region42: #{temporal_rnn_apply.6} parent=39 // loop_header
        %s86 = sphi 0, %s90
        %p87 = scmp.ge.s32.totalorder %s86, 1
        %s91 = sphi %s3, %s3
        %s92 = sphi [#allocation3], [#allocation3]
      $region43: #{temporal_rnn_apply.6} parent=39 // loop_header_branch
        %89 = sbr.rel (%p87) target = $region47
      $region44: #{temporal_rnn_apply.6} parent=39 // loop_body
        %v93 = vld [vmem:[%s91] sm:%s84]
        %94 = vst [vmem:[%s92] sm:%s84] %v93
      $region45: #{temporal_rnn_apply.6} parent=39 // loop_footer
        %s90 = sadd.s32 1, %s86
      $region46: #{temporal_rnn_apply.6} parent=39 // loop_footer_branch
        %85 = sbr.rel target = $region42
      $region47: #{temporal_rnn_apply.6} parent=39 // loop_exit
        _
    $region40: #{temporal_rnn_apply.6} parent=12 // pred_fallthru
      _
    // Predicated region
    $region59: #{temporal_rnn_apply.6} parent=12 // pred_check
      _
    $region60: #{temporal_rnn_apply.6} parent=12 // pred_check_branch
      %111 = sbr.rel (0) target = $region62
    $region61: #{temporal_rnn_apply.6} parent=12 // pred_region
      %112 = vsyncadd %s78, 32
    $region62: #{temporal_rnn_apply.6} parent=12 // pred_fallthru
      _
    %s113 = smul.u32 4, 2
    %s114 = smul.u32 %s113, 4
    %s115 = smul.u32 %s114, 1
    %s116 = sshll.u32 %s115, 4
    %117 = dma.done [#allocation4], %s116
    %s118 = smul.u32 2, 1
    %s119 = smul.u32 %s118, 1
    %s120 = sshll.u32 %s119, 4
    %121 = dma.done %s78, %s120
    %vm122 = vcmask 254976
    %123 = vst.msk [vmem:[#allocation5] sm:$0x3] %vm122, 0.0
    %124 = vst.msk [vmem:[#allocation5 + $0x2] sm:$0x3] %vm122, 0.0
  $region13: #{temporal_rnn_apply.6} parent=0 // pred_fallthru
    _
  %v125 = vld [vmem:[#allocation2] sm:$0xf]
  %v126 = vld [vmem:[#allocation2 + $0x4] sm:$0xf]
  %v127 = vld [vmem:[#allocation2 + $0x8] sm:$0xf]
  %v128 = vld [vmem:[#allocation2 + $0xc] sm:$0xf]
  %s129 = scalar_lea.vmem [#allocation2], 16
  %v130 = vld [vmem:[%s129] sm:$0xf]
  %v131 = vld [vmem:[%s129 + $0x4] sm:$0xf]
  %v132 = vld [vmem:[%s129 + $0x8] sm:$0xf]
  %v133 = vld [vmem:[%s129 + $0xc] sm:$0xf]
  %v134 = vld [vmem:[#allocation3] sm:$0x1]
  %s135 = scalar_lea.vmem [#allocation3], 1
  %v136 = vld [vmem:[%s135] sm:$0x1]
  %v137 = vld [vmem:[%s0] sm:$0x3]
  %v138 = vunpack.c.l.bf16 %v137
  %s139 = scalar_lea.vmem %s39, 14
  %v140 = vld [vmem:[%s139] sm:$0x3]
  %v141 = vunpack.c.l.bf16 %v140
  %v142 = vld [vmem:[#allocation5] sm:$0x3]
  %v143 = vpack.c.bf16 %v142, %v142
  %v145 = vperm.slane %v134, 0
  %v151 = vunpack.c.l.b16 %v125
  %v152 = vunpack.c.l.b16 %v126
  %v153 = vunpack.c.l.b16 %v127
  %v154 = vunpack.c.l.b16 %v128
  %v155 = vpack.c.b16 %v152, %v151
  %v156 = vpack.c.b16 %v154, %v153
  %vm159 = vcmask 261120
  %v161 = vsel %vm159, %v143, 0
  %163 = vmatpush.bf16.msra.mxu0 0
  %164 = vmatpush.bf16.msra.mxu0 0
  %165 = vmatpush.bf16.msra.mxu0 0
  %166 = vmatpush.bf16.msra.mxu0 0
  %167 = vmatpush.bf16.msra.mxu0 0
  %168 = vmatpush.bf16.msra.mxu0 0
  %169 = vmatpush.bf16.msra.mxu0 %v156
  %170 = vmatpush.bf16.msra.mxu0 %v155
  %171 = vmatmul.bf16.gmra.mxu0 %v161
  %v172 = vpop.f32.mrf.mxu0
  %v173 = vadd.f32 %v145, %v172
  %v174 = vpop.f32.mrf.mxu0
  %175 = vdwg.mxu0
  %v176 = vadd.f32 %v138, %v173
  %v177 = vxor.u32 %v176, 2147483648
  %v178 = vmul.f32 %v177, 1.442695
  %v179 = vpow.pop %v178
  %v180 = vadd.f32 %v179, 1.0
  %v181 = vrcp.pop %v180
  %v182 = vmul.f32 %v180, %v181
  %v183 = vsub.f32 1.0, %v182
  %v184 = vmul.f32 %v181, %v183
  %v185 = vadd.f32 %v181, %v184
  %vm186 = vweird.f32 %v180
  %vm187 = vweird.f32 %v181
  %vm188 = vmor %vm186, %vm187
  %v189 = vsel %vm188, %v181, %v185
  %v190 = vand.u32 2147483647, %v180
  %vm191 = vcmp.eq.f32.partialorder %v190, 8.507059e+37
  %v192 = vand.u32 %v180, 2147483648
  %v193 = vor.u32 1.1754944e-38, %v192
  %v194 = vsel %vm191, %v193, %v189
  %v195 = vmul.f32 1.0, %v194
  %197 = vrot.lane.b32.xlu0 %v173, 64
  %v198 = vpop.permute.xlu0 %197
  %v200 = vmul.f32 %v195, %v198
  %202 = vrot.lane.b32.xlu0 %v200, 64
  %v203 = vpop.permute.xlu0 %202
  %v205 = vadd.f32 %v138, %v203
  %v206 = vtanh.pop %v205
  %v207 = vsub.f32 1.0, %v195
  %209 = vrot.lane.b32.xlu0 %v206, 96
  %v210 = vpop.permute.xlu0 %209
  %v212 = vmul.f32 %v207, %v210
  %214 = vrot.lane.b32.xlu0 %v142, 32
  %v215 = vpop.permute.xlu0 %214
  %v217 = vmul.f32 %v195, %v215
  %v218 = vadd.f32 %v212, %v217
  %s219 = scalar_lea.vmem [#allocation5], 2
  %v220 = vld [vmem:[%s219] sm:$0x3]
  %v221 = vpack.c.bf16 %v220, %v220
  %v223 = vperm.slane %v136, 0
  %v229 = vunpack.c.l.b16 %v130
  %v230 = vunpack.c.l.b16 %v131
  %v231 = vunpack.c.l.b16 %v132
  %v232 = vunpack.c.l.b16 %v133
  %v233 = vpack.c.b16 %v230, %v229
  %v234 = vpack.c.b16 %v232, %v231
  %v238 = vsel %vm159, %v221, 0
  %240 = vmatpush.bf16.msra.mxu0 0
  %241 = vmatpush.bf16.msra.mxu0 0
  %242 = vmatpush.bf16.msra.mxu0 0
  %243 = vmatpush.bf16.msra.mxu0 0
  %244 = vmatpush.bf16.msra.mxu0 0
  %245 = vmatpush.bf16.msra.mxu0 0
  %246 = vmatpush.bf16.msra.mxu0 %v234
  %247 = vmatpush.bf16.msra.mxu0 %v233
  %248 = vmatmul.bf16.gmra.mxu0 %v238
  %v249 = vpop.f32.mrf.mxu0
  %v250 = vadd.f32 %v223, %v249
  %v251 = vpop.f32.mrf.mxu0
  %252 = vdwg.mxu0
  %254 = vrot.lane.b32.xlu0 %v250, 96
  %v255 = vpop.permute.xlu0 %254
  %v257 = vadd.f32 %v141, %v255
  %v258 = vxor.u32 %v257, 2147483648
  %v259 = vmul.f32 %v258, 1.442695
  %v260 = vpow.pop %v259
  %v261 = vadd.f32 %v260, 1.0
  %v262 = vrcp.pop %v261
  %v263 = vmul.f32 %v261, %v262
  %v264 = vsub.f32 1.0, %v263
  %v265 = vmul.f32 %v262, %v264
  %v266 = vadd.f32 %v262, %v265
  %vm267 = vweird.f32 %v261
  %vm268 = vweird.f32 %v262
  %vm269 = vmor %vm267, %vm268
  %v270 = vsel %vm269, %v262, %v266
  %v271 = vand.u32 2147483647, %v261
  %vm272 = vcmp.eq.f32.partialorder %v271, 8.507059e+37
  %v273 = vand.u32 %v261, 2147483648
  %v274 = vor.u32 1.1754944e-38, %v273
  %v275 = vsel %vm272, %v274, %v270
  %v276 = vmul.f32 1.0, %v275
  %v278 = vrot.slane %v141, 2
  %v280 = vadd.f32 %v278, %v255
  %v281 = vxor.u32 %v280, 2147483648
  %v282 = vmul.f32 %v281, 1.442695
  %v283 = vpow.pop %v282
  %v284 = vadd.f32 %v283, 1.0
  %v285 = vrcp.pop %v284
  %v286 = vmul.f32 %v284, %v285
  %v287 = vsub.f32 1.0, %v286
  %v288 = vmul.f32 %v285, %v287
  %v289 = vadd.f32 %v285, %v288
  %vm290 = vweird.f32 %v284
  %vm291 = vweird.f32 %v285
  %vm292 = vmor %vm290, %vm291
  %v293 = vsel %vm292, %v285, %v289
  %v294 = vand.u32 2147483647, %v284
  %vm295 = vcmp.eq.f32.partialorder %v294, 8.507059e+37
  %v296 = vand.u32 %v284, 2147483648
  %v297 = vor.u32 1.1754944e-38, %v296
  %v298 = vsel %vm295, %v297, %v293
  %v299 = vmul.f32 1.0, %v298
  %300 = vrot.lane.b32.xlu0 %v250, 32
  %v301 = vpop.permute.xlu0 %300
  %v303 = vmul.f32 %v276, %v301
  %304 = vrot.lane.b32.xlu0 %v141, 96
  %v305 = vpop.permute.xlu0 %304
  %v306 = vrot.slane %v305, 2
  %309 = vrot.lane.b32.xlu0 %v303, 32
  %v310 = vpop.permute.xlu0 %309
  %v312 = vadd.f32 %v306, %v310
  %v313 = vtanh.pop %v312
  %v314 = vsub.f32 1.0, %v299
  %v315 = vmul.f32 %v314, %v313
  %v316 = vmul.f32 %v299, %v220
  %v317 = vadd.f32 %v315, %v316
  %319 = vst [vmem:[#allocation1] ss:$4 sm:$0xff] %v218
  %v320 = vld.sshfl [vmem:[#allocation1] sm:$0xff pattern:$0x73625140]
  %321 = vrot.lane.b32.xlu0 %v320, 96
  %v322 = vpop.permute.xlu0 %321
  %vm324 = vcmask 254976
  %325 = vst.msk [vmem:[#allocation5] sm:$0x3] %vm324, %v322
  %326 = vst.msk [vmem:[%s219] sm:$0x3] %vm324, %v317
  %v327 = vpack.c.bf16 %v218, %v218
  %v329 = vrot.slane %v327, 3
  %vm330 = vcmask 1040384
  %v333 = vsel %vm330, %v327, %v329
  %335 = vrot.lane.b32.xlu0 %v333, 96
  %v336 = vpop.permute.xlu0 %335
  %vm338 = vcmask 253952
  %339 = vst.msk [vmem:[%s4] sm:$0x1] %vm338, %v336
  %v340 = vpack.c.bf16 %v317, %v317
  %s341 = scalar_lea.vmem %s46, 7
  %342 = vst.msk [vmem:[%s341] sm:$0x1] %vm338, %v340
  %s343 = scalar_lea.vmem %s0, 2
  %v344 = vld [vmem:[%s343] sm:$0x3]
  %v345 = vunpack.c.l.bf16 %v344
  %s346 = scalar_lea.vmem %s39, 12
  %v347 = vld [vmem:[%s346] sm:$0x3]
  %v348 = vunpack.c.l.bf16 %v347
  %v349 = vld [vmem:[#allocation5] sm:$0x3]
  %v350 = vpack.c.bf16 %v349, %v349
  %v352 = vsel %vm159, %v350, 0
  %354 = vmatpush.bf16.msra.mxu0 0
  %355 = vmatpush.bf16.msra.mxu0 0
  %356 = vmatpush.bf16.msra.mxu0 0
  %357 = vmatpush.bf16.msra.mxu0 0
  %358 = vmatpush.bf16.msra.mxu0 0
  %359 = vmatpush.bf16.msra.mxu0 0
  %360 = vmatpush.bf16.msra.mxu0 %v156
  %361 = vmatpush.bf16.msra.mxu0 %v155
  %362 = vmatmul.bf16.gmra.mxu0 %v352
  %v363 = vpop.f32.mrf.mxu0
  %v364 = vadd.f32 %v145, %v363
  %v365 = vpop.f32.mrf.mxu0
  %366 = vdwg.mxu0
  %v367 = vadd.f32 %v345, %v364
  %v368 = vxor.u32 %v367, 2147483648
  %v369 = vmul.f32 %v368, 1.442695
  %v370 = vpow.pop %v369
  %v371 = vadd.f32 %v370, 1.0
  %v372 = vrcp.pop %v371
  %v373 = vmul.f32 %v371, %v372
  %v374 = vsub.f32 1.0, %v373
  %v375 = vmul.f32 %v372, %v374
  %v376 = vadd.f32 %v372, %v375
  %vm377 = vweird.f32 %v371
  %vm378 = vweird.f32 %v372
  %vm379 = vmor %vm377, %vm378
  %v380 = vsel %vm379, %v372, %v376
  %v381 = vand.u32 2147483647, %v371
  %vm382 = vcmp.eq.f32.partialorder %v381, 8.507059e+37
  %v383 = vand.u32 %v371, 2147483648
  %v384 = vor.u32 1.1754944e-38, %v383
  %v385 = vsel %vm382, %v384, %v380
  %v386 = vmul.f32 1.0, %v385
  %388 = vrot.lane.b32.xlu0 %v364, 64
  %v389 = vpop.permute.xlu0 %388
  %v391 = vmul.f32 %v386, %v389
  %393 = vrot.lane.b32.xlu0 %v391, 64
  %v394 = vpop.permute.xlu0 %393
  %v396 = vadd.f32 %v345, %v394
  %v397 = vtanh.pop %v396
  %v398 = vsub.f32 1.0, %v386
  %400 = vrot.lane.b32.xlu0 %v397, 96
  %v401 = vpop.permute.xlu0 %400
  %v403 = vmul.f32 %v398, %v401
  %405 = vrot.lane.b32.xlu0 %v349, 32
  %v406 = vpop.permute.xlu0 %405
  %v408 = vmul.f32 %v386, %v406
  %v409 = vadd.f32 %v403, %v408
  %v410 = vld [vmem:[%s219] sm:$0x3]
  %v411 = vpack.c.bf16 %v410, %v410
  %v413 = vsel %vm159, %v411, 0
  %415 = vmatpush.bf16.msra.mxu0 0
  %416 = vmatpush.bf16.msra.mxu0 0
  %417 = vmatpush.bf16.msra.mxu0 0
  %418 = vmatpush.bf16.msra.mxu0 0
  %419 = vmatpush.bf16.msra.mxu0 0
  %420 = vmatpush.bf16.msra.mxu0 0
  %421 = vmatpush.bf16.msra.mxu0 %v234
  %422 = vmatpush.bf16.msra.mxu0 %v233
  %423 = vmatmul.bf16.gmra.mxu0 %v413
  %v424 = vpop.f32.mrf.mxu0
  %v425 = vadd.f32 %v223, %v424
  %v426 = vpop.f32.mrf.mxu0
  %427 = vdwg.mxu0
  %429 = vrot.lane.b32.xlu0 %v425, 96
  %v430 = vpop.permute.xlu0 %429
  %v432 = vadd.f32 %v348, %v430
  %v433 = vxor.u32 %v432, 2147483648
  %v434 = vmul.f32 %v433, 1.442695
  %v435 = vpow.pop %v434
  %v436 = vadd.f32 %v435, 1.0
  %v437 = vrcp.pop %v436
  %v438 = vmul.f32 %v436, %v437
  %v439 = vsub.f32 1.0, %v438
  %v440 = vmul.f32 %v437, %v439
  %v441 = vadd.f32 %v437, %v440
  %vm442 = vweird.f32 %v436
  %vm443 = vweird.f32 %v437
  %vm444 = vmor %vm442, %vm443
  %v445 = vsel %vm444, %v437, %v441
  %v446 = vand.u32 2147483647, %v436
  %vm447 = vcmp.eq.f32.partialorder %v446, 8.507059e+37
  %v448 = vand.u32 %v436, 2147483648
  %v449 = vor.u32 1.1754944e-38, %v448
  %v450 = vsel %vm447, %v449, %v445
  %v451 = vmul.f32 1.0, %v450
  %v453 = vrot.slane %v348, 2
  %v455 = vadd.f32 %v453, %v430
  %v456 = vxor.u32 %v455, 2147483648
  %v457 = vmul.f32 %v456, 1.442695
  %v458 = vpow.pop %v457
  %v459 = vadd.f32 %v458, 1.0
  %v460 = vrcp.pop %v459
  %v461 = vmul.f32 %v459, %v460
  %v462 = vsub.f32 1.0, %v461
  %v463 = vmul.f32 %v460, %v462
  %v464 = vadd.f32 %v460, %v463
  %vm465 = vweird.f32 %v459
  %vm466 = vweird.f32 %v460
  %vm467 = vmor %vm465, %vm466
  %v468 = vsel %vm467, %v460, %v464
  %v469 = vand.u32 2147483647, %v459
  %vm470 = vcmp.eq.f32.partialorder %v469, 8.507059e+37
  %v471 = vand.u32 %v459, 2147483648
  %v472 = vor.u32 1.1754944e-38, %v471
  %v473 = vsel %vm470, %v472, %v468
  %v474 = vmul.f32 1.0, %v473
  %475 = vrot.lane.b32.xlu0 %v425, 32
  %v476 = vpop.permute.xlu0 %475
  %v478 = vmul.f32 %v451, %v476
  %479 = vrot.lane.b32.xlu0 %v348, 96
  %v480 = vpop.permute.xlu0 %479
  %v481 = vrot.slane %v480, 2
  %484 = vrot.lane.b32.xlu0 %v478, 32
  %v485 = vpop.permute.xlu0 %484
  %v487 = vadd.f32 %v481, %v485
  %v488 = vtanh.pop %v487
  %v489 = vsub.f32 1.0, %v474
  %v490 = vmul.f32 %v489, %v488
  %v491 = vmul.f32 %v474, %v410
  %v492 = vadd.f32 %v490, %v491
  %494 = vst [vmem:[#allocation1] ss:$4 sm:$0xff] %v409
  %v495 = vld.sshfl [vmem:[#allocation1] sm:$0xff pattern:$0x73625140]
  %496 = vrot.lane.b32.xlu0 %v495, 96
  %v497 = vpop.permute.xlu0 %496
  %499 = vst.msk [vmem:[#allocation5] sm:$0x3] %vm324, %v497
  %500 = vst.msk [vmem:[%s219] sm:$0x3] %vm324, %v492
  %v501 = vpack.c.bf16 %v409, %v409
  %v503 = vrot.slane %v501, 3
  %v506 = vsel %vm330, %v501, %v503
  %508 = vrot.lane.b32.xlu0 %v506, 96
  %v509 = vpop.permute.xlu0 %508
  %s511 = scalar_lea.vmem %s4, 1
  %512 = vst.msk [vmem:[%s511] sm:$0x1] %vm338, %v509
  %v513 = vpack.c.bf16 %v492, %v492
  %s514 = scalar_lea.vmem %s46, 6
  %515 = vst.msk [vmem:[%s514] sm:$0x1] %vm338, %v513
  %s516 = scalar_lea.vmem %s0, 4
  %v517 = vld [vmem:[%s516] sm:$0x3]
  %v518 = vunpack.c.l.bf16 %v517
  %s519 = scalar_lea.vmem %s39, 10
  %v520 = vld [vmem:[%s519] sm:$0x3]
  %v521 = vunpack.c.l.bf16 %v520
  %v522 = vld [vmem:[#allocation5] sm:$0x3]
  %v523 = vpack.c.bf16 %v522, %v522
  %v525 = vsel %vm159, %v523, 0
  %527 = vmatpush.bf16.msra.mxu0 0
  %528 = vmatpush.bf16.msra.mxu0 0
  %529 = vmatpush.bf16.msra.mxu0 0
  %530 = vmatpush.bf16.msra.mxu0 0
  %531 = vmatpush.bf16.msra.mxu0 0
  %532 = vmatpush.bf16.msra.mxu0 0
  %533 = vmatpush.bf16.msra.mxu0 %v156
  %534 = vmatpush.bf16.msra.mxu0 %v155
  %535 = vmatmul.bf16.gmra.mxu0 %v525
  %v536 = vpop.f32.mrf.mxu0
  %v537 = vadd.f32 %v145, %v536
  %v538 = vpop.f32.mrf.mxu0
  %539 = vdwg.mxu0
  %v540 = vadd.f32 %v518, %v537
  %v541 = vxor.u32 %v540, 2147483648
  %v542 = vmul.f32 %v541, 1.442695
  %v543 = vpow.pop %v542
  %v544 = vadd.f32 %v543, 1.0
  %v545 = vrcp.pop %v544
  %v546 = vmul.f32 %v544, %v545
  %v547 = vsub.f32 1.0, %v546
  %v548 = vmul.f32 %v545, %v547
  %v549 = vadd.f32 %v545, %v548
  %vm550 = vweird.f32 %v544
  %vm551 = vweird.f32 %v545
  %vm552 = vmor %vm550, %vm551
  %v553 = vsel %vm552, %v545, %v549
  %v554 = vand.u32 2147483647, %v544
  %vm555 = vcmp.eq.f32.partialorder %v554, 8.507059e+37
  %v556 = vand.u32 %v544, 2147483648
  %v557 = vor.u32 1.1754944e-38, %v556
  %v558 = vsel %vm555, %v557, %v553
  %v559 = vmul.f32 1.0, %v558
  %561 = vrot.lane.b32.xlu0 %v537, 64
  %v562 = vpop.permute.xlu0 %561
  %v564 = vmul.f32 %v559, %v562
  %566 = vrot.lane.b32.xlu0 %v564, 64
  %v567 = vpop.permute.xlu0 %566
  %v569 = vadd.f32 %v518, %v567
  %v570 = vtanh.pop %v569
  %v571 = vsub.f32 1.0, %v559
  %573 = vrot.lane.b32.xlu0 %v570, 96
  %v574 = vpop.permute.xlu0 %573
  %v576 = vmul.f32 %v571, %v574
  %578 = vrot.lane.b32.xlu0 %v522, 32
  %v579 = vpop.permute.xlu0 %578
  %v581 = vmul.f32 %v559, %v579
  %v582 = vadd.f32 %v576, %v581
  %v583 = vld [vmem:[%s219] sm:$0x3]
  %v584 = vpack.c.bf16 %v583, %v583
  %v586 = vsel %vm159, %v584, 0
  %588 = vmatpush.bf16.msra.mxu0 0
  %589 = vmatpush.bf16.msra.mxu0 0
  %590 = vmatpush.bf16.msra.mxu0 0
  %591 = vmatpush.bf16.msra.mxu0 0
  %592 = vmatpush.bf16.msra.mxu0 0
  %593 = vmatpush.bf16.msra.mxu0 0
  %594 = vmatpush.bf16.msra.mxu0 %v234
  %595 = vmatpush.bf16.msra.mxu0 %v233
  %596 = vmatmul.bf16.gmra.mxu0 %v586
  %v597 = vpop.f32.mrf.mxu0
  %v598 = vadd.f32 %v223, %v597
  %v599 = vpop.f32.mrf.mxu0
  %600 = vdwg.mxu0
  %602 = vrot.lane.b32.xlu0 %v598, 96
  %v603 = vpop.permute.xlu0 %602
  %v605 = vadd.f32 %v521, %v603
  %v606 = vxor.u32 %v605, 2147483648
  %v607 = vmul.f32 %v606, 1.442695
  %v608 = vpow.pop %v607
  %v609 = vadd.f32 %v608, 1.0
  %v610 = vrcp.pop %v609
  %v611 = vmul.f32 %v609, %v610
  %v612 = vsub.f32 1.0, %v611
  %v613 = vmul.f32 %v610, %v612
  %v614 = vadd.f32 %v610, %v613
  %vm615 = vweird.f32 %v609
  %vm616 = vweird.f32 %v610
  %vm617 = vmor %vm615, %vm616
  %v618 = vsel %vm617, %v610, %v614
  %v619 = vand.u32 2147483647, %v609
  %vm620 = vcmp.eq.f32.partialorder %v619, 8.507059e+37
  %v621 = vand.u32 %v609, 2147483648
  %v622 = vor.u32 1.1754944e-38, %v621
  %v623 = vsel %vm620, %v622, %v618
  %v624 = vmul.f32 1.0, %v623
  %v626 = vrot.slane %v521, 2
  %v628 = vadd.f32 %v626, %v603
  %v629 = vxor.u32 %v628, 2147483648
  %v630 = vmul.f32 %v629, 1.442695
  %v631 = vpow.pop %v630
  %v632 = vadd.f32 %v631, 1.0
  %v633 = vrcp.pop %v632
  %v634 = vmul.f32 %v632, %v633
  %v635 = vsub.f32 1.0, %v634
  %v636 = vmul.f32 %v633, %v635
  %v637 = vadd.f32 %v633, %v636
  %vm638 = vweird.f32 %v632
  %vm639 = vweird.f32 %v633
  %vm640 = vmor %vm638, %vm639
  %v641 = vsel %vm640, %v633, %v637
  %v642 = vand.u32 2147483647, %v632
  %vm643 = vcmp.eq.f32.partialorder %v642, 8.507059e+37
  %v644 = vand.u32 %v632, 2147483648
  %v645 = vor.u32 1.1754944e-38, %v644
  %v646 = vsel %vm643, %v645, %v641
  %v647 = vmul.f32 1.0, %v646
  %648 = vrot.lane.b32.xlu0 %v598, 32
  %v649 = vpop.permute.xlu0 %648
  %v651 = vmul.f32 %v624, %v649
  %652 = vrot.lane.b32.xlu0 %v521, 96
  %v653 = vpop.permute.xlu0 %652
  %v654 = vrot.slane %v653, 2
  %657 = vrot.lane.b32.xlu0 %v651, 32
  %v658 = vpop.permute.xlu0 %657
  %v660 = vadd.f32 %v654, %v658
  %v661 = vtanh.pop %v660
  %v662 = vsub.f32 1.0, %v647
  %v663 = vmul.f32 %v662, %v661
  %v664 = vmul.f32 %v647, %v583
  %v665 = vadd.f32 %v663, %v664
  %667 = vst [vmem:[#allocation1] ss:$4 sm:$0xff] %v582
  %v668 = vld.sshfl [vmem:[#allocation1] sm:$0xff pattern:$0x73625140]
  %669 = vrot.lane.b32.xlu0 %v668, 96
  %v670 = vpop.permute.xlu0 %669
  %672 = vst.msk [vmem:[#allocation5] sm:$0x3] %vm324, %v670
  %673 = vst.msk [vmem:[%s219] sm:$0x3] %vm324, %v665
  %v674 = vpack.c.bf16 %v582, %v582
  %v676 = vrot.slane %v674, 3
  %v679 = vsel %vm330, %v674, %v676
  %681 = vrot.lane.b32.xlu0 %v679, 96
  %v682 = vpop.permute.xlu0 %681
  %s684 = scalar_lea.vmem %s4, 2
  %685 = vst.msk [vmem:[%s684] sm:$0x1] %vm338, %v682
  %v686 = vpack.c.bf16 %v665, %v665
  %s687 = scalar_lea.vmem %s46, 5
  %688 = vst.msk [vmem:[%s687] sm:$0x1] %vm338, %v686
  %s689 = scalar_lea.vmem %s0, 6
  %v690 = vld [vmem:[%s689] sm:$0x3]
  %v691 = vunpack.c.l.bf16 %v690
  %s692 = scalar_lea.vmem %s39, 8
  %v693 = vld [vmem:[%s692] sm:$0x3]
  %v694 = vunpack.c.l.bf16 %v693
  %v695 = vld [vmem:[#allocation5] sm:$0x3]
  %v696 = vpack.c.bf16 %v695, %v695
  %v698 = vsel %vm159, %v696, 0
  %700 = vmatpush.bf16.msra.mxu0 0
  %701 = vmatpush.bf16.msra.mxu0 0
  %702 = vmatpush.bf16.msra.mxu0 0
  %703 = vmatpush.bf16.msra.mxu0 0
  %704 = vmatpush.bf16.msra.mxu0 0
  %705 = vmatpush.bf16.msra.mxu0 0
  %706 = vmatpush.bf16.msra.mxu0 %v156
  %707 = vmatpush.bf16.msra.mxu0 %v155
  %708 = vmatmul.bf16.gmra.mxu0 %v698
  %v709 = vpop.f32.mrf.mxu0
  %v710 = vadd.f32 %v145, %v709
  %v711 = vpop.f32.mrf.mxu0
  %712 = vdwg.mxu0
  %v713 = vadd.f32 %v691, %v710
  %v714 = vxor.u32 %v713, 2147483648
  %v715 = vmul.f32 %v714, 1.442695
  %v716 = vpow.pop %v715
  %v717 = vadd.f32 %v716, 1.0
  %v718 = vrcp.pop %v717
  %v719 = vmul.f32 %v717, %v718
  %v720 = vsub.f32 1.0, %v719
  %v721 = vmul.f32 %v718, %v720
  %v722 = vadd.f32 %v718, %v721
  %vm723 = vweird.f32 %v717
  %vm724 = vweird.f32 %v718
  %vm725 = vmor %vm723, %vm724
  %v726 = vsel %vm725, %v718, %v722
  %v727 = vand.u32 2147483647, %v717
  %vm728 = vcmp.eq.f32.partialorder %v727, 8.507059e+37
  %v729 = vand.u32 %v717, 2147483648
  %v730 = vor.u32 1.1754944e-38, %v729
  %v731 = vsel %vm728, %v730, %v726
  %v732 = vmul.f32 1.0, %v731
  %734 = vrot.lane.b32.xlu0 %v710, 64
  %v735 = vpop.permute.xlu0 %734
  %v737 = vmul.f32 %v732, %v735
  %739 = vrot.lane.b32.xlu0 %v737, 64
  %v740 = vpop.permute.xlu0 %739
  %v742 = vadd.f32 %v691, %v740
  %v743 = vtanh.pop %v742
  %v744 = vsub.f32 1.0, %v732
  %746 = vrot.lane.b32.xlu0 %v743, 96
  %v747 = vpop.permute.xlu0 %746
  %v749 = vmul.f32 %v744, %v747
  %751 = vrot.lane.b32.xlu0 %v695, 32
  %v752 = vpop.permute.xlu0 %751
  %v754 = vmul.f32 %v732, %v752
  %v755 = vadd.f32 %v749, %v754
  %v756 = vld [vmem:[%s219] sm:$0x3]
  %v757 = vpack.c.bf16 %v756, %v756
  %v759 = vsel %vm159, %v757, 0
  %761 = vmatpush.bf16.msra.mxu0 0
  %762 = vmatpush.bf16.msra.mxu0 0
  %763 = vmatpush.bf16.msra.mxu0 0
  %764 = vmatpush.bf16.msra.mxu0 0
  %765 = vmatpush.bf16.msra.mxu0 0
  %766 = vmatpush.bf16.msra.mxu0 0
  %767 = vmatpush.bf16.msra.mxu0 %v234
  %768 = vmatpush.bf16.msra.mxu0 %v233
  %769 = vmatmul.bf16.gmra.mxu0 %v759
  %v770 = vpop.f32.mrf.mxu0
  %v771 = vadd.f32 %v223, %v770
  %v772 = vpop.f32.mrf.mxu0
  %773 = vdwg.mxu0
  %775 = vrot.lane.b32.xlu0 %v771, 96
  %v776 = vpop.permute.xlu0 %775
  %v778 = vadd.f32 %v694, %v776
  %v779 = vxor.u32 %v778, 2147483648
  %v780 = vmul.f32 %v779, 1.442695
  %v781 = vpow.pop %v780
  %v782 = vadd.f32 %v781, 1.0
  %v783 = vrcp.pop %v782
  %v784 = vmul.f32 %v782, %v783
  %v785 = vsub.f32 1.0, %v784
  %v786 = vmul.f32 %v783, %v785
  %v787 = vadd.f32 %v783, %v786
  %vm788 = vweird.f32 %v782
  %vm789 = vweird.f32 %v783
  %vm790 = vmor %vm788, %vm789
  %v791 = vsel %vm790, %v783, %v787
  %v792 = vand.u32 2147483647, %v782
  %vm793 = vcmp.eq.f32.partialorder %v792, 8.507059e+37
  %v794 = vand.u32 %v782, 2147483648
  %v795 = vor.u32 1.1754944e-38, %v794
  %v796 = vsel %vm793, %v795, %v791
  %v797 = vmul.f32 1.0, %v796
  %v799 = vrot.slane %v694, 2
  %v801 = vadd.f32 %v799, %v776
  %v802 = vxor.u32 %v801, 2147483648
  %v803 = vmul.f32 %v802, 1.442695
  %v804 = vpow.pop %v803
  %v805 = vadd.f32 %v804, 1.0
  %v806 = vrcp.pop %v805
  %v807 = vmul.f32 %v805, %v806
  %v808 = vsub.f32 1.0, %v807
  %v809 = vmul.f32 %v806, %v808
  %v810 = vadd.f32 %v806, %v809
  %vm811 = vweird.f32 %v805
  %vm812 = vweird.f32 %v806
  %vm813 = vmor %vm811, %vm812
  %v814 = vsel %vm813, %v806, %v810
  %v815 = vand.u32 2147483647, %v805
  %vm816 = vcmp.eq.f32.partialorder %v815, 8.507059e+37
  %v817 = vand.u32 %v805, 2147483648
  %v818 = vor.u32 1.1754944e-38, %v817
  %v819 = vsel %vm816, %v818, %v814
  %v820 = vmul.f32 1.0, %v819
  %821 = vrot.lane.b32.xlu0 %v771, 32
  %v822 = vpop.permute.xlu0 %821
  %v824 = vmul.f32 %v797, %v822
  %825 = vrot.lane.b32.xlu0 %v694, 96
  %v826 = vpop.permute.xlu0 %825
  %v827 = vrot.slane %v826, 2
  %830 = vrot.lane.b32.xlu0 %v824, 32
  %v831 = vpop.permute.xlu0 %830
  %v833 = vadd.f32 %v827, %v831
  %v834 = vtanh.pop %v833
  %v835 = vsub.f32 1.0, %v820
  %v836 = vmul.f32 %v835, %v834
  %v837 = vmul.f32 %v820, %v756
  %v838 = vadd.f32 %v836, %v837
  %840 = vst [vmem:[#allocation1] ss:$4 sm:$0xff] %v755
  %v841 = vld.sshfl [vmem:[#allocation1] sm:$0xff pattern:$0x73625140]
  %842 = vrot.lane.b32.xlu0 %v841, 96
  %v843 = vpop.permute.xlu0 %842
  %845 = vst.msk [vmem:[#allocation5] sm:$0x3] %vm324, %v843
  %846 = vst.msk [vmem:[%s219] sm:$0x3] %vm324, %v838
  %v847 = vpack.c.bf16 %v755, %v755
  %v849 = vrot.slane %v847, 3
  %v852 = vsel %vm330, %v847, %v849
  %854 = vrot.lane.b32.xlu0 %v852, 96
  %v855 = vpop.permute.xlu0 %854
  %s857 = scalar_lea.vmem %s4, 3
  %858 = vst.msk [vmem:[%s857] sm:$0x1] %vm338, %v855
  %v859 = vpack.c.bf16 %v838, %v838
  %s860 = scalar_lea.vmem %s46, 4
  %861 = vst.msk [vmem:[%s860] sm:$0x1] %vm338, %v859
  %s862 = scalar_lea.vmem %s0, 8
  %v863 = vld [vmem:[%s862] sm:$0x3]
  %v864 = vunpack.c.l.bf16 %v863
  %s865 = scalar_lea.vmem %s39, 6
  %v866 = vld [vmem:[%s865] sm:$0x3]
  %v867 = vunpack.c.l.bf16 %v866
  %v868 = vld [vmem:[#allocation5] sm:$0x3]
  %v869 = vpack.c.bf16 %v868, %v868
  %v871 = vsel %vm159, %v869, 0
  %873 = vmatpush.bf16.msra.mxu0 0
  %874 = vmatpush.bf16.msra.mxu0 0
  %875 = vmatpush.bf16.msra.mxu0 0
  %876 = vmatpush.bf16.msra.mxu0 0
  %877 = vmatpush.bf16.msra.mxu0 0
  %878 = vmatpush.bf16.msra.mxu0 0
  %879 = vmatpush.bf16.msra.mxu0 %v156
  %880 = vmatpush.bf16.msra.mxu0 %v155
  %881 = vmatmul.bf16.gmra.mxu0 %v871
  %v882 = vpop.f32.mrf.mxu0
  %v883 = vadd.f32 %v145, %v882
  %v884 = vpop.f32.mrf.mxu0
  %885 = vdwg.mxu0
  %v886 = vadd.f32 %v864, %v883
  %v887 = vxor.u32 %v886, 2147483648
  %v888 = vmul.f32 %v887, 1.442695
  %v889 = vpow.pop %v888
  %v890 = vadd.f32 %v889, 1.0
  %v891 = vrcp.pop %v890
  %v892 = vmul.f32 %v890, %v891
  %v893 = vsub.f32 1.0, %v892
  %v894 = vmul.f32 %v891, %v893
  %v895 = vadd.f32 %v891, %v894
  %vm896 = vweird.f32 %v890
  %vm897 = vweird.f32 %v891
  %vm898 = vmor %vm896, %vm897
  %v899 = vsel %vm898, %v891, %v895
  %v900 = vand.u32 2147483647, %v890
  %vm901 = vcmp.eq.f32.partialorder %v900, 8.507059e+37
  %v902 = vand.u32 %v890, 2147483648
  %v903 = vor.u32 1.1754944e-38, %v902
  %v904 = vsel %vm901, %v903, %v899
  %v905 = vmul.f32 1.0, %v904
  %907 = vrot.lane.b32.xlu0 %v883, 64
  %v908 = vpop.permute.xlu0 %907
  %v910 = vmul.f32 %v905, %v908
  %912 = vrot.lane.b32.xlu0 %v910, 64
  %v913 = vpop.permute.xlu0 %912
  %v915 = vadd.f32 %v864, %v913
  %v916 = vtanh.pop %v915
  %v917 = vsub.f32 1.0, %v905
  %919 = vrot.lane.b32.xlu0 %v916, 96
  %v920 = vpop.permute.xlu0 %919
  %v922 = vmul.f32 %v917, %v920
  %924 = vrot.lane.b32.xlu0 %v868, 32
  %v925 = vpop.permute.xlu0 %924
  %v927 = vmul.f32 %v905, %v925
  %v928 = vadd.f32 %v922, %v927
  %v929 = vld [vmem:[%s219] sm:$0x3]
  %v930 = vpack.c.bf16 %v929, %v929
  %v932 = vsel %vm159, %v930, 0
  %934 = vmatpush.bf16.msra.mxu0 0
  %935 = vmatpush.bf16.msra.mxu0 0
  %936 = vmatpush.bf16.msra.mxu0 0
  %937 = vmatpush.bf16.msra.mxu0 0
  %938 = vmatpush.bf16.msra.mxu0 0
  %939 = vmatpush.bf16.msra.mxu0 0
  %940 = vmatpush.bf16.msra.mxu0 %v234
  %941 = vmatpush.bf16.msra.mxu0 %v233
  %942 = vmatmul.bf16.gmra.mxu0 %v932
  %v943 = vpop.f32.mrf.mxu0
  %v944 = vadd.f32 %v223, %v943
  %v945 = vpop.f32.mrf.mxu0
  %946 = vdwg.mxu0
  %948 = vrot.lane.b32.xlu0 %v944, 96
  %v949 = vpop.permute.xlu0 %948
  %v951 = vadd.f32 %v867, %v949
  %v952 = vxor.u32 %v951, 2147483648
  %v953 = vmul.f32 %v952, 1.442695
  %v954 = vpow.pop %v953
  %v955 = vadd.f32 %v954, 1.0
  %v956 = vrcp.pop %v955
  %v957 = vmul.f32 %v955, %v956
  %v958 = vsub.f32 1.0, %v957
  %v959 = vmul.f32 %v956, %v958
  %v960 = vadd.f32 %v956, %v959
  %vm961 = vweird.f32 %v955
  %vm962 = vweird.f32 %v956
  %vm963 = vmor %vm961, %vm962
  %v964 = vsel %vm963, %v956, %v960
  %v965 = vand.u32 2147483647, %v955
  %vm966 = vcmp.eq.f32.partialorder %v965, 8.507059e+37
  %v967 = vand.u32 %v955, 2147483648
  %v968 = vor.u32 1.1754944e-38, %v967
  %v969 = vsel %vm966, %v968, %v964
  %v970 = vmul.f32 1.0, %v969
  %v972 = vrot.slane %v867, 2
  %v974 = vadd.f32 %v972, %v949
  %v975 = vxor.u32 %v974, 2147483648
  %v976 = vmul.f32 %v975, 1.442695
  %v977 = vpow.pop %v976
  %v978 = vadd.f32 %v977, 1.0
  %v979 = vrcp.pop %v978
  %v980 = vmul.f32 %v978, %v979
  %v981 = vsub.f32 1.0, %v980
  %v982 = vmul.f32 %v979, %v981
  %v983 = vadd.f32 %v979, %v982
  %vm984 = vweird.f32 %v978
  %vm985 = vweird.f32 %v979
  %vm986 = vmor %vm984, %vm985
  %v987 = vsel %vm986, %v979, %v983
  %v988 = vand.u32 2147483647, %v978
  %vm989 = vcmp.eq.f32.partialorder %v988, 8.507059e+37
  %v990 = vand.u32 %v978, 2147483648
  %v991 = vor.u32 1.1754944e-38, %v990
  %v992 = vsel %vm989, %v991, %v987
  %v993 = vmul.f32 1.0, %v992
  %994 = vrot.lane.b32.xlu0 %v944, 32
  %v995 = vpop.permute.xlu0 %994
  %v997 = vmul.f32 %v970, %v995
  %998 = vrot.lane.b32.xlu0 %v867, 96
  %v999 = vpop.permute.xlu0 %998
  %v1000 = vrot.slane %v999, 2
  %1003 = vrot.lane.b32.xlu0 %v997, 32
  %v1004 = vpop.permute.xlu0 %1003
  %v1006 = vadd.f32 %v1000, %v1004
  %v1007 = vtanh.pop %v1006
  %v1008 = vsub.f32 1.0, %v993
  %v1009 = vmul.f32 %v1008, %v1007
  %v1010 = vmul.f32 %v993, %v929
  %v1011 = vadd.f32 %v1009, %v1010
  %1013 = vst [vmem:[#allocation1] ss:$4 sm:$0xff] %v928
  %v1014 = vld.sshfl [vmem:[#allocation1] sm:$0xff pattern:$0x73625140]
  %1015 = vrot.lane.b32.xlu0 %v1014, 96
  %v1016 = vpop.permute.xlu0 %1015
  %1018 = vst.msk [vmem:[#allocation5] sm:$0x3] %vm324, %v1016
  %1019 = vst.msk [vmem:[%s219] sm:$0x3] %vm324, %v1011
  %v1020 = vpack.c.bf16 %v928, %v928
  %v1022 = vrot.slane %v1020, 3
  %v1025 = vsel %vm330, %v1020, %v1022
  %1027 = vrot.lane.b32.xlu0 %v1025, 96
  %v1028 = vpop.permute.xlu0 %1027
  %s1030 = scalar_lea.vmem %s4, 4
  %1031 = vst.msk [vmem:[%s1030] sm:$0x1] %vm338, %v1028
  %v1032 = vpack.c.bf16 %v1011, %v1011
  %s1033 = scalar_lea.vmem %s46, 3
  %1034 = vst.msk [vmem:[%s1033] sm:$0x1] %vm338, %v1032
  %s1035 = scalar_lea.vmem %s0, 10
  %v1036 = vld [vmem:[%s1035] sm:$0x3]
  %v1037 = vunpack.c.l.bf16 %v1036
  %s1038 = scalar_lea.vmem %s39, 4
  %v1039 = vld [vmem:[%s1038] sm:$0x3]
  %v1040 = vunpack.c.l.bf16 %v1039
  %v1041 = vld [vmem:[#allocation5] sm:$0x3]
  %v1042 = vpack.c.bf16 %v1041, %v1041
  %v1044 = vsel %vm159, %v1042, 0
  %1046 = vmatpush.bf16.msra.mxu0 0
  %1047 = vmatpush.bf16.msra.mxu0 0
  %1048 = vmatpush.bf16.msra.mxu0 0
  %1049 = vmatpush.bf16.msra.mxu0 0
  %1050 = vmatpush.bf16.msra.mxu0 0
  %1051 = vmatpush.bf16.msra.mxu0 0
  %1052 = vmatpush.bf16.msra.mxu0 %v156
  %1053 = vmatpush.bf16.msra.mxu0 %v155
  %1054 = vmatmul.bf16.gmra.mxu0 %v1044
  %v1055 = vpop.f32.mrf.mxu0
  %v1056 = vadd.f32 %v145, %v1055
  %v1057 = vpop.f32.mrf.mxu0
  %1058 = vdwg.mxu0
  %v1059 = vadd.f32 %v1037, %v1056
  %v1060 = vxor.u32 %v1059, 2147483648
  %v1061 = vmul.f32 %v1060, 1.442695
  %v1062 = vpow.pop %v1061
  %v1063 = vadd.f32 %v1062, 1.0
  %v1064 = vrcp.pop %v1063
  %v1065 = vmul.f32 %v1063, %v1064
  %v1066 = vsub.f32 1.0, %v1065
  %v1067 = vmul.f32 %v1064, %v1066
  %v1068 = vadd.f32 %v1064, %v1067
  %vm1069 = vweird.f32 %v1063
  %vm1070 = vweird.f32 %v1064
  %vm1071 = vmor %vm1069, %vm1070
  %v1072 = vsel %vm1071, %v1064, %v1068
  %v1073 = vand.u32 2147483647, %v1063
  %vm1074 = vcmp.eq.f32.partialorder %v1073, 8.507059e+37
  %v1075 = vand.u32 %v1063, 2147483648
  %v1076 = vor.u32 1.1754944e-38, %v1075
  %v1077 = vsel %vm1074, %v1076, %v1072
  %v1078 = vmul.f32 1.0, %v1077
  %1080 = vrot.lane.b32.xlu0 %v1056, 64
  %v1081 = vpop.permute.xlu0 %1080
  %v1083 = vmul.f32 %v1078, %v1081
  %1085 = vrot.lane.b32.xlu0 %v1083, 64
  %v1086 = vpop.permute.xlu0 %1085
  %v1088 = vadd.f32 %v1037, %v1086
  %v1089 = vtanh.pop %v1088
  %v1090 = vsub.f32 1.0, %v1078
  %1092 = vrot.lane.b32.xlu0 %v1089, 96
  %v1093 = vpop.permute.xlu0 %1092
  %v1095 = vmul.f32 %v1090, %v1093
  %1097 = vrot.lane.b32.xlu0 %v1041, 32
  %v1098 = vpop.permute.xlu0 %1097
  %v1100 = vmul.f32 %v1078, %v1098
  %v1101 = vadd.f32 %v1095, %v1100
  %v1102 = vld [vmem:[%s219] sm:$0x3]
  %v1103 = vpack.c.bf16 %v1102, %v1102
  %v1105 = vsel %vm159, %v1103, 0
  %1107 = vmatpush.bf16.msra.mxu0 0
  %1108 = vmatpush.bf16.msra.mxu0 0
  %1109 = vmatpush.bf16.msra.mxu0 0
  %1110 = vmatpush.bf16.msra.mxu0 0
  %1111 = vmatpush.bf16.msra.mxu0 0
  %1112 = vmatpush.bf16.msra.mxu0 0
  %1113 = vmatpush.bf16.msra.mxu0 %v234
  %1114 = vmatpush.bf16.msra.mxu0 %v233
  %1115 = vmatmul.bf16.gmra.mxu0 %v1105
  %v1116 = vpop.f32.mrf.mxu0
  %v1117 = vadd.f32 %v223, %v1116
  %v1118 = vpop.f32.mrf.mxu0
  %1119 = vdwg.mxu0
  %1121 = vrot.lane.b32.xlu0 %v1117, 96
  %v1122 = vpop.permute.xlu0 %1121
  %v1124 = vadd.f32 %v1040, %v1122
  %v1125 = vxor.u32 %v1124, 2147483648
  %v1126 = vmul.f32 %v1125, 1.442695
  %v1127 = vpow.pop %v1126
  %v1128 = vadd.f32 %v1127, 1.0
  %v1129 = vrcp.pop %v1128
  %v1130 = vmul.f32 %v1128, %v1129
  %v1131 = vsub.f32 1.0, %v1130
  %v1132 = vmul.f32 %v1129, %v1131
  %v1133 = vadd.f32 %v1129, %v1132
  %vm1134 = vweird.f32 %v1128
  %vm1135 = vweird.f32 %v1129
  %vm1136 = vmor %vm1134, %vm1135
  %v1137 = vsel %vm1136, %v1129, %v1133
  %v1138 = vand.u32 2147483647, %v1128
  %vm1139 = vcmp.eq.f32.partialorder %v1138, 8.507059e+37
  %v1140 = vand.u32 %v1128, 2147483648
  %v1141 = vor.u32 1.1754944e-38, %v1140
  %v1142 = vsel %vm1139, %v1141, %v1137
  %v1143 = vmul.f32 1.0, %v1142
  %v1145 = vrot.slane %v1040, 2
  %v1147 = vadd.f32 %v1145, %v1122
  %v1148 = vxor.u32 %v1147, 2147483648
  %v1149 = vmul.f32 %v1148, 1.442695
  %v1150 = vpow.pop %v1149
  %v1151 = vadd.f32 %v1150, 1.0
  %v1152 = vrcp.pop %v1151
  %v1153 = vmul.f32 %v1151, %v1152
  %v1154 = vsub.f32 1.0, %v1153
  %v1155 = vmul.f32 %v1152, %v1154
  %v1156 = vadd.f32 %v1152, %v1155
  %vm1157 = vweird.f32 %v1151
  %vm1158 = vweird.f32 %v1152
  %vm1159 = vmor %vm1157, %vm1158
  %v1160 = vsel %vm1159, %v1152, %v1156
  %v1161 = vand.u32 2147483647, %v1151
  %vm1162 = vcmp.eq.f32.partialorder %v1161, 8.507059e+37
  %v1163 = vand.u32 %v1151, 2147483648
  %v1164 = vor.u32 1.1754944e-38, %v1163
  %v1165 = vsel %vm1162, %v1164, %v1160
  %v1166 = vmul.f32 1.0, %v1165
  %1167 = vrot.lane.b32.xlu0 %v1117, 32
  %v1168 = vpop.permute.xlu0 %1167
  %v1170 = vmul.f32 %v1143, %v1168
  %1171 = vrot.lane.b32.xlu0 %v1040, 96
  %v1172 = vpop.permute.xlu0 %1171
  %v1173 = vrot.slane %v1172, 2
  %1176 = vrot.lane.b32.xlu0 %v1170, 32
  %v1177 = vpop.permute.xlu0 %1176
  %v1179 = vadd.f32 %v1173, %v1177
  %v1180 = vtanh.pop %v1179
  %v1181 = vsub.f32 1.0, %v1166
  %v1182 = vmul.f32 %v1181, %v1180
  %v1183 = vmul.f32 %v1166, %v1102
  %v1184 = vadd.f32 %v1182, %v1183
  %1186 = vst [vmem:[#allocation1] ss:$4 sm:$0xff] %v1101
  %v1187 = vld.sshfl [vmem:[#allocation1] sm:$0xff pattern:$0x73625140]
  %1188 = vrot.lane.b32.xlu0 %v1187, 96
  %v1189 = vpop.permute.xlu0 %1188
  %1191 = vst.msk [vmem:[#allocation5] sm:$0x3] %vm324, %v1189
  %1192 = vst.msk [vmem:[%s219] sm:$0x3] %vm324, %v1184
  %v1193 = vpack.c.bf16 %v1101, %v1101
  %v1195 = vrot.slane %v1193, 3
  %v1198 = vsel %vm330, %v1193, %v1195
  %1200 = vrot.lane.b32.xlu0 %v1198, 96
  %v1201 = vpop.permute.xlu0 %1200
  %s1203 = scalar_lea.vmem %s4, 5
  %1204 = vst.msk [vmem:[%s1203] sm:$0x1] %vm338, %v1201
  %v1205 = vpack.c.bf16 %v1184, %v1184
  %s1206 = scalar_lea.vmem %s46, 2
  %1207 = vst.msk [vmem:[%s1206] sm:$0x1] %vm338, %v1205
  %s1208 = scalar_lea.vmem %s0, 12
  %v1209 = vld [vmem:[%s1208] sm:$0x3]
  %v1210 = vunpack.c.l.bf16 %v1209
  %s1211 = scalar_lea.vmem %s39, 2
  %v1212 = vld [vmem:[%s1211] sm:$0x3]
  %v1213 = vunpack.c.l.bf16 %v1212
  %v1214 = vld [vmem:[#allocation5] sm:$0x3]
  %v1215 = vpack.c.bf16 %v1214, %v1214
  %v1217 = vsel %vm159, %v1215, 0
  %1219 = vmatpush.bf16.msra.mxu0 0
  %1220 = vmatpush.bf16.msra.mxu0 0
  %1221 = vmatpush.bf16.msra.mxu0 0
  %1222 = vmatpush.bf16.msra.mxu0 0
  %1223 = vmatpush.bf16.msra.mxu0 0
  %1224 = vmatpush.bf16.msra.mxu0 0
  %1225 = vmatpush.bf16.msra.mxu0 %v156
  %1226 = vmatpush.bf16.msra.mxu0 %v155
  %1227 = vmatmul.bf16.gmra.mxu0 %v1217
  %v1228 = vpop.f32.mrf.mxu0
  %v1229 = vadd.f32 %v145, %v1228
  %v1230 = vpop.f32.mrf.mxu0
  %1231 = vdwg.mxu0
  %v1232 = vadd.f32 %v1210, %v1229
  %v1233 = vxor.u32 %v1232, 2147483648
  %v1234 = vmul.f32 %v1233, 1.442695
  %v1235 = vpow.pop %v1234
  %v1236 = vadd.f32 %v1235, 1.0
  %v1237 = vrcp.pop %v1236
  %v1238 = vmul.f32 %v1236, %v1237
  %v1239 = vsub.f32 1.0, %v1238
  %v1240 = vmul.f32 %v1237, %v1239
  %v1241 = vadd.f32 %v1237, %v1240
  %vm1242 = vweird.f32 %v1236
  %vm1243 = vweird.f32 %v1237
  %vm1244 = vmor %vm1242, %vm1243
  %v1245 = vsel %vm1244, %v1237, %v1241
  %v1246 = vand.u32 2147483647, %v1236
  %vm1247 = vcmp.eq.f32.partialorder %v1246, 8.507059e+37
  %v1248 = vand.u32 %v1236, 2147483648
  %v1249 = vor.u32 1.1754944e-38, %v1248
  %v1250 = vsel %vm1247, %v1249, %v1245
  %v1251 = vmul.f32 1.0, %v1250
  %1253 = vrot.lane.b32.xlu0 %v1229, 64
  %v1254 = vpop.permute.xlu0 %1253
  %v1256 = vmul.f32 %v1251, %v1254
  %1258 = vrot.lane.b32.xlu0 %v1256, 64
  %v1259 = vpop.permute.xlu0 %1258
  %v1261 = vadd.f32 %v1210, %v1259
  %v1262 = vtanh.pop %v1261
  %v1263 = vsub.f32 1.0, %v1251
  %1265 = vrot.lane.b32.xlu0 %v1262, 96
  %v1266 = vpop.permute.xlu0 %1265
  %v1268 = vmul.f32 %v1263, %v1266
  %1270 = vrot.lane.b32.xlu0 %v1214, 32
  %v1271 = vpop.permute.xlu0 %1270
  %v1273 = vmul.f32 %v1251, %v1271
  %v1274 = vadd.f32 %v1268, %v1273
  %v1275 = vld [vmem:[%s219] sm:$0x3]
  %v1276 = vpack.c.bf16 %v1275, %v1275
  %v1278 = vsel %vm159, %v1276, 0
  %1280 = vmatpush.bf16.msra.mxu0 0
  %1281 = vmatpush.bf16.msra.mxu0 0
  %1282 = vmatpush.bf16.msra.mxu0 0
  %1283 = vmatpush.bf16.msra.mxu0 0
  %1284 = vmatpush.bf16.msra.mxu0 0
  %1285 = vmatpush.bf16.msra.mxu0 0
  %1286 = vmatpush.bf16.msra.mxu0 %v234
  %1287 = vmatpush.bf16.msra.mxu0 %v233
  %1288 = vmatmul.bf16.gmra.mxu0 %v1278
  %v1289 = vpop.f32.mrf.mxu0
  %v1290 = vadd.f32 %v223, %v1289
  %v1291 = vpop.f32.mrf.mxu0
  %1292 = vdwg.mxu0
  %1294 = vrot.lane.b32.xlu0 %v1290, 96
  %v1295 = vpop.permute.xlu0 %1294
  %v1297 = vadd.f32 %v1213, %v1295
  %v1298 = vxor.u32 %v1297, 2147483648
  %v1299 = vmul.f32 %v1298, 1.442695
  %v1300 = vpow.pop %v1299
  %v1301 = vadd.f32 %v1300, 1.0
  %v1302 = vrcp.pop %v1301
  %v1303 = vmul.f32 %v1301, %v1302
  %v1304 = vsub.f32 1.0, %v1303
  %v1305 = vmul.f32 %v1302, %v1304
  %v1306 = vadd.f32 %v1302, %v1305
  %vm1307 = vweird.f32 %v1301
  %vm1308 = vweird.f32 %v1302
  %vm1309 = vmor %vm1307, %vm1308
  %v1310 = vsel %vm1309, %v1302, %v1306
  %v1311 = vand.u32 2147483647, %v1301
  %vm1312 = vcmp.eq.f32.partialorder %v1311, 8.507059e+37
  %v1313 = vand.u32 %v1301, 2147483648
  %v1314 = vor.u32 1.1754944e-38, %v1313
  %v1315 = vsel %vm1312, %v1314, %v1310
  %v1316 = vmul.f32 1.0, %v1315
  %v1318 = vrot.slane %v1213, 2
  %v1320 = vadd.f32 %v1318, %v1295
  %v1321 = vxor.u32 %v1320, 2147483648
  %v1322 = vmul.f32 %v1321, 1.442695
  %v1323 = vpow.pop %v1322
  %v1324 = vadd.f32 %v1323, 1.0
  %v1325 = vrcp.pop %v1324
  %v1326 = vmul.f32 %v1324, %v1325
  %v1327 = vsub.f32 1.0, %v1326
  %v1328 = vmul.f32 %v1325, %v1327
  %v1329 = vadd.f32 %v1325, %v1328
  %vm1330 = vweird.f32 %v1324
  %vm1331 = vweird.f32 %v1325
  %vm1332 = vmor %vm1330, %vm1331
  %v1333 = vsel %vm1332, %v1325, %v1329
  %v1334 = vand.u32 2147483647, %v1324
  %vm1335 = vcmp.eq.f32.partialorder %v1334, 8.507059e+37
  %v1336 = vand.u32 %v1324, 2147483648
  %v1337 = vor.u32 1.1754944e-38, %v1336
  %v1338 = vsel %vm1335, %v1337, %v1333
  %v1339 = vmul.f32 1.0, %v1338
  %1340 = vrot.lane.b32.xlu0 %v1290, 32
  %v1341 = vpop.permute.xlu0 %1340
  %v1343 = vmul.f32 %v1316, %v1341
  %1344 = vrot.lane.b32.xlu0 %v1213, 96
  %v1345 = vpop.permute.xlu0 %1344
  %v1346 = vrot.slane %v1345, 2
  %1349 = vrot.lane.b32.xlu0 %v1343, 32
  %v1350 = vpop.permute.xlu0 %1349
  %v1352 = vadd.f32 %v1346, %v1350
  %v1353 = vtanh.pop %v1352
  %v1354 = vsub.f32 1.0, %v1339
  %v1355 = vmul.f32 %v1354, %v1353
  %v1356 = vmul.f32 %v1339, %v1275
  %v1357 = vadd.f32 %v1355, %v1356
  %1359 = vst [vmem:[#allocation1] ss:$4 sm:$0xff] %v1274
  %v1360 = vld.sshfl [vmem:[#allocation1] sm:$0xff pattern:$0x73625140]
  %1361 = vrot.lane.b32.xlu0 %v1360, 96
  %v1362 = vpop.permute.xlu0 %1361
  %1364 = vst.msk [vmem:[#allocation5] sm:$0x3] %vm324, %v1362
  %1365 = vst.msk [vmem:[%s219] sm:$0x3] %vm324, %v1357
  %v1366 = vpack.c.bf16 %v1274, %v1274
  %v1368 = vrot.slane %v1366, 3
  %v1371 = vsel %vm330, %v1366, %v1368
  %1373 = vrot.lane.b32.xlu0 %v1371, 96
  %v1374 = vpop.permute.xlu0 %1373
  %s1376 = scalar_lea.vmem %s4, 6
  %1377 = vst.msk [vmem:[%s1376] sm:$0x1] %vm338, %v1374
  %v1378 = vpack.c.bf16 %v1357, %v1357
  %s1379 = scalar_lea.vmem %s46, 1
  %1380 = vst.msk [vmem:[%s1379] sm:$0x1] %vm338, %v1378
  %s1381 = scalar_lea.vmem %s0, 14
  %v1382 = vld [vmem:[%s1381] sm:$0x3]
  %v1383 = vunpack.c.l.bf16 %v1382
  %v1384 = vld [vmem:[%s39] sm:$0x3]
  %v1385 = vunpack.c.l.bf16 %v1384
  %v1386 = vld [vmem:[#allocation5] sm:$0x3]
  %v1387 = vpack.c.bf16 %v1386, %v1386
  %v1389 = vsel %vm159, %v1387, 0
  %1391 = vmatpush.bf16.msra.mxu0 0
  %1392 = vmatpush.bf16.msra.mxu0 0
  %1393 = vmatpush.bf16.msra.mxu0 0
  %1394 = vmatpush.bf16.msra.mxu0 0
  %1395 = vmatpush.bf16.msra.mxu0 0
  %1396 = vmatpush.bf16.msra.mxu0 0
  %1397 = vmatpush.bf16.msra.mxu0 %v156
  %1398 = vmatpush.bf16.msra.mxu0 %v155
  %1399 = vmatmul.bf16.gmra.mxu0 %v1389
  %v1400 = vpop.f32.mrf.mxu0
  %v1401 = vadd.f32 %v145, %v1400
  %v1402 = vpop.f32.mrf.mxu0
  %1403 = vdwg.mxu0
  %v1404 = vadd.f32 %v1383, %v1401
  %v1405 = vxor.u32 %v1404, 2147483648
  %v1406 = vmul.f32 %v1405, 1.442695
  %v1407 = vpow.pop %v1406
  %v1408 = vadd.f32 %v1407, 1.0
  %v1409 = vrcp.pop %v1408
  %v1410 = vmul.f32 %v1408, %v1409
  %v1411 = vsub.f32 1.0, %v1410
  %v1412 = vmul.f32 %v1409, %v1411
  %v1413 = vadd.f32 %v1409, %v1412
  %vm1414 = vweird.f32 %v1408
  %vm1415 = vweird.f32 %v1409
  %vm1416 = vmor %vm1414, %vm1415
  %v1417 = vsel %vm1416, %v1409, %v1413
  %v1418 = vand.u32 2147483647, %v1408
  %vm1419 = vcmp.eq.f32.partialorder %v1418, 8.507059e+37
  %v1420 = vand.u32 %v1408, 2147483648
  %v1421 = vor.u32 1.1754944e-38, %v1420
  %v1422 = vsel %vm1419, %v1421, %v1417
  %v1423 = vmul.f32 1.0, %v1422
  %1425 = vrot.lane.b32.xlu0 %v1401, 64
  %v1426 = vpop.permute.xlu0 %1425
  %v1428 = vmul.f32 %v1423, %v1426
  %1430 = vrot.lane.b32.xlu0 %v1428, 64
  %v1431 = vpop.permute.xlu0 %1430
  %v1433 = vadd.f32 %v1383, %v1431
  %v1434 = vtanh.pop %v1433
  %v1435 = vsub.f32 1.0, %v1423
  %1437 = vrot.lane.b32.xlu0 %v1434, 96
  %v1438 = vpop.permute.xlu0 %1437
  %v1440 = vmul.f32 %v1435, %v1438
  %1442 = vrot.lane.b32.xlu0 %v1386, 32
  %v1443 = vpop.permute.xlu0 %1442
  %v1445 = vmul.f32 %v1423, %v1443
  %v1446 = vadd.f32 %v1440, %v1445
  %v1447 = vld [vmem:[%s219] sm:$0x3]
  %v1448 = vpack.c.bf16 %v1447, %v1447
  %v1450 = vsel %vm159, %v1448, 0
  %1452 = vmatpush.bf16.msra.mxu0 0
  %1453 = vmatpush.bf16.msra.mxu0 0
  %1454 = vmatpush.bf16.msra.mxu0 0
  %1455 = vmatpush.bf16.msra.mxu0 0
  %1456 = vmatpush.bf16.msra.mxu0 0
  %1457 = vmatpush.bf16.msra.mxu0 0
  %1458 = vmatpush.bf16.msra.mxu0 %v234
  %1459 = vmatpush.bf16.msra.mxu0 %v233
  %1460 = vmatmul.bf16.gmra.mxu0 %v1450
  %v1461 = vpop.f32.mrf.mxu0
  %v1462 = vadd.f32 %v223, %v1461
  %v1463 = vpop.f32.mrf.mxu0
  %1464 = vdwg.mxu0
  %1466 = vrot.lane.b32.xlu0 %v1462, 96
  %v1467 = vpop.permute.xlu0 %1466
  %v1469 = vadd.f32 %v1385, %v1467
  %v1470 = vxor.u32 %v1469, 2147483648
  %v1471 = vmul.f32 %v1470, 1.442695
  %v1472 = vpow.pop %v1471
  %v1473 = vadd.f32 %v1472, 1.0
  %v1474 = vrcp.pop %v1473
  %v1475 = vmul.f32 %v1473, %v1474
  %v1476 = vsub.f32 1.0, %v1475
  %v1477 = vmul.f32 %v1474, %v1476
  %v1478 = vadd.f32 %v1474, %v1477
  %vm1479 = vweird.f32 %v1473
  %vm1480 = vweird.f32 %v1474
  %vm1481 = vmor %vm1479, %vm1480
  %v1482 = vsel %vm1481, %v1474, %v1478
  %v1483 = vand.u32 2147483647, %v1473
  %vm1484 = vcmp.eq.f32.partialorder %v1483, 8.507059e+37
  %v1485 = vand.u32 %v1473, 2147483648
  %v1486 = vor.u32 1.1754944e-38, %v1485
  %v1487 = vsel %vm1484, %v1486, %v1482
  %v1488 = vmul.f32 1.0, %v1487
  %v1490 = vrot.slane %v1385, 2
  %v1492 = vadd.f32 %v1490, %v1467
  %v1493 = vxor.u32 %v1492, 2147483648
  %v1494 = vmul.f32 %v1493, 1.442695
  %v1495 = vpow.pop %v1494
  %v1496 = vadd.f32 %v1495, 1.0
  %v1497 = vrcp.pop %v1496
  %v1498 = vmul.f32 %v1496, %v1497
  %v1499 = vsub.f32 1.0, %v1498
  %v1500 = vmul.f32 %v1497, %v1499
  %v1501 = vadd.f32 %v1497, %v1500
  %vm1502 = vweird.f32 %v1496
  %vm1503 = vweird.f32 %v1497
  %vm1504 = vmor %vm1502, %vm1503
  %v1505 = vsel %vm1504, %v1497, %v1501
  %v1506 = vand.u32 2147483647, %v1496
  %vm1507 = vcmp.eq.f32.partialorder %v1506, 8.507059e+37
  %v1508 = vand.u32 %v1496, 2147483648
  %v1509 = vor.u32 1.1754944e-38, %v1508
  %v1510 = vsel %vm1507, %v1509, %v1505
  %v1511 = vmul.f32 1.0, %v1510
  %1512 = vrot.lane.b32.xlu0 %v1462, 32
  %v1513 = vpop.permute.xlu0 %1512
  %v1515 = vmul.f32 %v1488, %v1513
  %1516 = vrot.lane.b32.xlu0 %v1385, 96
  %v1517 = vpop.permute.xlu0 %1516
  %v1518 = vrot.slane %v1517, 2
  %1521 = vrot.lane.b32.xlu0 %v1515, 32
  %v1522 = vpop.permute.xlu0 %1521
  %v1524 = vadd.f32 %v1518, %v1522
  %v1525 = vtanh.pop %v1524
  %v1526 = vsub.f32 1.0, %v1511
  %v1527 = vmul.f32 %v1526, %v1525
  %v1528 = vmul.f32 %v1511, %v1447
  %v1529 = vadd.f32 %v1527, %v1528
  %1531 = vst [vmem:[#allocation1] ss:$4 sm:$0xff] %v1446
  %v1532 = vld.sshfl [vmem:[#allocation1] sm:$0xff pattern:$0x73625140]
  %1533 = vrot.lane.b32.xlu0 %v1532, 96
  %v1534 = vpop.permute.xlu0 %1533
  %1536 = vst.msk [vmem:[#allocation5] sm:$0x3] %vm324, %v1534
  %1537 = vst.msk [vmem:[%s219] sm:$0x3] %vm324, %v1529
  %v1538 = vpack.c.bf16 %v1446, %v1446
  %v1540 = vrot.slane %v1538, 3
  %v1543 = vsel %vm330, %v1538, %v1540
  %1545 = vrot.lane.b32.xlu0 %v1543, 96
  %v1546 = vpop.permute.xlu0 %1545
  %s1548 = scalar_lea.vmem %s4, 7
  %1549 = vst.msk [vmem:[%s1548] sm:$0x1] %vm338, %v1546
  %v1550 = vpack.c.bf16 %v1529, %v1529
  %1551 = vst.msk [vmem:[%s46] sm:$0x1] %vm338, %v1550
  %s1552 = ssub.s32 0, 0
  %s1553 = smul.u32 8, %s1552
  %p1554 = scmp.lt.s32.totalorder %s1553, 7
  %s1555 = scalar_select %p1554, %s1553, 7
  %s1556 = scalar_lea.vmem %s5, %s1555
  // Predicated region
  $region63: #{temporal_rnn_apply.6} parent=0 // pred_check
    _
  $region64: #{temporal_rnn_apply.6} parent=0 // pred_check_branch
    %1558 = sbr.rel (0) target = $region66
  $region65: #{temporal_rnn_apply.6} parent=0 // pred_region
    _
  $region66: #{temporal_rnn_apply.6} parent=0 // pred_fallthru
    _
  // Predicated region
  $region67: #{temporal_rnn_apply.6} parent=0 // pred_check
    _
  $region68: #{temporal_rnn_apply.6} parent=0 // pred_check_branch
    %1560 = sbr.rel (0) target = $region70
  $region69: #{temporal_rnn_apply.6} parent=0 // pred_region
    %s1561 = ssub.s32 0, 0
    %s1562 = smul.u32 8, %s1561
  $region70: #{temporal_rnn_apply.6} parent=0 // pred_fallthru
    _
  // Predicated region
  $region71: #{temporal_rnn_apply.6} parent=0 // pred_check
    _
  $region72: #{temporal_rnn_apply.6} parent=0 // pred_check_branch
    %1564 = sbr.rel (0) target = $region74
  $region73: #{temporal_rnn_apply.6} parent=0 // pred_region
    _
  $region74: #{temporal_rnn_apply.6} parent=0 // pred_fallthru
    _
  // Predicated region
  $region75: #{temporal_rnn_apply.6} parent=0 // pred_check
    _
  $region76: #{temporal_rnn_apply.6} parent=0 // pred_check_branch
    %1566 = sbr.rel (0) target = $region78
  $region77: #{temporal_rnn_apply.6} parent=0 // pred_region
    %s1567 = ssub.s32 0, 0
    %s1568 = smul.u32 8, %s1567
    %p1569 = scmp.lt.s32.totalorder %s1568, 7
    %s1570 = scalar_select %p1569, %s1568, 7
    %s1571 = scalar_lea.vmem %s5, %s1570
  $region78: #{temporal_rnn_apply.6} parent=0 // pred_fallthru
    _
  %1572 = vsyncmov [#allocation4]
  %s1573 = vpop.sfrf %1572
  %p1574 = scmp.eq.s32.totalorder %s1573, 0
  %p1575 = pneg %p1574
  %1577 = shalt.err (%p1575)
  %s1578 = scalar_lea.sflag [#allocation4], 1
  %1579 = vsyncmov %s1578
  %s1580 = vpop.sfrf %1579
  %p1581 = scmp.eq.s32.totalorder %s1580, 0
  %p1582 = pneg %p1581
  %1584 = shalt.err (%p1582)

</llo_original>
